<compile_context>
chip_gen: v5e
topology: v5e:2x2
jax: 0.10.0
libtpu: 0.0.40
codegen_flags: <defaults>
</compile_context>

<pallas_src>
import functools
import math

import jax
import jax.numpy as jnp
from jax.experimental import pallas as pl
from jax.experimental.pallas import tpu as pltpu


def _vmem_limit_bytes():
    """Generation-aware scoped-VMEM budget (≈75% of physical capacity)."""
    try:
        cap = int(pltpu.get_tpu_info().vmem_capacity_bytes)
        return max(32 * 1024 * 1024, min(int(cap * 0.75), 112 * 1024 * 1024))
    except Exception:  # no TPU info available -> conservative (v7x-safe) cap
        return 48 * 1024 * 1024


_VMEM_LIMIT = _vmem_limit_bytes()


def _round_up(x, m):
    return ((x + m - 1) // m) * m


def _pick_tile(dim, target, align):
    """Largest block <= target that divides `dim` and is a multiple of `align`;
    falls back to the full dim (always a legal TPU block shape)."""
    if dim <= target:
        return dim
    t = (target // align) * align
    while t >= align:
        if dim % t == 0:
            return t
        t -= align
    return dim


def _ln_f32(x, g, b, eps):
    mu = jnp.mean(x, axis=-1, keepdims=True)
    xc = x - mu
    var = jnp.mean(xc * xc, axis=-1, keepdims=True)
    return xc * jax.lax.rsqrt(var + eps) * g + b


def _to_bf16(x):
    return x if x.dtype == jnp.bfloat16 else x.astype(jnp.bfloat16)


# --------------------------- generic tiled matmul --------------------------- #

def _matmul_kernel(x_ref, w_ref, o_ref, acc_ref):
    @pl.when(pl.program_id(2) == 0)
    def _():
        acc_ref[...] = jnp.zeros_like(acc_ref)

    acc_ref[...] += jnp.dot(_to_bf16(x_ref[...]), _to_bf16(w_ref[...]),
                            preferred_element_type=jnp.float32)

    @pl.when(pl.program_id(2) == pl.num_programs(2) - 1)
    def _():
        o_ref[...] = acc_ref[...]


def pallas_matmul(x, w, *, tm=256, tn=256, tk=512):
    m, k = x.shape
    k2, n = w.shape
    assert k == k2
    tm = _pick_tile(m, tm, 8)
    tn = _pick_tile(n, tn, 128)
    tk = _pick_tile(k, tk, 128)
    cost = pl.CostEstimate(
        flops=2 * m * n * k, transcendentals=0,
        bytes_accessed=m * k * x.dtype.itemsize + k * n * w.dtype.itemsize
        + m * n * 4)
    return pl.pallas_call(
        _matmul_kernel,
        out_shape=jax.ShapeDtypeStruct((m, n), jnp.float32),
        grid=(m // tm, n // tn, k // tk),
        in_specs=[pl.BlockSpec((tm, tk), lambda i, j, kk: (i, kk)),
                  pl.BlockSpec((tk, tn), lambda i, j, kk: (kk, j))],
        out_specs=pl.BlockSpec((tm, tn), lambda i, j, kk: (i, j)),
        scratch_shapes=[pltpu.VMEM((tm, tn), jnp.float32)],
        compiler_params=pltpu.CompilerParams(
            dimension_semantics=("parallel", "parallel", "arbitrary"),
            vmem_limit_bytes=_VMEM_LIMIT),
        cost_estimate=cost,
    )(x, w)


# ----------------------------- row-tiled LayerNorm --------------------------- #

def _layernorm_kernel(x_ref, g_ref, b_ref, o_ref, *, eps):
    o_ref[...] = _ln_f32(x_ref[...].astype(jnp.float32),
                         g_ref[...], b_ref[...], eps)


def pallas_layernorm(x, g, b, *, eps=1e-5, tm=512):
    m, d = x.shape
    tm = _pick_tile(m, tm, 8)
    return pl.pallas_call(
        functools.partial(_layernorm_kernel, eps=eps),
        out_shape=jax.ShapeDtypeStruct((m, d), jnp.float32),
        grid=(m // tm,),
        in_specs=[pl.BlockSpec((tm, d), lambda i: (i, 0)),
                  pl.BlockSpec((1, d), lambda i: (0, 0)),
                  pl.BlockSpec((1, d), lambda i: (0, 0))],
        out_specs=pl.BlockSpec((tm, d), lambda i: (i, 0)),
        compiler_params=pltpu.CompilerParams(
            dimension_semantics=("parallel",),
            vmem_limit_bytes=_VMEM_LIMIT),
    )(x, g.reshape(1, d), b.reshape(1, d))


# --------------------- fused LN + linear (QKV / pooled proj) ----------------- #

def _ln_linear_kernel(x_ref, g_ref, b_ref, w_ref, wb_ref, o_ref, *, eps):
    y = _ln_f32(x_ref[...].astype(jnp.float32), g_ref[...], b_ref[...], eps)
    acc = (jnp.dot(y.astype(jnp.bfloat16), _to_bf16(w_ref[...]),
                   preferred_element_type=jnp.float32) + wb_ref[...])
    o_ref[...] = acc.astype(o_ref.dtype)


def pallas_ln_linear(x, g, b, w, wb, *, eps=1e-5, tm=256,
                     out_dtype=jnp.float32):
    m, d = x.shape
    n = w.shape[1]
    align = 16 if jnp.dtype(out_dtype) == jnp.dtype(jnp.bfloat16) else 8
    tm = _pick_tile(m, tm, align)
    cost = pl.CostEstimate(
        flops=2 * m * d * n + 10 * m * d, transcendentals=m,
        bytes_accessed=m * d * 4 + d * n * w.dtype.itemsize
        + m * n * jnp.dtype(out_dtype).itemsize)
    return pl.pallas_call(
        functools.partial(_ln_linear_kernel, eps=eps),
        out_shape=jax.ShapeDtypeStruct((m, n), out_dtype),
        grid=(m // tm,),
        in_specs=[pl.BlockSpec((tm, d), lambda i: (i, 0)),
                  pl.BlockSpec((1, d), lambda i: (0, 0)),
                  pl.BlockSpec((1, d), lambda i: (0, 0)),
                  pl.BlockSpec((d, n), lambda i: (0, 0)),   # weights resident
                  pl.BlockSpec((1, n), lambda i: (0, 0))],
        out_specs=pl.BlockSpec((tm, n), lambda i: (i, 0)),
        compiler_params=pltpu.CompilerParams(
            dimension_semantics=("parallel",),
            vmem_limit_bytes=_VMEM_LIMIT),
        cost_estimate=cost,
    )(x, g.reshape(1, d), b.reshape(1, d), w, wb.reshape(1, n))


# ------------- fused multi-head attention + out_proj + residual -------------- #

def _attn_block_kernel(qkv_ref, res_ref, wout_ref, bout_ref, o_ref,
                       *, heads, seq_valid, causal):
    seq = qkv_ref.shape[1]
    d = qkv_ref.shape[2] // 3
    dh = d // heads
    scale = 1.0 / math.sqrt(dh)

    mask = None
    if causal or seq_valid < seq:
        col = jax.lax.broadcasted_iota(jnp.int32, (seq, seq), 1)
        bad = col >= seq_valid                              # padded keys
        if causal:
            row = jax.lax.broadcasted_iota(jnp.int32, (seq, seq), 0)
            bad = jnp.logical_or(bad, col > row)
        mask = jnp.where(bad, jnp.float32(-1e30), jnp.float32(0.0))

    # residual + out_proj bias seed the accumulator (the output block itself).
    o_ref[0] = res_ref[0] + bout_ref[...]

    for h in range(heads):                                  # static unroll
        q = qkv_ref[0, :, h * dh:(h + 1) * dh]              # bf16 (L, dh)
        k = qkv_ref[0, :, d + h * dh:d + (h + 1) * dh]
        v = qkv_ref[0, :, 2 * d + h * dh:2 * d + (h + 1) * dh]
        s = jax.lax.dot_general(q, k, (((1,), (1,)), ((), ())),
                                preferred_element_type=jnp.float32) * scale
        if mask is not None:
            s = s + mask
        m = jnp.max(s, axis=-1, keepdims=True)
        e = jnp.exp(s - m)
        p = e * pl.reciprocal(jnp.sum(e, axis=-1, keepdims=True), approx=True)
        oh = jnp.dot(p.astype(jnp.bfloat16), v,
                     preferred_element_type=jnp.float32)    # (L, dh)
        # out_proj applied per head: concat_h(attn_h) @ W == sum_h attn_h @ W_h
        o_ref[0] += jnp.dot(oh.astype(jnp.bfloat16),
                            _to_bf16(wout_ref[h * dh:(h + 1) * dh, :]),
                            preferred_element_type=jnp.float32)


def pallas_attention_block(qkv, resid, wout, bout, *, heads, seq_valid, causal):
    b, seq, d3 = qkv.shape
    d = d3 // 3
    cost = pl.CostEstimate(
        flops=4 * b * seq * seq * d + 2 * b * seq * d * d,
        transcendentals=b * heads * seq * seq,
        bytes_accessed=b * seq * d3 * qkv.dtype.itemsize
        + 2 * b * seq * d * 4 + d * d * wout.dtype.itemsize)
    return pl.pallas_call(
        functools.partial(_attn_block_kernel, heads=heads,
                          seq_valid=seq_valid, causal=causal),
        out_shape=jax.ShapeDtypeStruct((b, seq, d), jnp.float32),
        grid=(b,),
        in_specs=[pl.BlockSpec((1, seq, d3), lambda i: (i, 0, 0)),
                  pl.BlockSpec((1, seq, d), lambda i: (i, 0, 0)),
                  pl.BlockSpec((d, d), lambda i: (0, 0)),    # out_proj resident
                  pl.BlockSpec((1, d), lambda i: (0, 0))],
        out_specs=pl.BlockSpec((1, seq, d), lambda i: (i, 0, 0)),
        compiler_params=pltpu.CompilerParams(
            dimension_semantics=("parallel",),
            vmem_limit_bytes=_VMEM_LIMIT),
        cost_estimate=cost,
    )(qkv, resid, wout, bout.reshape(1, d))


# --------- fused MLP block: LN2 + c_fc + QuickGELU + c_proj + residual ------- #

def _mlp_block_kernel(x_ref, g_ref, b_ref, fcw_ref, fcb_ref, pw_ref, pb_ref,
                      o_ref, *, eps, hchunk):
    x = x_ref[...].astype(jnp.float32)                      # residual input
    y = _ln_f32(x, g_ref[...], b_ref[...], eps).astype(jnp.bfloat16)
    hdim = fcw_ref.shape[1]
    o_ref[...] = x + pb_ref[...]                            # residual + c_proj bias
    for c in range(hdim // hchunk):                         # tile hidden dim
        lo, hi = c * hchunk, (c + 1) * hchunk
        h = (jnp.dot(y, _to_bf16(fcw_ref[:, lo:hi]),
                     preferred_element_type=jnp.float32) + fcb_ref[:, lo:hi])
        h = h * jax.nn.sigmoid(1.702 * h)                   # QuickGELU in f32
        o_ref[...] += jnp.dot(h.astype(jnp.bfloat16), _to_bf16(pw_ref[lo:hi, :]),
                              preferred_element_type=jnp.float32)


def pallas_mlp_block(x, g, b, fc_w, fc_b, p_w, p_b, *, eps=1e-5, tm=256):
    m, d = x.shape
    hdim = fc_w.shape[1]
    tm = _pick_tile(m, tm, 8)
    hchunk = _pick_tile(hdim, 512, 128)
    cost = pl.CostEstimate(
        flops=4 * m * d * hdim, transcendentals=m * hdim,
        bytes_accessed=2 * m * d * 4
        + (d * hdim + hdim * d) * fc_w.dtype.itemsize)
    return pl.pallas_call(
        functools.partial(_mlp_block_kernel, eps=eps, hchunk=hchunk),
        out_shape=jax.ShapeDtypeStruct((m, d), jnp.float32),
        grid=(m // tm,),
        in_specs=[pl.BlockSpec((tm, d), lambda i: (i, 0)),
                  pl.BlockSpec((1, d), lambda i: (0, 0)),
                  pl.BlockSpec((1, d), lambda i: (0, 0)),
                  pl.BlockSpec((d, hdim), lambda i: (0, 0)),   # resident
                  pl.BlockSpec((1, hdim), lambda i: (0, 0)),
                  pl.BlockSpec((hdim, d), lambda i: (0, 0)),   # resident
                  pl.BlockSpec((1, d), lambda i: (0, 0))],
        out_specs=pl.BlockSpec((tm, d), lambda i: (i, 0)),
        compiler_params=pltpu.CompilerParams(
            dimension_semantics=("parallel",),
            vmem_limit_bytes=_VMEM_LIMIT),
        cost_estimate=cost,
    )(x, g.reshape(1, d), b.reshape(1, d), fc_w, fc_b.reshape(1, hdim),
      p_w, p_b.reshape(1, d))


# ---------------------------- transformer block ------------------------------ #

def transformer_block(x2d, lyr, *, batch, seq, seq_valid, width, heads, causal):
    qkv = pallas_ln_linear(x2d, lyr["ln1_g"], lyr["ln1_b"],
                           lyr["in_proj_w"], lyr["in_proj_b"],
                           out_dtype=jnp.bfloat16)            # [B*L, 3D] bf16
    x3d = pallas_attention_block(
        qkv.reshape(batch, seq, 3 * width),
        x2d.reshape(batch, seq, width),
        lyr["out_proj_w"], lyr["out_proj_b"],
        heads=heads, seq_valid=seq_valid, causal=causal)      # [B, L, D] f32
    x2d = x3d.reshape(batch * seq, width)
    x2d = pallas_mlp_block(x2d, lyr["ln2_g"], lyr["ln2_b"],
                           lyr["fc_w"], lyr["fc_b"],
                           lyr["proj_w"], lyr["proj_b"])
    return x2d


# -------------------------------- encoders ----------------------------------- #

def encode_image(vp, image, *, patch_size, heads):
    b, c, hh, ww = image.shape
    ps = patch_size
    hp, wp = hh // ps, ww // ps
    width = vp["class_embedding"].shape[0]
    embed_dim = vp["proj"].shape[1]

    # conv1 (kernel == stride == patch_size, no bias) as patch-extract + matmul.
    # Flattening order (C, ps, ps) matches conv1.weight.reshape(width, -1).T.
    patches = image.reshape(b, c, hp, ps, wp, ps)
    patches = patches.transpose(0, 2, 4, 1, 3, 5).reshape(b * hp * wp,
                                                          c * ps * ps)
    patches = patches.astype(jnp.bfloat16)                   # pre-cast (v5e win)
    x = pallas_matmul(patches, vp["conv1_w"])                 # [B*P, width]
    x = x.reshape(b, hp * wp, width)

    cls = jnp.broadcast_to(vp["class_embedding"][None, None, :],
                           (b, 1, width)).astype(jnp.float32)
    x = jnp.concatenate([cls, x], axis=1)                     # [B, L, width]
    x = x + vp["positional_embedding"][None]

    seq = x.shape[1]
    seq_pad = _round_up(seq, 8)                               # row-tileable grid
    if seq_pad != seq:
        x = jnp.pad(x, ((0, 0), (0, seq_pad - seq), (0, 0)))
    x2d = x.reshape(b * seq_pad, width)

    x2d = pallas_layernorm(x2d, vp["ln_pre_g"], vp["ln_pre_b"])
    for lyr in vp["layers"]:
        x2d = transformer_block(x2d, lyr, batch=b, seq=seq_pad, seq_valid=seq,
                                width=width, heads=heads, causal=False)

    cls_tok = x2d.reshape(b, seq_pad, width)[:, 0, :]         # [B, width]
    # Fused ln_post + visual projection (zero bias).
    return pallas_ln_linear(cls_tok, vp["ln_post_g"], vp["ln_post_b"],
                            vp["proj"], jnp.zeros((embed_dim,), jnp.float32))


def encode_text(tp, text, *, heads):
    b, ctx = text.shape
    width = tp["positional_embedding"].shape[1]
    embed_dim = tp["text_projection"].shape[1]

    # TODO(synk): token-embedding gather and EOT-row gather remain XLA gathers
    # (no rectangular BlockSpec equivalent worth a kernel at this size).
    x = jnp.take(tp["token_embedding"], text, axis=0)         # [B, ctx, width]
    x = x.astype(jnp.float32) + tp["positional_embedding"][None]

    ctx_pad = _round_up(ctx, 8)
    if ctx_pad != ctx:
        x = jnp.pad(x, ((0, 0), (0, ctx_pad - ctx), (0, 0)))
    x2d = x.reshape(b * ctx_pad, width)

    for lyr in tp["layers"]:
        x2d = transformer_block(x2d, lyr, batch=b, seq=ctx_pad, seq_valid=ctx,
                                width=width, heads=heads, causal=True)

    x = x2d.reshape(b, ctx_pad, width)
    eot = jnp.argmax(text, axis=-1)                           # EOT = highest token id
    pooled = x[jnp.arange(b), eot]                            # [B, width]
    # ln_final commutes with the row gather; fuse ln_final + text_projection.
    return pallas_ln_linear(pooled, tp["ln_final_g"], tp["ln_final_b"],
                            tp["text_projection"],
                            jnp.zeros((embed_dim,), jnp.float32))


def clip_forward(params, image, text, *, patch_size, vision_heads, text_heads):
    img = encode_image(params["visual"], image, patch_size=patch_size,
                       heads=vision_heads)
    txt = encode_text(params["text"], text, heads=text_heads)
    img = img / jnp.linalg.norm(img, axis=1, keepdims=True)
    txt = txt / jnp.linalg.norm(txt, axis=1, keepdims=True)
    scale = jnp.exp(params["logit_scale"])
    logits_per_image = scale * pallas_matmul(img, txt.T)      # [B, B]
    logits_per_text = logits_per_image.T
    return logits_per_image, logits_per_text


# ----------------------------- parameter init -------------------------------- #

def _resblock_params(key, width):
    k = jax.random.split(key, 4)

    def w(kk, shape, std):
        return (std * jax.random.normal(kk, shape, jnp.float32)).astype(
            jnp.bfloat16)                                     # bf16 MXU weights

    return {
        "ln1_g": jnp.ones((width,), jnp.float32),
        "ln1_b": jnp.zeros((width,), jnp.float32),
        "in_proj_w": w(k[0], (width, 3 * width), width ** -0.5),
        "in_proj_b": jnp.zeros((3 * width,), jnp.float32),
        "out_proj_w": w(k[1], (width, width), width ** -0.5),
        "out_proj_b": jnp.zeros((width,), jnp.float32),
        "ln2_g": jnp.ones((width,), jnp.float32),
        "ln2_b": jnp.zeros((width,), jnp.float32),
        "fc_w": w(k[2], (width, 4 * width), (2 * width) ** -0.5),
        "fc_b": jnp.zeros((4 * width,), jnp.float32),
        "proj_w": w(k[3], (4 * width, width), width ** -0.5),
        "proj_b": jnp.zeros((width,), jnp.float32),
    }


def init_params(key, *, embed_dim, image_resolution, vision_layers,
                vision_width, vision_patch_size, context_length, vocab_size,
                transformer_width, transformer_layers):
    kv, kt = jax.random.split(key)
    n_patches = (image_resolution // vision_patch_size) ** 2

    def normal(kk, shape, std, dtype=jnp.float32):
        return (std * jax.random.normal(kk, shape, jnp.float32)).astype(dtype)

    vkeys = jax.random.split(kv, 4 + vision_layers)
    vscale = vision_width ** -0.5
    visual = {
        "conv1_w": normal(vkeys[0], (3 * vision_patch_size ** 2, vision_width),
                          0.02, jnp.bfloat16),
        "class_embedding": normal(vkeys[1], (vision_width,), vscale),
        "positional_embedding": normal(vkeys[2], (n_patches + 1, vision_width),
                                       vscale),
        "ln_pre_g": jnp.ones((vision_width,), jnp.float32),
        "ln_pre_b": jnp.zeros((vision_width,), jnp.float32),
        "ln_post_g": jnp.ones((vision_width,), jnp.float32),
        "ln_post_b": jnp.zeros((vision_width,), jnp.float32),
        "proj": normal(vkeys[3], (vision_width, embed_dim), vscale,
                       jnp.bfloat16),
        "layers": [_resblock_params(vkeys[4 + i], vision_width)
                   for i in range(vision_layers)],
    }

    tkeys = jax.random.split(kt, 3 + transformer_layers)
    tscale = transformer_width ** -0.5
    text = {
        "token_embedding": normal(tkeys[0], (vocab_size, transformer_width),
                                  0.02),
        "positional_embedding": normal(tkeys[1],
                                       (context_length, transformer_width),
                                       0.01),
        "ln_final_g": jnp.ones((transformer_width,), jnp.float32),
        "ln_final_b": jnp.zeros((transformer_width,), jnp.float32),
        "text_projection": normal(tkeys[2], (transformer_width, embed_dim),
                                  tscale, jnp.bfloat16),
        "layers": [_resblock_params(tkeys[3 + i], transformer_width)
                   for i in range(transformer_layers)],
    }
    return {"visual": visual, "text": text,
            "logit_scale": jnp.asarray(math.log(1.0 / 0.07), jnp.float32)}


# ----------------------------------- main ------------------------------------ #

if __name__ == "__main__":
    embed_dim = 16
    image_resolution = 16
    vision_patch_size = 8
    vision_width = 32
    vision_layers = 2
    vision_heads = 4
    context_length = 8
    vocab_size = 64
    transformer_width = 32
    transformer_heads = 4
    transformer_layers = 2
    batch = 2

    key = jax.random.PRNGKey(0)
    pkey, ikey, tkey = jax.random.split(key, 3)
    params = init_params(
        pkey, embed_dim=embed_dim, image_resolution=image_resolution,
        vision_layers=vision_layers, vision_width=vision_width,
        vision_patch_size=vision_patch_size, context_length=context_length,
        vocab_size=vocab_size, transformer_width=transformer_width,
        transformer_layers=transformer_layers)

    image = jax.random.normal(
        ikey, (batch, 3, image_resolution, image_resolution), jnp.float32)
    text = jax.random.randint(tkey, (batch, context_length), 0, vocab_size,
                              dtype=jnp.int32)

    forward = jax.jit(functools.partial(
        clip_forward, patch_size=vision_patch_size,
        vision_heads=vision_heads, text_heads=transformer_heads))

    logits_per_image, logits_per_text = forward(params, image, text)
    jax.block_until_ready((logits_per_image, logits_per_text))

    assert logits_per_image.shape == (batch, batch), logits_per_image.shape
    assert logits_per_text.shape == (batch, batch), logits_per_text.shape
    assert bool(jnp.all(jnp.isfinite(logits_per_image)))
    assert bool(jnp.all(jnp.isfinite(logits_per_text)))
    print("KERNEL_OK")
</pallas_src>

<mosaic_0001>
module attributes {stable_mosaic.version = 11 : i64} {
  func.func @_matmul_kernel(%arg0: i32, %arg1: i32, %arg2: i32, %arg3: memref<8x192xbf16, #tpu.memory_space<vmem>>, %arg4: memref<192x32xbf16, #tpu.memory_space<vmem>>, %arg5: memref<8x32xf32, #tpu.memory_space<vmem>>, %arg6: memref<8x32xf32, #tpu.memory_space<vmem>>) attributes {dimension_semantics = [#tpu.dimension_semantics<parallel>, #tpu.dimension_semantics<parallel>, #tpu.dimension_semantics<arbitrary>], iteration_bounds = array<i64: 1, 1, 1>, scalar_prefetch = 0 : i64, scratch_operands = 1 : i64, tpu.core_type = #tpu.core_type<tc>, window_params = [{transform_indices = @transform_0, window_bounds = array<i64: 8, 192>}, {transform_indices = @transform_1, window_bounds = array<i64: 192, 32>}, {transform_indices = @transform_2, window_bounds = array<i64: 8, 32>}]} {
    %c0_i32 = arith.constant 0 : i32
    %0 = arith.cmpi eq, %arg2, %c0_i32 : i32
    %1 = arith.extui %0 : i1 to i32
    %c0_i32_0 = arith.constant 0 : i32
    %2 = arith.cmpi ne, %1, %c0_i32_0 : i32
    scf.if %2 {
      %cst_10 = arith.constant 0.000000e+00 : f32
      %12 = vector.broadcast %cst_10 : f32 to vector<8x32xf32>
      %c0_11 = arith.constant 0 : index
      %c0_12 = arith.constant 0 : index
      %13 = vector.load %arg6[%c0_11, %c0_12] : memref<8x32xf32, #tpu.memory_space<vmem>>, vector<8x32xf32>
      tpu.vector_store %arg6[%c0_11, %c0_12], %12 {strides = array<i32>} : memref<8x32xf32, #tpu.memory_space<vmem>>, vector<8x32xf32>,
    } else {
    }
    %c0 = arith.constant 0 : index
    %c0_1 = arith.constant 0 : index
    %3 = vector.load %arg6[%c0, %c0_1] : memref<8x32xf32, #tpu.memory_space<vmem>>, vector<8x32xf32>
    %c0_2 = arith.constant 0 : index
    %c0_3 = arith.constant 0 : index
    %4 = vector.load %arg3[%c0_2, %c0_3] : memref<8x192xbf16, #tpu.memory_space<vmem>>, vector<8x192xbf16>
    %c0_4 = arith.constant 0 : index
    %c0_5 = arith.constant 0 : index
    %5 = vector.load %arg4[%c0_4, %c0_5] : memref<192x32xbf16, #tpu.memory_space<vmem>>, vector<192x32xbf16>
    %cst = arith.constant dense<0.000000e+00> : vector<8x32xf32>
    %6 = tpu.matmul %4, %5, %cst {dimension_numbers = #tpu.dot_dimension_numbers<[1], [0], [0], [1], [0, 0, 1, 1], [], []>} : vector<8x192xbf16>, vector<192x32xbf16>, vector<8x32xf32> -> vector<8x32xf32>
    %7 = arith.addf %3, %6 : vector<8x32xf32>
    %c0_6 = arith.constant 0 : index
    %c0_7 = arith.constant 0 : index
    %8 = vector.load %arg6[%c0_6, %c0_7] : memref<8x32xf32, #tpu.memory_space<vmem>>, vector<8x32xf32>
    tpu.vector_store %arg6[%c0_6, %c0_7], %7 {strides = array<i32>} : memref<8x32xf32, #tpu.memory_space<vmem>>, vector<8x32xf32>,
    %c0_i32_8 = arith.constant 0 : i32
    %9 = arith.cmpi eq, %arg2, %c0_i32_8 : i32
    %10 = arith.extui %9 : i1 to i32
    %c0_i32_9 = arith.constant 0 : i32
    %11 = arith.cmpi ne, %10, %c0_i32_9 : i32
    scf.if %11 {
      %c0_10 = arith.constant 0 : index
      %c0_11 = arith.constant 0 : index
      %12 = vector.load %arg6[%c0_10, %c0_11] : memref<8x32xf32, #tpu.memory_space<vmem>>, vector<8x32xf32>
      %c0_12 = arith.constant 0 : index
      %c0_13 = arith.constant 0 : index
      %13 = vector.load %arg5[%c0_12, %c0_13] : memref<8x32xf32, #tpu.memory_space<vmem>>, vector<8x32xf32>
      tpu.vector_store %arg5[%c0_12, %c0_13], %12 {strides = array<i32>} : memref<8x32xf32, #tpu.memory_space<vmem>>, vector<8x32xf32>,
    } else {
    }
    return
  }
  func.func @transform_0(%arg0: i32, %arg1: i32, %arg2: i32) -> (i32, i32) {
    %c0_i32 = arith.constant 0 : i32
    return %arg0, %arg2 : i32, i32
  }
  func.func @transform_1(%arg0: i32, %arg1: i32, %arg2: i32) -> (i32, i32) {
    %c0_i32 = arith.constant 0 : i32
    return %arg2, %arg1 : i32, i32
  }
  func.func @transform_2(%arg0: i32, %arg1: i32, %arg2: i32) -> (i32, i32) {
    %c0_i32 = arith.constant 0 : i32
    return %arg0, %arg1 : i32, i32
  }
}

module attributes {stable_mosaic.version = 11 : i64} {
  func.func @_layernorm_kernel(%arg0: i32, %arg1: memref<16x32xf32, #tpu.memory_space<vmem>>, %arg2: memref<1x32xf32, #tpu.memory_space<vmem>>, %arg3: memref<1x32xf32, #tpu.memory_space<vmem>>, %arg4: memref<16x32xf32, #tpu.memory_space<vmem>>) attributes {dimension_semantics = [#tpu.dimension_semantics<parallel>], iteration_bounds = array<i64: 1>, scalar_prefetch = 0 : i64, scratch_operands = 0 : i64, tpu.core_type = #tpu.core_type<tc>, window_params = [{transform_indices = @transform_0, window_bounds = array<i64: 16, 32>}, {pipeline_mode = #tpu.pipeline_mode<synchronous>, transform_indices = @transform_1, window_bounds = array<i64: 1, 32>}, {pipeline_mode = #tpu.pipeline_mode<synchronous>, transform_indices = @transform_2, window_bounds = array<i64: 1, 32>}, {transform_indices = @transform_3, window_bounds = array<i64: 16, 32>}]} {
    %c0 = arith.constant 0 : index
    %c0_0 = arith.constant 0 : index
    %0 = vector.load %arg1[%c0, %c0_0] : memref<16x32xf32, #tpu.memory_space<vmem>>, vector<16x32xf32>
    %c0_1 = arith.constant 0 : index
    %c0_2 = arith.constant 0 : index
    %1 = vector.load %arg2[%c0_1, %c0_2] : memref<1x32xf32, #tpu.memory_space<vmem>>, vector<1x32xf32>
    %c0_3 = arith.constant 0 : index
    %c0_4 = arith.constant 0 : index
    %2 = vector.load %arg3[%c0_3, %c0_4] : memref<1x32xf32, #tpu.memory_space<vmem>>, vector<1x32xf32>
    %cst = arith.constant dense<0.000000e+00> : vector<16xf32>
    %3 = vector.multi_reduction <add>, %0, %cst [1] : vector<16x32xf32> to vector<16xf32>
    %4 = vector.shape_cast %3 : vector<16xf32> to vector<16x1xf32>
    %cst_5 = arith.constant 3.200000e+01 : f32
    %5 = vector.broadcast %cst_5 : f32 to vector<16x1xf32>
    %6 = arith.divf %4, %5 : vector<16x1xf32>
    %7 = vector.broadcast %6 : vector<16x1xf32> to vector<16x32xf32>
    %8 = arith.subf %0, %7 : vector<16x32xf32>
    %9 = arith.mulf %8, %8 : vector<16x32xf32>
    %cst_6 = arith.constant dense<0.000000e+00> : vector<16xf32>
    %10 = vector.multi_reduction <add>, %9, %cst_6 [1] : vector<16x32xf32> to vector<16xf32>
    %11 = vector.shape_cast %10 : vector<16xf32> to vector<16x1xf32>
    %cst_7 = arith.constant 3.200000e+01 : f32
    %12 = vector.broadcast %cst_7 : f32 to vector<16x1xf32>
    %13 = arith.divf %11, %12 : vector<16x1xf32>
    %cst_8 = arith.constant 9.99999974E-6 : f32
    %14 = vector.broadcast %cst_8 : f32 to vector<16x1xf32>
    %15 = arith.addf %13, %14 : vector<16x1xf32>
    %16 = math.rsqrt %15 : vector<16x1xf32>
    %17 = vector.broadcast %16 : vector<16x1xf32> to vector<16x32xf32>
    %18 = arith.mulf %8, %17 : vector<16x32xf32>
    %19 = vector.broadcast %1 : vector<1x32xf32> to vector<16x32xf32>
    %20 = arith.mulf %18, %19 : vector<16x32xf32>
    %21 = vector.broadcast %2 : vector<1x32xf32> to vector<16x32xf32>
    %22 = arith.addf %20, %21 : vector<16x32xf32>
    %c0_9 = arith.constant 0 : index
    %c0_10 = arith.constant 0 : index
    %23 = vector.load %arg4[%c0_9, %c0_10] : memref<16x32xf32, #tpu.memory_space<vmem>>, vector<16x32xf32>
    tpu.vector_store %arg4[%c0_9, %c0_10], %22 {strides = array<i32>} : memref<16x32xf32, #tpu.memory_space<vmem>>, vector<16x32xf32>,
    return
  }
  func.func @transform_0(%arg0: i32) -> (i32, i32) {
    %c0_i32 = arith.constant 0 : i32
    %c0_i32_0 = arith.constant 0 : i32
    return %arg0, %c0_i32 : i32, i32
  }
  func.func @transform_1(%arg0: i32) -> (i32, i32) {
    %c0_i32 = arith.constant 0 : i32
    %c0_i32_0 = arith.constant 0 : i32
    %c0_i32_1 = arith.constant 0 : i32
    return %c0_i32, %c0_i32_0 : i32, i32
  }
  func.func @transform_2(%arg0: i32) -> (i32, i32) {
    %c0_i32 = arith.constant 0 : i32
    %c0_i32_0 = arith.constant 0 : i32
    %c0_i32_1 = arith.constant 0 : i32
    return %c0_i32, %c0_i32_0 : i32, i32
  }
  func.func @transform_3(%arg0: i32) -> (i32, i32) {
    %c0_i32 = arith.constant 0 : i32
    %c0_i32_0 = arith.constant 0 : i32
    return %arg0, %c0_i32 : i32, i32
  }
}

module attributes {stable_mosaic.version = 11 : i64} {
  func.func @_ln_linear_kernel(%arg0: i32, %arg1: memref<16x32xf32, #tpu.memory_space<vmem>>, %arg2: memref<1x32xf32, #tpu.memory_space<vmem>>, %arg3: memref<1x32xf32, #tpu.memory_space<vmem>>, %arg4: memref<32x96xbf16, #tpu.memory_space<vmem>>, %arg5: memref<1x96xf32, #tpu.memory_space<vmem>>, %arg6: memref<16x96xbf16, #tpu.memory_space<vmem>>) attributes {dimension_semantics = [#tpu.dimension_semantics<parallel>], iteration_bounds = array<i64: 1>, scalar_prefetch = 0 : i64, scratch_operands = 0 : i64, tpu.core_type = #tpu.core_type<tc>, window_params = [{transform_indices = @transform_0, window_bounds = array<i64: 16, 32>}, {pipeline_mode = #tpu.pipeline_mode<synchronous>, transform_indices = @transform_1, window_bounds = array<i64: 1, 32>}, {pipeline_mode = #tpu.pipeline_mode<synchronous>, transform_indices = @transform_2, window_bounds = array<i64: 1, 32>}, {pipeline_mode = #tpu.pipeline_mode<synchronous>, transform_indices = @transform_3, window_bounds = array<i64: 32, 96>}, {pipeline_mode = #tpu.pipeline_mode<synchronous>, transform_indices = @transform_4, window_bounds = array<i64: 1, 96>}, {transform_indices = @transform_5, window_bounds = array<i64: 16, 96>}]} {
    %c0 = arith.constant 0 : index
    %c0_0 = arith.constant 0 : index
    %0 = vector.load %arg1[%c0, %c0_0] : memref<16x32xf32, #tpu.memory_space<vmem>>, vector<16x32xf32>
    %c0_1 = arith.constant 0 : index
    %c0_2 = arith.constant 0 : index
    %1 = vector.load %arg2[%c0_1, %c0_2] : memref<1x32xf32, #tpu.memory_space<vmem>>, vector<1x32xf32>
    %c0_3 = arith.constant 0 : index
    %c0_4 = arith.constant 0 : index
    %2 = vector.load %arg3[%c0_3, %c0_4] : memref<1x32xf32, #tpu.memory_space<vmem>>, vector<1x32xf32>
    %cst = arith.constant dense<0.000000e+00> : vector<16xf32>
    %3 = vector.multi_reduction <add>, %0, %cst [1] : vector<16x32xf32> to vector<16xf32>
    %4 = vector.shape_cast %3 : vector<16xf32> to vector<16x1xf32>
    %cst_5 = arith.constant 3.200000e+01 : f32
    %5 = vector.broadcast %cst_5 : f32 to vector<16x1xf32>
    %6 = arith.divf %4, %5 : vector<16x1xf32>
    %7 = vector.broadcast %6 : vector<16x1xf32> to vector<16x32xf32>
    %8 = arith.subf %0, %7 : vector<16x32xf32>
    %9 = arith.mulf %8, %8 : vector<16x32xf32>
    %cst_6 = arith.constant dense<0.000000e+00> : vector<16xf32>
    %10 = vector.multi_reduction <add>, %9, %cst_6 [1] : vector<16x32xf32> to vector<16xf32>
    %11 = vector.shape_cast %10 : vector<16xf32> to vector<16x1xf32>
    %cst_7 = arith.constant 3.200000e+01 : f32
    %12 = vector.broadcast %cst_7 : f32 to vector<16x1xf32>
    %13 = arith.divf %11, %12 : vector<16x1xf32>
    %cst_8 = arith.constant 9.99999974E-6 : f32
    %14 = vector.broadcast %cst_8 : f32 to vector<16x1xf32>
    %15 = arith.addf %13, %14 : vector<16x1xf32>
    %16 = math.rsqrt %15 : vector<16x1xf32>
    %17 = vector.broadcast %16 : vector<16x1xf32> to vector<16x32xf32>
    %18 = arith.mulf %8, %17 : vector<16x32xf32>
    %19 = vector.broadcast %1 : vector<1x32xf32> to vector<16x32xf32>
    %20 = arith.mulf %18, %19 : vector<16x32xf32>
    %21 = vector.broadcast %2 : vector<1x32xf32> to vector<16x32xf32>
    %22 = arith.addf %20, %21 : vector<16x32xf32>
    %23 = arith.truncf %22 : vector<16x32xf32> to vector<16x32xbf16>
    %c0_9 = arith.constant 0 : index
    %c0_10 = arith.constant 0 : index
    %24 = vector.load %arg4[%c0_9, %c0_10] : memref<32x96xbf16, #tpu.memory_space<vmem>>, vector<32x96xbf16>
    %cst_11 = arith.constant dense<0.000000e+00> : vector<16x96xf32>
    %25 = tpu.matmul %23, %24, %cst_11 {dimension_numbers = #tpu.dot_dimension_numbers<[1], [0], [0], [1], [0, 0, 1, 1], [], []>} : vector<16x32xbf16>, vector<32x96xbf16>, vector<16x96xf32> -> vector<16x96xf32>
    %c0_12 = arith.constant 0 : index
    %c0_13 = arith.constant 0 : index
    %26 = vector.load %arg5[%c0_12, %c0_13] : memref<1x96xf32, #tpu.memory_space<vmem>>, vector<1x96xf32>
    %27 = vector.broadcast %26 : vector<1x96xf32> to vector<16x96xf32>
    %28 = arith.addf %25, %27 : vector<16x96xf32>
    %29 = arith.truncf %28 : vector<16x96xf32> to vector<16x96xbf16>
    %c0_14 = arith.constant 0 : index
    %c0_15 = arith.constant 0 : index
    %30 = vector.load %arg6[%c0_14, %c0_15] : memref<16x96xbf16, #tpu.memory_space<vmem>>, vector<16x96xbf16>
    tpu.vector_store %arg6[%c0_14, %c0_15], %29 {strides = array<i32>} : memref<16x96xbf16, #tpu.memory_space<vmem>>, vector<16x96xbf16>,
    return
  }
  func.func @transform_0(%arg0: i32) -> (i32, i32) {
    %c0_i32 = arith.constant 0 : i32
    %c0_i32_0 = arith.constant 0 : i32
    return %arg0, %c0_i32 : i32, i32
  }
  func.func @transform_1(%arg0: i32) -> (i32, i32) {
    %c0_i32 = arith.constant 0 : i32
    %c0_i32_0 = arith.constant 0 : i32
    %c0_i32_1 = arith.constant 0 : i32
    return %c0_i32, %c0_i32_0 : i32, i32
  }
  func.func @transform_2(%arg0: i32) -> (i32, i32) {
    %c0_i32 = arith.constant 0 : i32
    %c0_i32_0 = arith.constant 0 : i32
    %c0_i32_1 = arith.constant 0 : i32
    return %c0_i32, %c0_i32_0 : i32, i32
  }
  func.func @transform_3(%arg0: i32) -> (i32, i32) {
    %c0_i32 = arith.constant 0 : i32
    %c0_i32_0 = arith.constant 0 : i32
    %c0_i32_1 = arith.constant 0 : i32
    return %c0_i32, %c0_i32_0 : i32, i32
  }
  func.func @transform_4(%arg0: i32) -> (i32, i32) {
    %c0_i32 = arith.constant 0 : i32
    %c0_i32_0 = arith.constant 0 : i32
    %c0_i32_1 = arith.constant 0 : i32
    return %c0_i32, %c0_i32_0 : i32, i32
  }
  func.func @transform_5(%arg0: i32) -> (i32, i32) {
    %c0_i32 = arith.constant 0 : i32
    %c0_i32_0 = arith.constant 0 : i32
    return %arg0, %c0_i32 : i32, i32
  }
}

module attributes {stable_mosaic.version = 11 : i64} {
  func.func @_attn_block_kernel(%arg0: i32, %arg1: memref<1x8x96xbf16, #tpu.memory_space<vmem>>, %arg2: memref<1x8x32xf32, #tpu.memory_space<vmem>>, %arg3: memref<32x32xbf16, #tpu.memory_space<vmem>>, %arg4: memref<1x32xf32, #tpu.memory_space<vmem>>, %arg5: memref<1x8x32xf32, #tpu.memory_space<vmem>>) attributes {dimension_semantics = [#tpu.dimension_semantics<parallel>], iteration_bounds = array<i64: 2>, scalar_prefetch = 0 : i64, scratch_operands = 0 : i64, tpu.core_type = #tpu.core_type<tc>, window_params = [{transform_indices = @transform_0, window_bounds = array<i64: 1, 8, 96>}, {transform_indices = @transform_1, window_bounds = array<i64: 1, 8, 32>}, {pipeline_mode = #tpu.pipeline_mode<synchronous>, transform_indices = @transform_2, window_bounds = array<i64: 32, 32>}, {pipeline_mode = #tpu.pipeline_mode<synchronous>, transform_indices = @transform_3, window_bounds = array<i64: 1, 32>}, {transform_indices = @transform_4, window_bounds = array<i64: 1, 8, 32>}]} {
    %0 = tpu.iota {dimensions = array<i32: 1>} : vector<8x8xi32>
    %c5_i32 = arith.constant 5 : i32
    %1 = vector.broadcast %c5_i32 : i32 to vector<8x8xi32>
    %2 = arith.cmpi sge, %0, %1 : vector<8x8xi32>
    %cst = arith.constant -1.000000e+30 : f32
    %cst_0 = arith.constant 0.000000e+00 : f32
    %3 = vector.broadcast %cst : f32 to vector<8x8xf32>
    %4 = vector.broadcast %cst_0 : f32 to vector<8x8xf32>
    %5 = arith.select %2, %3, %4 : vector<8x8xi1>, vector<8x8xf32>
    %c0 = arith.constant 0 : index
    %c0_1 = arith.constant 0 : index
    %c0_2 = arith.constant 0 : index
    %6 = vector.load %arg2[%c0, %c0_1, %c0_2] : memref<1x8x32xf32, #tpu.memory_space<vmem>>, vector<1x8x32xf32>
    %7 = vector.shape_cast %6 : vector<1x8x32xf32> to vector<8x32xf32>
    %c0_3 = arith.constant 0 : index
    %c0_4 = arith.constant 0 : index
    %8 = vector.load %arg4[%c0_3, %c0_4] : memref<1x32xf32, #tpu.memory_space<vmem>>, vector<1x32xf32>
    %9 = vector.broadcast %8 : vector<1x32xf32> to vector<8x32xf32>
    %10 = arith.addf %7, %9 : vector<8x32xf32>
    %c0_5 = arith.constant 0 : index
    %c0_6 = arith.constant 0 : index
    %c0_7 = arith.constant 0 : index
    %11 = vector.load %arg5[%c0_5, %c0_6, %c0_7] : memref<1x8x32xf32, #tpu.memory_space<vmem>>, vector<1x8x32xf32>
    %12 = vector.shape_cast %11 : vector<1x8x32xf32> to vector<8x32xf32>
    %13 = vector.shape_cast %10 : vector<8x32xf32> to vector<1x8x32xf32>
    tpu.vector_store %arg5[%c0_5, %c0_6, %c0_7], %13 {strides = array<i32>} : memref<1x8x32xf32, #tpu.memory_space<vmem>>, vector<1x8x32xf32>,
    %c0_8 = arith.constant 0 : index
    %c0_9 = arith.constant 0 : index
    %c0_10 = arith.constant 0 : index
    %14 = vector.load %arg1[%c0_8, %c0_9, %c0_10] : memref<1x8x96xbf16, #tpu.memory_space<vmem>>, vector<1x8x8xbf16>
    %15 = vector.shape_cast %14 : vector<1x8x8xbf16> to vector<8x8xbf16>
    %c0_11 = arith.constant 0 : index
    %c0_12 = arith.constant 0 : index
    %c32 = arith.constant 32 : index
    %16 = vector.load %arg1[%c0_11, %c0_12, %c32] : memref<1x8x96xbf16, #tpu.memory_space<vmem>>, vector<1x8x8xbf16>
    %17 = vector.shape_cast %16 : vector<1x8x8xbf16> to vector<8x8xbf16>
    %c0_13 = arith.constant 0 : index
    %c0_14 = arith.constant 0 : index
    %c64 = arith.constant 64 : index
    %18 = vector.load %arg1[%c0_13, %c0_14, %c64] : memref<1x8x96xbf16, #tpu.memory_space<vmem>>, vector<1x8x8xbf16>
    %19 = vector.shape_cast %18 : vector<1x8x8xbf16> to vector<8x8xbf16>
    %cst_15 = arith.constant dense<0.000000e+00> : vector<8x8xf32>
    %20 = tpu.matmul %15, %17, %cst_15 {dimension_numbers = #tpu.dot_dimension_numbers<[1], [1], [0], [0], [0, 0, 1, 0], [], []>} : vector<8x8xbf16>, vector<8x8xbf16>, vector<8x8xf32> -> vector<8x8xf32>
    %cst_16 = arith.constant 0.353553385 : f32
    %21 = vector.broadcast %cst_16 : f32 to vector<8x8xf32>
    %22 = arith.mulf %20, %21 : vector<8x8xf32>
    %23 = arith.addf %22, %5 : vector<8x8xf32>
    %cst_17 = arith.constant dense<0xFF800000> : vector<8xf32>
    %24 = vector.multi_reduction <maximumf>, %23, %cst_17 [1] : vector<8x8xf32> to vector<8xf32>
    %25 = vector.shape_cast %24 : vector<8xf32> to vector<8x1xf32>
    %26 = vector.broadcast %25 : vector<8x1xf32> to vector<8x8xf32>
    %27 = arith.subf %23, %26 : vector<8x8xf32>
    %28 = math.exp %27 : vector<8x8xf32>
    %cst_18 = arith.constant dense<0.000000e+00> : vector<8xf32>
    %29 = vector.multi_reduction <add>, %28, %cst_18 [1] : vector<8x8xf32> to vector<8xf32>
    %30 = vector.shape_cast %29 : vector<8xf32> to vector<8x1xf32>
    %31 = tpu.reciprocal %30 {approx = true} : vector<8x1xf32> -> vector<8x1xf32>
    %32 = vector.broadcast %31 : vector<8x1xf32> to vector<8x8xf32>
    %33 = arith.mulf %28, %32 : vector<8x8xf32>
    %34 = arith.truncf %33 : vector<8x8xf32> to vector<8x8xbf16>
    %cst_19 = arith.constant dense<0.000000e+00> : vector<8x8xf32>
    %35 = tpu.matmul %34, %19, %cst_19 {dimension_numbers = #tpu.dot_dimension_numbers<[1], [0], [0], [1], [0, 0, 1, 1], [], []>} : vector<8x8xbf16>, vector<8x8xbf16>, vector<8x8xf32> -> vector<8x8xf32>
    %c0_20 = arith.constant 0 : index
    %c0_21 = arith.constant 0 : index
    %c0_22 = arith.constant 0 : index
    %36 = vector.load %arg5[%c0_20, %c0_21, %c0_22] : memref<1x8x32xf32, #tpu.memory_space<vmem>>, vector<1x8x32xf32>
    %37 = vector.shape_cast %36 : vector<1x8x32xf32> to vector<8x32xf32>
    %38 = arith.truncf %35 : vector<8x8xf32> to vector<8x8xbf16>
    %c0_23 = arith.constant 0 : index
    %c0_24 = arith.constant 0 : index
    %39 = vector.load %arg3[%c0_23, %c0_24] : memref<32x32xbf16, #tpu.memory_space<vmem>>, vector<8x32xbf16>
    %cst_25 = arith.constant dense<0.000000e+00> : vector<8x32xf32>
    %40 = tpu.matmul %38, %39, %cst_25 {dimension_numbers = #tpu.dot_dimension_numbers<[1], [0], [0], [1], [0, 0, 1, 1], [], []>} : vector<8x8xbf16>, vector<8x32xbf16>, vector<8x32xf32> -> vector<8x32xf32>
    %41 = arith.addf %37, %40 : vector<8x32xf32>
    %c0_26 = arith.constant 0 : index
    %c0_27 = arith.constant 0 : index
    %c0_28 = arith.constant 0 : index
    %42 = vector.load %arg5[%c0_26, %c0_27, %c0_28] : memref<1x8x32xf32, #tpu.memory_space<vmem>>, vector<1x8x32xf32>
    %43 = vector.shape_cast %42 : vector<1x8x32xf32> to vector<8x32xf32>
    %44 = vector.shape_cast %41 : vector<8x32xf32> to vector<1x8x32xf32>
    tpu.vector_store %arg5[%c0_26, %c0_27, %c0_28], %44 {strides = array<i32>} : memref<1x8x32xf32, #tpu.memory_space<vmem>>, vector<1x8x32xf32>,
    %c0_29 = arith.constant 0 : index
    %c0_30 = arith.constant 0 : index
    %c8 = arith.constant 8 : index
    %45 = vector.load %arg1[%c0_29, %c0_30, %c8] : memref<1x8x96xbf16, #tpu.memory_space<vmem>>, vector<1x8x8xbf16>
    %46 = vector.shape_cast %45 : vector<1x8x8xbf16> to vector<8x8xbf16>
    %c0_31 = arith.constant 0 : index
    %c0_32 = arith.constant 0 : index
    %c40 = arith.constant 40 : index
    %47 = vector.load %arg1[%c0_31, %c0_32, %c40] : memref<1x8x96xbf16, #tpu.memory_space<vmem>>, vector<1x8x8xbf16>
    %48 = vector.shape_cast %47 : vector<1x8x8xbf16> to vector<8x8xbf16>
    %c0_33 = arith.constant 0 : index
    %c0_34 = arith.constant 0 : index
    %c72 = arith.constant 72 : index
    %49 = vector.load %arg1[%c0_33, %c0_34, %c72] : memref<1x8x96xbf16, #tpu.memory_space<vmem>>, vector<1x8x8xbf16>
    %50 = vector.shape_cast %49 : vector<1x8x8xbf16> to vector<8x8xbf16>
    %cst_35 = arith.constant dense<0.000000e+00> : vector<8x8xf32>
    %51 = tpu.matmul %46, %48, %cst_35 {dimension_numbers = #tpu.dot_dimension_numbers<[1], [1], [0], [0], [0, 0, 1, 0], [], []>} : vector<8x8xbf16>, vector<8x8xbf16>, vector<8x8xf32> -> vector<8x8xf32>
    %cst_36 = arith.constant 0.353553385 : f32
    %52 = vector.broadcast %cst_36 : f32 to vector<8x8xf32>
    %53 = arith.mulf %51, %52 : vector<8x8xf32>
    %54 = arith.addf %53, %5 : vector<8x8xf32>
    %cst_37 = arith.constant dense<0xFF800000> : vector<8xf32>
    %55 = vector.multi_reduction <maximumf>, %54, %cst_37 [1] : vector<8x8xf32> to vector<8xf32>
    %56 = vector.shape_cast %55 : vector<8xf32> to vector<8x1xf32>
    %57 = vector.broadcast %56 : vector<8x1xf32> to vector<8x8xf32>
    %58 = arith.subf %54, %57 : vector<8x8xf32>
    %59 = math.exp %58 : vector<8x8xf32>
    %cst_38 = arith.constant dense<0.000000e+00> : vector<8xf32>
    %60 = vector.multi_reduction <add>, %59, %cst_38 [1] : vector<8x8xf32> to vector<8xf32>
    %61 = vector.shape_cast %60 : vector<8xf32> to vector<8x1xf32>
    %62 = tpu.reciprocal %61 {approx = true} : vector<8x1xf32> -> vector<8x1xf32>
    %63 = vector.broadcast %62 : vector<8x1xf32> to vector<8x8xf32>
    %64 = arith.mulf %59, %63 : vector<8x8xf32>
    %65 = arith.truncf %64 : vector<8x8xf32> to vector<8x8xbf16>
    %cst_39 = arith.constant dense<0.000000e+00> : vector<8x8xf32>
    %66 = tpu.matmul %65, %50, %cst_39 {dimension_numbers = #tpu.dot_dimension_numbers<[1], [0], [0], [1], [0, 0, 1, 1], [], []>} : vector<8x8xbf16>, vector<8x8xbf16>, vector<8x8xf32> -> vector<8x8xf32>
    %c0_40 = arith.constant 0 : index
    %c0_41 = arith.constant 0 : index
    %c0_42 = arith.constant 0 : index
    %67 = vector.load %arg5[%c0_40, %c0_41, %c0_42] : memref<1x8x32xf32, #tpu.memory_space<vmem>>, vector<1x8x32xf32>
    %68 = vector.shape_cast %67 : vector<1x8x32xf32> to vector<8x32xf32>
    %69 = arith.truncf %66 : vector<8x8xf32> to vector<8x8xbf16>
    %c8_43 = arith.constant 8 : index
    %c0_44 = arith.constant 0 : index
    %70 = vector.load %arg3[%c8_43, %c0_44] : memref<32x32xbf16, #tpu.memory_space<vmem>>, vector<8x32xbf16>
    %cst_45 = arith.constant dense<0.000000e+00> : vector<8x32xf32>
    %71 = tpu.matmul %69, %70, %cst_45 {dimension_numbers = #tpu.dot_dimension_numbers<[1], [0], [0], [1], [0, 0, 1, 1], [], []>} : vector<8x8xbf16>, vector<8x32xbf16>, vector<8x32xf32> -> vector<8x32xf32>
    %72 = arith.addf %68, %71 : vector<8x32xf32>
    %c0_46 = arith.constant 0 : index
    %c0_47 = arith.constant 0 : index
    %c0_48 = arith.constant 0 : index
    %73 = vector.load %arg5[%c0_46, %c0_47, %c0_48] : memref<1x8x32xf32, #tpu.memory_space<vmem>>, vector<1x8x32xf32>
    %74 = vector.shape_cast %73 : vector<1x8x32xf32> to vector<8x32xf32>
    %75 = vector.shape_cast %72 : vector<8x32xf32> to vector<1x8x32xf32>
    tpu.vector_store %arg5[%c0_46, %c0_47, %c0_48], %75 {strides = array<i32>} : memref<1x8x32xf32, #tpu.memory_space<vmem>>, vector<1x8x32xf32>,
    %c0_49 = arith.constant 0 : index
    %c0_50 = arith.constant 0 : index
    %c16 = arith.constant 16 : index
    %76 = vector.load %arg1[%c0_49, %c0_50, %c16] : memref<1x8x96xbf16, #tpu.memory_space<vmem>>, vector<1x8x8xbf16>
    %77 = vector.shape_cast %76 : vector<1x8x8xbf16> to vector<8x8xbf16>
    %c0_51 = arith.constant 0 : index
    %c0_52 = arith.constant 0 : index
    %c48 = arith.constant 48 : index
    %78 = vector.load %arg1[%c0_51, %c0_52, %c48] : memref<1x8x96xbf16, #tpu.memory_space<vmem>>, vector<1x8x8xbf16>
    %79 = vector.shape_cast %78 : vector<1x8x8xbf16> to vector<8x8xbf16>
    %c0_53 = arith.constant 0 : index
    %c0_54 = arith.constant 0 : index
    %c80 = arith.constant 80 : index
    %80 = vector.load %arg1[%c0_53, %c0_54, %c80] : memref<1x8x96xbf16, #tpu.memory_space<vmem>>, vector<1x8x8xbf16>
    %81 = vector.shape_cast %80 : vector<1x8x8xbf16> to vector<8x8xbf16>
    %cst_55 = arith.constant dense<0.000000e+00> : vector<8x8xf32>
    %82 = tpu.matmul %77, %79, %cst_55 {dimension_numbers = #tpu.dot_dimension_numbers<[1], [1], [0], [0], [0, 0, 1, 0], [], []>} : vector<8x8xbf16>, vector<8x8xbf16>, vector<8x8xf32> -> vector<8x8xf32>
    %cst_56 = arith.constant 0.353553385 : f32
    %83 = vector.broadcast %cst_56 : f32 to vector<8x8xf32>
    %84 = arith.mulf %82, %83 : vector<8x8xf32>
    %85 = arith.addf %84, %5 : vector<8x8xf32>
    %cst_57 = arith.constant dense<0xFF800000> : vector<8xf32>
    %86 = vector.multi_reduction <maximumf>, %85, %cst_57 [1] : vector<8x8xf32> to vector<8xf32>
    %87 = vector.shape_cast %86 : vector<8xf32> to vector<8x1xf32>
    %88 = vector.broadcast %87 : vector<8x1xf32> to vector<8x8xf32>
    %89 = arith.subf %85, %88 : vector<8x8xf32>
    %90 = math.exp %89 : vector<8x8xf32>
    %cst_58 = arith.constant dense<0.000000e+00> : vector<8xf32>
    %91 = vector.multi_reduction <add>, %90, %cst_58 [1] : vector<8x8xf32> to vector<8xf32>
    %92 = vector.shape_cast %91 : vector<8xf32> to vector<8x1xf32>
    %93 = tpu.reciprocal %92 {approx = true} : vector<8x1xf32> -> vector<8x1xf32>
    %94 = vector.broadcast %93 : vector<8x1xf32> to vector<8x8xf32>
    %95 = arith.mulf %90, %94 : vector<8x8xf32>
    %96 = arith.truncf %95 : vector<8x8xf32> to vector<8x8xbf16>
    %cst_59 = arith.constant dense<0.000000e+00> : vector<8x8xf32>
    %97 = tpu.matmul %96, %81, %cst_59 {dimension_numbers = #tpu.dot_dimension_numbers<[1], [0], [0], [1], [0, 0, 1, 1], [], []>} : vector<8x8xbf16>, vector<8x8xbf16>, vector<8x8xf32> -> vector<8x8xf32>
    %c0_60 = arith.constant 0 : index
    %c0_61 = arith.constant 0 : index
    %c0_62 = arith.constant 0 : index
    %98 = vector.load %arg5[%c0_60, %c0_61, %c0_62] : memref<1x8x32xf32, #tpu.memory_space<vmem>>, vector<1x8x32xf32>
    %99 = vector.shape_cast %98 : vector<1x8x32xf32> to vector<8x32xf32>
    %100 = arith.truncf %97 : vector<8x8xf32> to vector<8x8xbf16>
    %c16_63 = arith.constant 16 : index
    %c0_64 = arith.constant 0 : index
    %101 = vector.load %arg3[%c16_63, %c0_64] : memref<32x32xbf16, #tpu.memory_space<vmem>>, vector<8x32xbf16>
    %cst_65 = arith.constant dense<0.000000e+00> : vector<8x32xf32>
    %102 = tpu.matmul %100, %101, %cst_65 {dimension_numbers = #tpu.dot_dimension_numbers<[1], [0], [0], [1], [0, 0, 1, 1], [], []>} : vector<8x8xbf16>, vector<8x32xbf16>, vector<8x32xf32> -> vector<8x32xf32>
    %103 = arith.addf %99, %102 : vector<8x32xf32>
    %c0_66 = arith.constant 0 : index
    %c0_67 = arith.constant 0 : index
    %c0_68 = arith.constant 0 : index
    %104 = vector.load %arg5[%c0_66, %c0_67, %c0_68] : memref<1x8x32xf32, #tpu.memory_space<vmem>>, vector<1x8x32xf32>
    %105 = vector.shape_cast %104 : vector<1x8x32xf32> to vector<8x32xf32>
    %106 = vector.shape_cast %103 : vector<8x32xf32> to vector<1x8x32xf32>
    tpu.vector_store %arg5[%c0_66, %c0_67, %c0_68], %106 {strides = array<i32>} : memref<1x8x32xf32, #tpu.memory_space<vmem>>, vector<1x8x32xf32>,
    %c0_69 = arith.constant 0 : index
    %c0_70 = arith.constant 0 : index
    %c24 = arith.constant 24 : index
    %107 = vector.load %arg1[%c0_69, %c0_70, %c24] : memref<1x8x96xbf16, #tpu.memory_space<vmem>>, vector<1x8x8xbf16>
    %108 = vector.shape_cast %107 : vector<1x8x8xbf16> to vector<8x8xbf16>
    %c0_71 = arith.constant 0 : index
    %c0_72 = arith.constant 0 : index
    %c56 = arith.constant 56 : index
    %109 = vector.load %arg1[%c0_71, %c0_72, %c56] : memref<1x8x96xbf16, #tpu.memory_space<vmem>>, vector<1x8x8xbf16>
    %110 = vector.shape_cast %109 : vector<1x8x8xbf16> to vector<8x8xbf16>
    %c0_73 = arith.constant 0 : index
    %c0_74 = arith.constant 0 : index
    %c88 = arith.constant 88 : index
    %111 = vector.load %arg1[%c0_73, %c0_74, %c88] : memref<1x8x96xbf16, #tpu.memory_space<vmem>>, vector<1x8x8xbf16>
    %112 = vector.shape_cast %111 : vector<1x8x8xbf16> to vector<8x8xbf16>
    %cst_75 = arith.constant dense<0.000000e+00> : vector<8x8xf32>
    %113 = tpu.matmul %108, %110, %cst_75 {dimension_numbers = #tpu.dot_dimension_numbers<[1], [1], [0], [0], [0, 0, 1, 0], [], []>} : vector<8x8xbf16>, vector<8x8xbf16>, vector<8x8xf32> -> vector<8x8xf32>
    %cst_76 = arith.constant 0.353553385 : f32
    %114 = vector.broadcast %cst_76 : f32 to vector<8x8xf32>
    %115 = arith.mulf %113, %114 : vector<8x8xf32>
    %116 = arith.addf %115, %5 : vector<8x8xf32>
    %cst_77 = arith.constant dense<0xFF800000> : vector<8xf32>
    %117 = vector.multi_reduction <maximumf>, %116, %cst_77 [1] : vector<8x8xf32> to vector<8xf32>
    %118 = vector.shape_cast %117 : vector<8xf32> to vector<8x1xf32>
    %119 = vector.broadcast %118 : vector<8x1xf32> to vector<8x8xf32>
    %120 = arith.subf %116, %119 : vector<8x8xf32>
    %121 = math.exp %120 : vector<8x8xf32>
    %cst_78 = arith.constant dense<0.000000e+00> : vector<8xf32>
    %122 = vector.multi_reduction <add>, %121, %cst_78 [1] : vector<8x8xf32> to vector<8xf32>
    %123 = vector.shape_cast %122 : vector<8xf32> to vector<8x1xf32>
    %124 = tpu.reciprocal %123 {approx = true} : vector<8x1xf32> -> vector<8x1xf32>
    %125 = vector.broadcast %124 : vector<8x1xf32> to vector<8x8xf32>
    %126 = arith.mulf %121, %125 : vector<8x8xf32>
    %127 = arith.truncf %126 : vector<8x8xf32> to vector<8x8xbf16>
    %cst_79 = arith.constant dense<0.000000e+00> : vector<8x8xf32>
    %128 = tpu.matmul %127, %112, %cst_79 {dimension_numbers = #tpu.dot_dimension_numbers<[1], [0], [0], [1], [0, 0, 1, 1], [], []>} : vector<8x8xbf16>, vector<8x8xbf16>, vector<8x8xf32> -> vector<8x8xf32>
    %c0_80 = arith.constant 0 : index
    %c0_81 = arith.constant 0 : index
    %c0_82 = arith.constant 0 : index
    %129 = vector.load %arg5[%c0_80, %c0_81, %c0_82] : memref<1x8x32xf32, #tpu.memory_space<vmem>>, vector<1x8x32xf32>
    %130 = vector.shape_cast %129 : vector<1x8x32xf32> to vector<8x32xf32>
    %131 = arith.truncf %128 : vector<8x8xf32> to vector<8x8xbf16>
    %c24_83 = arith.constant 24 : index
    %c0_84 = arith.constant 0 : index
    %132 = vector.load %arg3[%c24_83, %c0_84] : memref<32x32xbf16, #tpu.memory_space<vmem>>, vector<8x32xbf16>
    %cst_85 = arith.constant dense<0.000000e+00> : vector<8x32xf32>
    %133 = tpu.matmul %131, %132, %cst_85 {dimension_numbers = #tpu.dot_dimension_numbers<[1], [0], [0], [1], [0, 0, 1, 1], [], []>} : vector<8x8xbf16>, vector<8x32xbf16>, vector<8x32xf32> -> vector<8x32xf32>
    %134 = arith.addf %130, %133 : vector<8x32xf32>
    %c0_86 = arith.constant 0 : index
    %c0_87 = arith.constant 0 : index
    %c0_88 = arith.constant 0 : index
    %135 = vector.load %arg5[%c0_86, %c0_87, %c0_88] : memref<1x8x32xf32, #tpu.memory_space<vmem>>, vector<1x8x32xf32>
    %136 = vector.shape_cast %135 : vector<1x8x32xf32> to vector<8x32xf32>
    %137 = vector.shape_cast %134 : vector<8x32xf32> to vector<1x8x32xf32>
    tpu.vector_store %arg5[%c0_86, %c0_87, %c0_88], %137 {strides = array<i32>} : memref<1x8x32xf32, #tpu.memory_space<vmem>>, vector<1x8x32xf32>,
    return
  }
  func.func @transform_0(%arg0: i32) -> (i32, i32, i32) {
    %c0_i32 = arith.constant 0 : i32
    %c0_i32_0 = arith.constant 0 : i32
    %c0_i32_1 = arith.constant 0 : i32
    return %arg0, %c0_i32, %c0_i32_0 : i32, i32, i32
  }
  func.func @transform_1(%arg0: i32) -> (i32, i32, i32) {
    %c0_i32 = arith.constant 0 : i32
    %c0_i32_0 = arith.constant 0 : i32
    %c0_i32_1 = arith.constant 0 : i32
    return %arg0, %c0_i32, %c0_i32_0 : i32, i32, i32
  }
  func.func @transform_2(%arg0: i32) -> (i32, i32) {
    %c0_i32 = arith.constant 0 : i32
    %c0_i32_0 = arith.constant 0 : i32
    %c0_i32_1 = arith.constant 0 : i32
    return %c0_i32, %c0_i32_0 : i32, i32
  }
  func.func @transform_3(%arg0: i32) -> (i32, i32) {
    %c0_i32 = arith.constant 0 : i32
    %c0_i32_0 = arith.constant 0 : i32
    %c0_i32_1 = arith.constant 0 : i32
    return %c0_i32, %c0_i32_0 : i32, i32
  }
  func.func @transform_4(%arg0: i32) -> (i32, i32, i32) {
    %c0_i32 = arith.constant 0 : i32
    %c0_i32_0 = arith.constant 0 : i32
    %c0_i32_1 = arith.constant 0 : i32
    return %arg0, %c0_i32, %c0_i32_0 : i32, i32, i32
  }
}

module attributes {stable_mosaic.version = 11 : i64} {
  func.func @_ln_linear_kernel(%arg0: i32, %arg1: memref<2x32xf32, #tpu.memory_space<vmem>>, %arg2: memref<1x32xf32, #tpu.memory_space<vmem>>, %arg3: memref<1x32xf32, #tpu.memory_space<vmem>>, %arg4: memref<32x16xbf16, #tpu.memory_space<vmem>>, %arg5: memref<1x16xf32, #tpu.memory_space<vmem>>, %arg6: memref<2x16xf32, #tpu.memory_space<vmem>>) attributes {dimension_semantics = [#tpu.dimension_semantics<parallel>], iteration_bounds = array<i64: 1>, scalar_prefetch = 0 : i64, scratch_operands = 0 : i64, tpu.core_type = #tpu.core_type<tc>, window_params = [{transform_indices = @transform_0, window_bounds = array<i64: 2, 32>}, {pipeline_mode = #tpu.pipeline_mode<synchronous>, transform_indices = @transform_1, window_bounds = array<i64: 1, 32>}, {pipeline_mode = #tpu.pipeline_mode<synchronous>, transform_indices = @transform_2, window_bounds = array<i64: 1, 32>}, {pipeline_mode = #tpu.pipeline_mode<synchronous>, transform_indices = @transform_3, window_bounds = array<i64: 32, 16>}, {pipeline_mode = #tpu.pipeline_mode<synchronous>, transform_indices = @transform_4, window_bounds = array<i64: 1, 16>}, {transform_indices = @transform_5, window_bounds = array<i64: 2, 16>}]} {
    %c0 = arith.constant 0 : index
    %c0_0 = arith.constant 0 : index
    %0 = vector.load %arg1[%c0, %c0_0] : memref<2x32xf32, #tpu.memory_space<vmem>>, vector<2x32xf32>
    %c0_1 = arith.constant 0 : index
    %c0_2 = arith.constant 0 : index
    %1 = vector.load %arg2[%c0_1, %c0_2] : memref<1x32xf32, #tpu.memory_space<vmem>>, vector<1x32xf32>
    %c0_3 = arith.constant 0 : index
    %c0_4 = arith.constant 0 : index
    %2 = vector.load %arg3[%c0_3, %c0_4] : memref<1x32xf32, #tpu.memory_space<vmem>>, vector<1x32xf32>
    %cst = arith.constant dense<0.000000e+00> : vector<2xf32>
    %3 = vector.multi_reduction <add>, %0, %cst [1] : vector<2x32xf32> to vector<2xf32>
    %4 = vector.shape_cast %3 : vector<2xf32> to vector<2x1xf32>
    %cst_5 = arith.constant 3.200000e+01 : f32
    %5 = vector.broadcast %cst_5 : f32 to vector<2x1xf32>
    %6 = arith.divf %4, %5 : vector<2x1xf32>
    %7 = vector.broadcast %6 : vector<2x1xf32> to vector<2x32xf32>
    %8 = arith.subf %0, %7 : vector<2x32xf32>
    %9 = arith.mulf %8, %8 : vector<2x32xf32>
    %cst_6 = arith.constant dense<0.000000e+00> : vector<2xf32>
    %10 = vector.multi_reduction <add>, %9, %cst_6 [1] : vector<2x32xf32> to vector<2xf32>
    %11 = vector.shape_cast %10 : vector<2xf32> to vector<2x1xf32>
    %cst_7 = arith.constant 3.200000e+01 : f32
    %12 = vector.broadcast %cst_7 : f32 to vector<2x1xf32>
    %13 = arith.divf %11, %12 : vector<2x1xf32>
    %cst_8 = arith.constant 9.99999974E-6 : f32
    %14 = vector.broadcast %cst_8 : f32 to vector<2x1xf32>
    %15 = arith.addf %13, %14 : vector<2x1xf32>
    %16 = math.rsqrt %15 : vector<2x1xf32>
    %17 = vector.broadcast %16 : vector<2x1xf32> to vector<2x32xf32>
    %18 = arith.mulf %8, %17 : vector<2x32xf32>
    %19 = vector.broadcast %1 : vector<1x32xf32> to vector<2x32xf32>
    %20 = arith.mulf %18, %19 : vector<2x32xf32>
    %21 = vector.broadcast %2 : vector<1x32xf32> to vector<2x32xf32>
    %22 = arith.addf %20, %21 : vector<2x32xf32>
    %23 = arith.truncf %22 : vector<2x32xf32> to vector<2x32xbf16>
    %c0_9 = arith.constant 0 : index
    %c0_10 = arith.constant 0 : index
    %24 = vector.load %arg4[%c0_9, %c0_10] : memref<32x16xbf16, #tpu.memory_space<vmem>>, vector<32x16xbf16>
    %cst_11 = arith.constant dense<0.000000e+00> : vector<2x16xf32>
    %25 = tpu.matmul %23, %24, %cst_11 {dimension_numbers = #tpu.dot_dimension_numbers<[1], [0], [0], [1], [0, 0, 1, 1], [], []>} : vector<2x32xbf16>, vector<32x16xbf16>, vector<2x16xf32> -> vector<2x16xf32>
    %c0_12 = arith.constant 0 : index
    %c0_13 = arith.constant 0 : index
    %26 = vector.load %arg5[%c0_12, %c0_13] : memref<1x16xf32, #tpu.memory_space<vmem>>, vector<1x16xf32>
    %27 = vector.broadcast %26 : vector<1x16xf32> to vector<2x16xf32>
    %28 = arith.addf %25, %27 : vector<2x16xf32>
    %c0_14 = arith.constant 0 : index
    %c0_15 = arith.constant 0 : index
    %29 = vector.load %arg6[%c0_14, %c0_15] : memref<2x16xf32, #tpu.memory_space<vmem>>, vector<2x16xf32>
    tpu.vector_store %arg6[%c0_14, %c0_15], %28 {strides = array<i32>} : memref<2x16xf32, #tpu.memory_space<vmem>>, vector<2x16xf32>,
    return
  }
  func.func @transform_0(%arg0: i32) -> (i32, i32) {
    %c0_i32 = arith.constant 0 : i32
    %c0_i32_0 = arith.constant 0 : i32
    return %arg0, %c0_i32 : i32, i32
  }
  func.func @transform_1(%arg0: i32) -> (i32, i32) {
    %c0_i32 = arith.constant 0 : i32
    %c0_i32_0 = arith.constant 0 : i32
    %c0_i32_1 = arith.constant 0 : i32
    return %c0_i32, %c0_i32_0 : i32, i32
  }
  func.func @transform_2(%arg0: i32) -> (i32, i32) {
    %c0_i32 = arith.constant 0 : i32
    %c0_i32_0 = arith.constant 0 : i32
    %c0_i32_1 = arith.constant 0 : i32
    return %c0_i32, %c0_i32_0 : i32, i32
  }
  func.func @transform_3(%arg0: i32) -> (i32, i32) {
    %c0_i32 = arith.constant 0 : i32
    %c0_i32_0 = arith.constant 0 : i32
    %c0_i32_1 = arith.constant 0 : i32
    return %c0_i32, %c0_i32_0 : i32, i32
  }
  func.func @transform_4(%arg0: i32) -> (i32, i32) {
    %c0_i32 = arith.constant 0 : i32
    %c0_i32_0 = arith.constant 0 : i32
    %c0_i32_1 = arith.constant 0 : i32
    return %c0_i32, %c0_i32_0 : i32, i32
  }
  func.func @transform_5(%arg0: i32) -> (i32, i32) {
    %c0_i32 = arith.constant 0 : i32
    %c0_i32_0 = arith.constant 0 : i32
    return %arg0, %c0_i32 : i32, i32
  }
}

module attributes {stable_mosaic.version = 11 : i64} {
  func.func @_mlp_block_kernel(%arg0: i32, %arg1: memref<16x32xf32, #tpu.memory_space<vmem>>, %arg2: memref<1x32xf32, #tpu.memory_space<vmem>>, %arg3: memref<1x32xf32, #tpu.memory_space<vmem>>, %arg4: memref<32x128xbf16, #tpu.memory_space<vmem>>, %arg5: memref<1x128xf32, #tpu.memory_space<vmem>>, %arg6: memref<128x32xbf16, #tpu.memory_space<vmem>>, %arg7: memref<1x32xf32, #tpu.memory_space<vmem>>, %arg8: memref<16x32xf32, #tpu.memory_space<vmem>>) attributes {dimension_semantics = [#tpu.dimension_semantics<parallel>], iteration_bounds = array<i64: 1>, scalar_prefetch = 0 : i64, scratch_operands = 0 : i64, tpu.core_type = #tpu.core_type<tc>, window_params = [{transform_indices = @transform_0, window_bounds = array<i64: 16, 32>}, {pipeline_mode = #tpu.pipeline_mode<synchronous>, transform_indices = @transform_1, window_bounds = array<i64: 1, 32>}, {pipeline_mode = #tpu.pipeline_mode<synchronous>, transform_indices = @transform_2, window_bounds = array<i64: 1, 32>}, {pipeline_mode = #tpu.pipeline_mode<synchronous>, transform_indices = @transform_3, window_bounds = array<i64: 32, 128>}, {pipeline_mode = #tpu.pipeline_mode<synchronous>, transform_indices = @transform_4, window_bounds = array<i64: 1, 128>}, {pipeline_mode = #tpu.pipeline_mode<synchronous>, transform_indices = @transform_5, window_bounds = array<i64: 128, 32>}, {pipeline_mode = #tpu.pipeline_mode<synchronous>, transform_indices = @transform_6, window_bounds = array<i64: 1, 32>}, {transform_indices = @transform_7, window_bounds = array<i64: 16, 32>}]} {
    %c0 = arith.constant 0 : index
    %c0_0 = arith.constant 0 : index
    %0 = vector.load %arg1[%c0, %c0_0] : memref<16x32xf32, #tpu.memory_space<vmem>>, vector<16x32xf32>
    %c0_1 = arith.constant 0 : index
    %c0_2 = arith.constant 0 : index
    %1 = vector.load %arg2[%c0_1, %c0_2] : memref<1x32xf32, #tpu.memory_space<vmem>>, vector<1x32xf32>
    %c0_3 = arith.constant 0 : index
    %c0_4 = arith.constant 0 : index
    %2 = vector.load %arg3[%c0_3, %c0_4] : memref<1x32xf32, #tpu.memory_space<vmem>>, vector<1x32xf32>
    %cst = arith.constant dense<0.000000e+00> : vector<16xf32>
    %3 = vector.multi_reduction <add>, %0, %cst [1] : vector<16x32xf32> to vector<16xf32>
    %4 = vector.shape_cast %3 : vector<16xf32> to vector<16x1xf32>
    %cst_5 = arith.constant 3.200000e+01 : f32
    %5 = vector.broadcast %cst_5 : f32 to vector<16x1xf32>
    %6 = arith.divf %4, %5 : vector<16x1xf32>
    %7 = vector.broadcast %6 : vector<16x1xf32> to vector<16x32xf32>
    %8 = arith.subf %0, %7 : vector<16x32xf32>
    %9 = arith.mulf %8, %8 : vector<16x32xf32>
    %cst_6 = arith.constant dense<0.000000e+00> : vector<16xf32>
    %10 = vector.multi_reduction <add>, %9, %cst_6 [1] : vector<16x32xf32> to vector<16xf32>
    %11 = vector.shape_cast %10 : vector<16xf32> to vector<16x1xf32>
    %cst_7 = arith.constant 3.200000e+01 : f32
    %12 = vector.broadcast %cst_7 : f32 to vector<16x1xf32>
    %13 = arith.divf %11, %12 : vector<16x1xf32>
    %cst_8 = arith.constant 9.99999974E-6 : f32
    %14 = vector.broadcast %cst_8 : f32 to vector<16x1xf32>
    %15 = arith.addf %13, %14 : vector<16x1xf32>
    %16 = math.rsqrt %15 : vector<16x1xf32>
    %17 = vector.broadcast %16 : vector<16x1xf32> to vector<16x32xf32>
    %18 = arith.mulf %8, %17 : vector<16x32xf32>
    %19 = vector.broadcast %1 : vector<1x32xf32> to vector<16x32xf32>
    %20 = arith.mulf %18, %19 : vector<16x32xf32>
    %21 = vector.broadcast %2 : vector<1x32xf32> to vector<16x32xf32>
    %22 = arith.addf %20, %21 : vector<16x32xf32>
    %23 = arith.truncf %22 : vector<16x32xf32> to vector<16x32xbf16>
    %c0_9 = arith.constant 0 : index
    %c0_10 = arith.constant 0 : index
    %24 = vector.load %arg7[%c0_9, %c0_10] : memref<1x32xf32, #tpu.memory_space<vmem>>, vector<1x32xf32>
    %25 = vector.broadcast %24 : vector<1x32xf32> to vector<16x32xf32>
    %26 = arith.addf %0, %25 : vector<16x32xf32>
    %c0_11 = arith.constant 0 : index
    %c0_12 = arith.constant 0 : index
    %27 = vector.load %arg8[%c0_11, %c0_12] : memref<16x32xf32, #tpu.memory_space<vmem>>, vector<16x32xf32>
    tpu.vector_store %arg8[%c0_11, %c0_12], %26 {strides = array<i32>} : memref<16x32xf32, #tpu.memory_space<vmem>>, vector<16x32xf32>,
    %c0_13 = arith.constant 0 : index
    %c0_14 = arith.constant 0 : index
    %28 = vector.load %arg4[%c0_13, %c0_14] : memref<32x128xbf16, #tpu.memory_space<vmem>>, vector<32x128xbf16>
    %cst_15 = arith.constant dense<0.000000e+00> : vector<16x128xf32>
    %29 = tpu.matmul %23, %28, %cst_15 {dimension_numbers = #tpu.dot_dimension_numbers<[1], [0], [0], [1], [0, 0, 1, 1], [], []>} : vector<16x32xbf16>, vector<32x128xbf16>, vector<16x128xf32> -> vector<16x128xf32>
    %c0_16 = arith.constant 0 : index
    %c0_17 = arith.constant 0 : index
    %30 = vector.load %arg5[%c0_16, %c0_17] : memref<1x128xf32, #tpu.memory_space<vmem>>, vector<1x128xf32>
    %31 = vector.broadcast %30 : vector<1x128xf32> to vector<16x128xf32>
    %32 = arith.addf %29, %31 : vector<16x128xf32>
    %cst_18 = arith.constant 1.702000e+00 : f32
    %33 = vector.broadcast %cst_18 : f32 to vector<16x128xf32>
    %34 = arith.mulf %33, %32 : vector<16x128xf32>
    %35 = arith.negf %34 : vector<16x128xf32>
    %36 = math.exp %35 : vector<16x128xf32>
    %cst_19 = arith.constant 1.000000e+00 : f32
    %37 = vector.broadcast %cst_19 : f32 to vector<16x128xf32>
    %38 = arith.addf %37, %36 : vector<16x128xf32>
    %39 = arith.divf %37, %38 : vector<16x128xf32>
    %40 = arith.mulf %32, %39 : vector<16x128xf32>
    %c0_20 = arith.constant 0 : index
    %c0_21 = arith.constant 0 : index
    %41 = vector.load %arg8[%c0_20, %c0_21] : memref<16x32xf32, #tpu.memory_space<vmem>>, vector<16x32xf32>
    %42 = arith.truncf %40 : vector<16x128xf32> to vector<16x128xbf16>
    %c0_22 = arith.constant 0 : index
    %c0_23 = arith.constant 0 : index
    %43 = vector.load %arg6[%c0_22, %c0_23] : memref<128x32xbf16, #tpu.memory_space<vmem>>, vector<128x32xbf16>
    %cst_24 = arith.constant dense<0.000000e+00> : vector<16x32xf32>
    %44 = tpu.matmul %42, %43, %cst_24 {dimension_numbers = #tpu.dot_dimension_numbers<[1], [0], [0], [1], [0, 0, 1, 1], [], []>} : vector<16x128xbf16>, vector<128x32xbf16>, vector<16x32xf32> -> vector<16x32xf32>
    %45 = arith.addf %41, %44 : vector<16x32xf32>
    %c0_25 = arith.constant 0 : index
    %c0_26 = arith.constant 0 : index
    %46 = vector.load %arg8[%c0_25, %c0_26] : memref<16x32xf32, #tpu.memory_space<vmem>>, vector<16x32xf32>
    tpu.vector_store %arg8[%c0_25, %c0_26], %45 {strides = array<i32>} : memref<16x32xf32, #tpu.memory_space<vmem>>, vector<16x32xf32>,
    return
  }
  func.func @transform_0(%arg0: i32) -> (i32, i32) {
    %c0_i32 = arith.constant 0 : i32
    %c0_i32_0 = arith.constant 0 : i32
    return %arg0, %c0_i32 : i32, i32
  }
  func.func @transform_1(%arg0: i32) -> (i32, i32) {
    %c0_i32 = arith.constant 0 : i32
    %c0_i32_0 = arith.constant 0 : i32
    %c0_i32_1 = arith.constant 0 : i32
    return %c0_i32, %c0_i32_0 : i32, i32
  }
  func.func @transform_2(%arg0: i32) -> (i32, i32) {
    %c0_i32 = arith.constant 0 : i32
    %c0_i32_0 = arith.constant 0 : i32
    %c0_i32_1 = arith.constant 0 : i32
    return %c0_i32, %c0_i32_0 : i32, i32
  }
  func.func @transform_3(%arg0: i32) -> (i32, i32) {
    %c0_i32 = arith.constant 0 : i32
    %c0_i32_0 = arith.constant 0 : i32
    %c0_i32_1 = arith.constant 0 : i32
    return %c0_i32, %c0_i32_0 : i32, i32
  }
  func.func @transform_4(%arg0: i32) -> (i32, i32) {
    %c0_i32 = arith.constant 0 : i32
    %c0_i32_0 = arith.constant 0 : i32
    %c0_i32_1 = arith.constant 0 : i32
    return %c0_i32, %c0_i32_0 : i32, i32
  }
  func.func @transform_5(%arg0: i32) -> (i32, i32) {
    %c0_i32 = arith.constant 0 : i32
    %c0_i32_0 = arith.constant 0 : i32
    %c0_i32_1 = arith.constant 0 : i32
    return %c0_i32, %c0_i32_0 : i32, i32
  }
  func.func @transform_6(%arg0: i32) -> (i32, i32) {
    %c0_i32 = arith.constant 0 : i32
    %c0_i32_0 = arith.constant 0 : i32
    %c0_i32_1 = arith.constant 0 : i32
    return %c0_i32, %c0_i32_0 : i32, i32
  }
  func.func @transform_7(%arg0: i32) -> (i32, i32) {
    %c0_i32 = arith.constant 0 : i32
    %c0_i32_0 = arith.constant 0 : i32
    return %arg0, %c0_i32 : i32, i32
  }
}

module attributes {stable_mosaic.version = 11 : i64} {
  func.func @_attn_block_kernel(%arg0: i32, %arg1: memref<1x8x96xbf16, #tpu.memory_space<vmem>>, %arg2: memref<1x8x32xf32, #tpu.memory_space<vmem>>, %arg3: memref<32x32xbf16, #tpu.memory_space<vmem>>, %arg4: memref<1x32xf32, #tpu.memory_space<vmem>>, %arg5: memref<1x8x32xf32, #tpu.memory_space<vmem>>) attributes {dimension_semantics = [#tpu.dimension_semantics<parallel>], iteration_bounds = array<i64: 2>, scalar_prefetch = 0 : i64, scratch_operands = 0 : i64, tpu.core_type = #tpu.core_type<tc>, window_params = [{transform_indices = @transform_0, window_bounds = array<i64: 1, 8, 96>}, {transform_indices = @transform_1, window_bounds = array<i64: 1, 8, 32>}, {pipeline_mode = #tpu.pipeline_mode<synchronous>, transform_indices = @transform_2, window_bounds = array<i64: 32, 32>}, {pipeline_mode = #tpu.pipeline_mode<synchronous>, transform_indices = @transform_3, window_bounds = array<i64: 1, 32>}, {transform_indices = @transform_4, window_bounds = array<i64: 1, 8, 32>}]} {
    %0 = tpu.iota {dimensions = array<i32: 1>} : vector<8x8xi32>
    %c8_i32 = arith.constant 8 : i32
    %1 = vector.broadcast %c8_i32 : i32 to vector<8x8xi32>
    %2 = arith.cmpi sge, %0, %1 : vector<8x8xi32>
    %3 = tpu.iota {dimensions = array<i32: 0>} : vector<8x8xi32>
    %4 = arith.cmpi sgt, %0, %3 : vector<8x8xi32>
    %5 = arith.ori %2, %4 : vector<8x8xi1>
    %cst = arith.constant -1.000000e+30 : f32
    %cst_0 = arith.constant 0.000000e+00 : f32
    %6 = vector.broadcast %cst : f32 to vector<8x8xf32>
    %7 = vector.broadcast %cst_0 : f32 to vector<8x8xf32>
    %8 = arith.select %5, %6, %7 : vector<8x8xi1>, vector<8x8xf32>
    %c0 = arith.constant 0 : index
    %c0_1 = arith.constant 0 : index
    %c0_2 = arith.constant 0 : index
    %9 = vector.load %arg2[%c0, %c0_1, %c0_2] : memref<1x8x32xf32, #tpu.memory_space<vmem>>, vector<1x8x32xf32>
    %10 = vector.shape_cast %9 : vector<1x8x32xf32> to vector<8x32xf32>
    %c0_3 = arith.constant 0 : index
    %c0_4 = arith.constant 0 : index
    %11 = vector.load %arg4[%c0_3, %c0_4] : memref<1x32xf32, #tpu.memory_space<vmem>>, vector<1x32xf32>
    %12 = vector.broadcast %11 : vector<1x32xf32> to vector<8x32xf32>
    %13 = arith.addf %10, %12 : vector<8x32xf32>
    %c0_5 = arith.constant 0 : index
    %c0_6 = arith.constant 0 : index
    %c0_7 = arith.constant 0 : index
    %14 = vector.load %arg5[%c0_5, %c0_6, %c0_7] : memref<1x8x32xf32, #tpu.memory_space<vmem>>, vector<1x8x32xf32>
    %15 = vector.shape_cast %14 : vector<1x8x32xf32> to vector<8x32xf32>
    %16 = vector.shape_cast %13 : vector<8x32xf32> to vector<1x8x32xf32>
    tpu.vector_store %arg5[%c0_5, %c0_6, %c0_7], %16 {strides = array<i32>} : memref<1x8x32xf32, #tpu.memory_space<vmem>>, vector<1x8x32xf32>,
    %c0_8 = arith.constant 0 : index
    %c0_9 = arith.constant 0 : index
    %c0_10 = arith.constant 0 : index
    %17 = vector.load %arg1[%c0_8, %c0_9, %c0_10] : memref<1x8x96xbf16, #tpu.memory_space<vmem>>, vector<1x8x8xbf16>
    %18 = vector.shape_cast %17 : vector<1x8x8xbf16> to vector<8x8xbf16>
    %c0_11 = arith.constant 0 : index
    %c0_12 = arith.constant 0 : index
    %c32 = arith.constant 32 : index
    %19 = vector.load %arg1[%c0_11, %c0_12, %c32] : memref<1x8x96xbf16, #tpu.memory_space<vmem>>, vector<1x8x8xbf16>
    %20 = vector.shape_cast %19 : vector<1x8x8xbf16> to vector<8x8xbf16>
    %c0_13 = arith.constant 0 : index
    %c0_14 = arith.constant 0 : index
    %c64 = arith.constant 64 : index
    %21 = vector.load %arg1[%c0_13, %c0_14, %c64] : memref<1x8x96xbf16, #tpu.memory_space<vmem>>, vector<1x8x8xbf16>
    %22 = vector.shape_cast %21 : vector<1x8x8xbf16> to vector<8x8xbf16>
    %cst_15 = arith.constant dense<0.000000e+00> : vector<8x8xf32>
    %23 = tpu.matmul %18, %20, %cst_15 {dimension_numbers = #tpu.dot_dimension_numbers<[1], [1], [0], [0], [0, 0, 1, 0], [], []>} : vector<8x8xbf16>, vector<8x8xbf16>, vector<8x8xf32> -> vector<8x8xf32>
    %cst_16 = arith.constant 0.353553385 : f32
    %24 = vector.broadcast %cst_16 : f32 to vector<8x8xf32>
    %25 = arith.mulf %23, %24 : vector<8x8xf32>
    %26 = arith.addf %25, %8 : vector<8x8xf32>
    %cst_17 = arith.constant dense<0xFF800000> : vector<8xf32>
    %27 = vector.multi_reduction <maximumf>, %26, %cst_17 [1] : vector<8x8xf32> to vector<8xf32>
    %28 = vector.shape_cast %27 : vector<8xf32> to vector<8x1xf32>
    %29 = vector.broadcast %28 : vector<8x1xf32> to vector<8x8xf32>
    %30 = arith.subf %26, %29 : vector<8x8xf32>
    %31 = math.exp %30 : vector<8x8xf32>
    %cst_18 = arith.constant dense<0.000000e+00> : vector<8xf32>
    %32 = vector.multi_reduction <add>, %31, %cst_18 [1] : vector<8x8xf32> to vector<8xf32>
    %33 = vector.shape_cast %32 : vector<8xf32> to vector<8x1xf32>
    %34 = tpu.reciprocal %33 {approx = true} : vector<8x1xf32> -> vector<8x1xf32>
    %35 = vector.broadcast %34 : vector<8x1xf32> to vector<8x8xf32>
    %36 = arith.mulf %31, %35 : vector<8x8xf32>
    %37 = arith.truncf %36 : vector<8x8xf32> to vector<8x8xbf16>
    %cst_19 = arith.constant dense<0.000000e+00> : vector<8x8xf32>
    %38 = tpu.matmul %37, %22, %cst_19 {dimension_numbers = #tpu.dot_dimension_numbers<[1], [0], [0], [1], [0, 0, 1, 1], [], []>} : vector<8x8xbf16>, vector<8x8xbf16>, vector<8x8xf32> -> vector<8x8xf32>
    %c0_20 = arith.constant 0 : index
    %c0_21 = arith.constant 0 : index
    %c0_22 = arith.constant 0 : index
    %39 = vector.load %arg5[%c0_20, %c0_21, %c0_22] : memref<1x8x32xf32, #tpu.memory_space<vmem>>, vector<1x8x32xf32>
    %40 = vector.shape_cast %39 : vector<1x8x32xf32> to vector<8x32xf32>
    %41 = arith.truncf %38 : vector<8x8xf32> to vector<8x8xbf16>
    %c0_23 = arith.constant 0 : index
    %c0_24 = arith.constant 0 : index
    %42 = vector.load %arg3[%c0_23, %c0_24] : memref<32x32xbf16, #tpu.memory_space<vmem>>, vector<8x32xbf16>
    %cst_25 = arith.constant dense<0.000000e+00> : vector<8x32xf32>
    %43 = tpu.matmul %41, %42, %cst_25 {dimension_numbers = #tpu.dot_dimension_numbers<[1], [0], [0], [1], [0, 0, 1, 1], [], []>} : vector<8x8xbf16>, vector<8x32xbf16>, vector<8x32xf32> -> vector<8x32xf32>
    %44 = arith.addf %40, %43 : vector<8x32xf32>
    %c0_26 = arith.constant 0 : index
    %c0_27 = arith.constant 0 : index
    %c0_28 = arith.constant 0 : index
    %45 = vector.load %arg5[%c0_26, %c0_27, %c0_28] : memref<1x8x32xf32, #tpu.memory_space<vmem>>, vector<1x8x32xf32>
    %46 = vector.shape_cast %45 : vector<1x8x32xf32> to vector<8x32xf32>
    %47 = vector.shape_cast %44 : vector<8x32xf32> to vector<1x8x32xf32>
    tpu.vector_store %arg5[%c0_26, %c0_27, %c0_28], %47 {strides = array<i32>} : memref<1x8x32xf32, #tpu.memory_space<vmem>>, vector<1x8x32xf32>,
    %c0_29 = arith.constant 0 : index
    %c0_30 = arith.constant 0 : index
    %c8 = arith.constant 8 : index
    %48 = vector.load %arg1[%c0_29, %c0_30, %c8] : memref<1x8x96xbf16, #tpu.memory_space<vmem>>, vector<1x8x8xbf16>
    %49 = vector.shape_cast %48 : vector<1x8x8xbf16> to vector<8x8xbf16>
    %c0_31 = arith.constant 0 : index
    %c0_32 = arith.constant 0 : index
    %c40 = arith.constant 40 : index
    %50 = vector.load %arg1[%c0_31, %c0_32, %c40] : memref<1x8x96xbf16, #tpu.memory_space<vmem>>, vector<1x8x8xbf16>
    %51 = vector.shape_cast %50 : vector<1x8x8xbf16> to vector<8x8xbf16>
    %c0_33 = arith.constant 0 : index
    %c0_34 = arith.constant 0 : index
    %c72 = arith.constant 72 : index
    %52 = vector.load %arg1[%c0_33, %c0_34, %c72] : memref<1x8x96xbf16, #tpu.memory_space<vmem>>, vector<1x8x8xbf16>
    %53 = vector.shape_cast %52 : vector<1x8x8xbf16> to vector<8x8xbf16>
    %cst_35 = arith.constant dense<0.000000e+00> : vector<8x8xf32>
    %54 = tpu.matmul %49, %51, %cst_35 {dimension_numbers = #tpu.dot_dimension_numbers<[1], [1], [0], [0], [0, 0, 1, 0], [], []>} : vector<8x8xbf16>, vector<8x8xbf16>, vector<8x8xf32> -> vector<8x8xf32>
    %cst_36 = arith.constant 0.353553385 : f32
    %55 = vector.broadcast %cst_36 : f32 to vector<8x8xf32>
    %56 = arith.mulf %54, %55 : vector<8x8xf32>
    %57 = arith.addf %56, %8 : vector<8x8xf32>
    %cst_37 = arith.constant dense<0xFF800000> : vector<8xf32>
    %58 = vector.multi_reduction <maximumf>, %57, %cst_37 [1] : vector<8x8xf32> to vector<8xf32>
    %59 = vector.shape_cast %58 : vector<8xf32> to vector<8x1xf32>
    %60 = vector.broadcast %59 : vector<8x1xf32> to vector<8x8xf32>
    %61 = arith.subf %57, %60 : vector<8x8xf32>
    %62 = math.exp %61 : vector<8x8xf32>
    %cst_38 = arith.constant dense<0.000000e+00> : vector<8xf32>
    %63 = vector.multi_reduction <add>, %62, %cst_38 [1] : vector<8x8xf32> to vector<8xf32>
    %64 = vector.shape_cast %63 : vector<8xf32> to vector<8x1xf32>
    %65 = tpu.reciprocal %64 {approx = true} : vector<8x1xf32> -> vector<8x1xf32>
    %66 = vector.broadcast %65 : vector<8x1xf32> to vector<8x8xf32>
    %67 = arith.mulf %62, %66 : vector<8x8xf32>
    %68 = arith.truncf %67 : vector<8x8xf32> to vector<8x8xbf16>
    %cst_39 = arith.constant dense<0.000000e+00> : vector<8x8xf32>
    %69 = tpu.matmul %68, %53, %cst_39 {dimension_numbers = #tpu.dot_dimension_numbers<[1], [0], [0], [1], [0, 0, 1, 1], [], []>} : vector<8x8xbf16>, vector<8x8xbf16>, vector<8x8xf32> -> vector<8x8xf32>
    %c0_40 = arith.constant 0 : index
    %c0_41 = arith.constant 0 : index
    %c0_42 = arith.constant 0 : index
    %70 = vector.load %arg5[%c0_40, %c0_41, %c0_42] : memref<1x8x32xf32, #tpu.memory_space<vmem>>, vector<1x8x32xf32>
    %71 = vector.shape_cast %70 : vector<1x8x32xf32> to vector<8x32xf32>
    %72 = arith.truncf %69 : vector<8x8xf32> to vector<8x8xbf16>
    %c8_43 = arith.constant 8 : index
    %c0_44 = arith.constant 0 : index
    %73 = vector.load %arg3[%c8_43, %c0_44] : memref<32x32xbf16, #tpu.memory_space<vmem>>, vector<8x32xbf16>
    %cst_45 = arith.constant dense<0.000000e+00> : vector<8x32xf32>
    %74 = tpu.matmul %72, %73, %cst_45 {dimension_numbers = #tpu.dot_dimension_numbers<[1], [0], [0], [1], [0, 0, 1, 1], [], []>} : vector<8x8xbf16>, vector<8x32xbf16>, vector<8x32xf32> -> vector<8x32xf32>
    %75 = arith.addf %71, %74 : vector<8x32xf32>
    %c0_46 = arith.constant 0 : index
    %c0_47 = arith.constant 0 : index
    %c0_48 = arith.constant 0 : index
    %76 = vector.load %arg5[%c0_46, %c0_47, %c0_48] : memref<1x8x32xf32, #tpu.memory_space<vmem>>, vector<1x8x32xf32>
    %77 = vector.shape_cast %76 : vector<1x8x32xf32> to vector<8x32xf32>
    %78 = vector.shape_cast %75 : vector<8x32xf32> to vector<1x8x32xf32>
    tpu.vector_store %arg5[%c0_46, %c0_47, %c0_48], %78 {strides = array<i32>} : memref<1x8x32xf32, #tpu.memory_space<vmem>>, vector<1x8x32xf32>,
    %c0_49 = arith.constant 0 : index
    %c0_50 = arith.constant 0 : index
    %c16 = arith.constant 16 : index
    %79 = vector.load %arg1[%c0_49, %c0_50, %c16] : memref<1x8x96xbf16, #tpu.memory_space<vmem>>, vector<1x8x8xbf16>
    %80 = vector.shape_cast %79 : vector<1x8x8xbf16> to vector<8x8xbf16>
    %c0_51 = arith.constant 0 : index
    %c0_52 = arith.constant 0 : index
    %c48 = arith.constant 48 : index
    %81 = vector.load %arg1[%c0_51, %c0_52, %c48] : memref<1x8x96xbf16, #tpu.memory_space<vmem>>, vector<1x8x8xbf16>
    %82 = vector.shape_cast %81 : vector<1x8x8xbf16> to vector<8x8xbf16>
    %c0_53 = arith.constant 0 : index
    %c0_54 = arith.constant 0 : index
    %c80 = arith.constant 80 : index
    %83 = vector.load %arg1[%c0_53, %c0_54, %c80] : memref<1x8x96xbf16, #tpu.memory_space<vmem>>, vector<1x8x8xbf16>
    %84 = vector.shape_cast %83 : vector<1x8x8xbf16> to vector<8x8xbf16>
    %cst_55 = arith.constant dense<0.000000e+00> : vector<8x8xf32>
    %85 = tpu.matmul %80, %82, %cst_55 {dimension_numbers = #tpu.dot_dimension_numbers<[1], [1], [0], [0], [0, 0, 1, 0], [], []>} : vector<8x8xbf16>, vector<8x8xbf16>, vector<8x8xf32> -> vector<8x8xf32>
    %cst_56 = arith.constant 0.353553385 : f32
    %86 = vector.broadcast %cst_56 : f32 to vector<8x8xf32>
    %87 = arith.mulf %85, %86 : vector<8x8xf32>
    %88 = arith.addf %87, %8 : vector<8x8xf32>
    %cst_57 = arith.constant dense<0xFF800000> : vector<8xf32>
    %89 = vector.multi_reduction <maximumf>, %88, %cst_57 [1] : vector<8x8xf32> to vector<8xf32>
    %90 = vector.shape_cast %89 : vector<8xf32> to vector<8x1xf32>
    %91 = vector.broadcast %90 : vector<8x1xf32> to vector<8x8xf32>
    %92 = arith.subf %88, %91 : vector<8x8xf32>
    %93 = math.exp %92 : vector<8x8xf32>
    %cst_58 = arith.constant dense<0.000000e+00> : vector<8xf32>
    %94 = vector.multi_reduction <add>, %93, %cst_58 [1] : vector<8x8xf32> to vector<8xf32>
    %95 = vector.shape_cast %94 : vector<8xf32> to vector<8x1xf32>
    %96 = tpu.reciprocal %95 {approx = true} : vector<8x1xf32> -> vector<8x1xf32>
    %97 = vector.broadcast %96 : vector<8x1xf32> to vector<8x8xf32>
    %98 = arith.mulf %93, %97 : vector<8x8xf32>
    %99 = arith.truncf %98 : vector<8x8xf32> to vector<8x8xbf16>
    %cst_59 = arith.constant dense<0.000000e+00> : vector<8x8xf32>
    %100 = tpu.matmul %99, %84, %cst_59 {dimension_numbers = #tpu.dot_dimension_numbers<[1], [0], [0], [1], [0, 0, 1, 1], [], []>} : vector<8x8xbf16>, vector<8x8xbf16>, vector<8x8xf32> -> vector<8x8xf32>
    %c0_60 = arith.constant 0 : index
    %c0_61 = arith.constant 0 : index
    %c0_62 = arith.constant 0 : index
    %101 = vector.load %arg5[%c0_60, %c0_61, %c0_62] : memref<1x8x32xf32, #tpu.memory_space<vmem>>, vector<1x8x32xf32>
    %102 = vector.shape_cast %101 : vector<1x8x32xf32> to vector<8x32xf32>
    %103 = arith.truncf %100 : vector<8x8xf32> to vector<8x8xbf16>
    %c16_63 = arith.constant 16 : index
    %c0_64 = arith.constant 0 : index
    %104 = vector.load %arg3[%c16_63, %c0_64] : memref<32x32xbf16, #tpu.memory_space<vmem>>, vector<8x32xbf16>
    %cst_65 = arith.constant dense<0.000000e+00> : vector<8x32xf32>
    %105 = tpu.matmul %103, %104, %cst_65 {dimension_numbers = #tpu.dot_dimension_numbers<[1], [0], [0], [1], [0, 0, 1, 1], [], []>} : vector<8x8xbf16>, vector<8x32xbf16>, vector<8x32xf32> -> vector<8x32xf32>
    %106 = arith.addf %102, %105 : vector<8x32xf32>
    %c0_66 = arith.constant 0 : index
    %c0_67 = arith.constant 0 : index
    %c0_68 = arith.constant 0 : index
    %107 = vector.load %arg5[%c0_66, %c0_67, %c0_68] : memref<1x8x32xf32, #tpu.memory_space<vmem>>, vector<1x8x32xf32>
    %108 = vector.shape_cast %107 : vector<1x8x32xf32> to vector<8x32xf32>
    %109 = vector.shape_cast %106 : vector<8x32xf32> to vector<1x8x32xf32>
    tpu.vector_store %arg5[%c0_66, %c0_67, %c0_68], %109 {strides = array<i32>} : memref<1x8x32xf32, #tpu.memory_space<vmem>>, vector<1x8x32xf32>,
    %c0_69 = arith.constant 0 : index
    %c0_70 = arith.constant 0 : index
    %c24 = arith.constant 24 : index
    %110 = vector.load %arg1[%c0_69, %c0_70, %c24] : memref<1x8x96xbf16, #tpu.memory_space<vmem>>, vector<1x8x8xbf16>
    %111 = vector.shape_cast %110 : vector<1x8x8xbf16> to vector<8x8xbf16>
    %c0_71 = arith.constant 0 : index
    %c0_72 = arith.constant 0 : index
    %c56 = arith.constant 56 : index
    %112 = vector.load %arg1[%c0_71, %c0_72, %c56] : memref<1x8x96xbf16, #tpu.memory_space<vmem>>, vector<1x8x8xbf16>
    %113 = vector.shape_cast %112 : vector<1x8x8xbf16> to vector<8x8xbf16>
    %c0_73 = arith.constant 0 : index
    %c0_74 = arith.constant 0 : index
    %c88 = arith.constant 88 : index
    %114 = vector.load %arg1[%c0_73, %c0_74, %c88] : memref<1x8x96xbf16, #tpu.memory_space<vmem>>, vector<1x8x8xbf16>
    %115 = vector.shape_cast %114 : vector<1x8x8xbf16> to vector<8x8xbf16>
    %cst_75 = arith.constant dense<0.000000e+00> : vector<8x8xf32>
    %116 = tpu.matmul %111, %113, %cst_75 {dimension_numbers = #tpu.dot_dimension_numbers<[1], [1], [0], [0], [0, 0, 1, 0], [], []>} : vector<8x8xbf16>, vector<8x8xbf16>, vector<8x8xf32> -> vector<8x8xf32>
    %cst_76 = arith.constant 0.353553385 : f32
    %117 = vector.broadcast %cst_76 : f32 to vector<8x8xf32>
    %118 = arith.mulf %116, %117 : vector<8x8xf32>
    %119 = arith.addf %118, %8 : vector<8x8xf32>
    %cst_77 = arith.constant dense<0xFF800000> : vector<8xf32>
    %120 = vector.multi_reduction <maximumf>, %119, %cst_77 [1] : vector<8x8xf32> to vector<8xf32>
    %121 = vector.shape_cast %120 : vector<8xf32> to vector<8x1xf32>
    %122 = vector.broadcast %121 : vector<8x1xf32> to vector<8x8xf32>
    %123 = arith.subf %119, %122 : vector<8x8xf32>
    %124 = math.exp %123 : vector<8x8xf32>
    %cst_78 = arith.constant dense<0.000000e+00> : vector<8xf32>
    %125 = vector.multi_reduction <add>, %124, %cst_78 [1] : vector<8x8xf32> to vector<8xf32>
    %126 = vector.shape_cast %125 : vector<8xf32> to vector<8x1xf32>
    %127 = tpu.reciprocal %126 {approx = true} : vector<8x1xf32> -> vector<8x1xf32>
    %128 = vector.broadcast %127 : vector<8x1xf32> to vector<8x8xf32>
    %129 = arith.mulf %124, %128 : vector<8x8xf32>
    %130 = arith.truncf %129 : vector<8x8xf32> to vector<8x8xbf16>
    %cst_79 = arith.constant dense<0.000000e+00> : vector<8x8xf32>
    %131 = tpu.matmul %130, %115, %cst_79 {dimension_numbers = #tpu.dot_dimension_numbers<[1], [0], [0], [1], [0, 0, 1, 1], [], []>} : vector<8x8xbf16>, vector<8x8xbf16>, vector<8x8xf32> -> vector<8x8xf32>
    %c0_80 = arith.constant 0 : index
    %c0_81 = arith.constant 0 : index
    %c0_82 = arith.constant 0 : index
    %132 = vector.load %arg5[%c0_80, %c0_81, %c0_82] : memref<1x8x32xf32, #tpu.memory_space<vmem>>, vector<1x8x32xf32>
    %133 = vector.shape_cast %132 : vector<1x8x32xf32> to vector<8x32xf32>
    %134 = arith.truncf %131 : vector<8x8xf32> to vector<8x8xbf16>
    %c24_83 = arith.constant 24 : index
    %c0_84 = arith.constant 0 : index
    %135 = vector.load %arg3[%c24_83, %c0_84] : memref<32x32xbf16, #tpu.memory_space<vmem>>, vector<8x32xbf16>
    %cst_85 = arith.constant dense<0.000000e+00> : vector<8x32xf32>
    %136 = tpu.matmul %134, %135, %cst_85 {dimension_numbers = #tpu.dot_dimension_numbers<[1], [0], [0], [1], [0, 0, 1, 1], [], []>} : vector<8x8xbf16>, vector<8x32xbf16>, vector<8x32xf32> -> vector<8x32xf32>
    %137 = arith.addf %133, %136 : vector<8x32xf32>
    %c0_86 = arith.constant 0 : index
    %c0_87 = arith.constant 0 : index
    %c0_88 = arith.constant 0 : index
    %138 = vector.load %arg5[%c0_86, %c0_87, %c0_88] : memref<1x8x32xf32, #tpu.memory_space<vmem>>, vector<1x8x32xf32>
    %139 = vector.shape_cast %138 : vector<1x8x32xf32> to vector<8x32xf32>
    %140 = vector.shape_cast %137 : vector<8x32xf32> to vector<1x8x32xf32>
    tpu.vector_store %arg5[%c0_86, %c0_87, %c0_88], %140 {strides = array<i32>} : memref<1x8x32xf32, #tpu.memory_space<vmem>>, vector<1x8x32xf32>,
    return
  }
  func.func @transform_0(%arg0: i32) -> (i32, i32, i32) {
    %c0_i32 = arith.constant 0 : i32
    %c0_i32_0 = arith.constant 0 : i32
    %c0_i32_1 = arith.constant 0 : i32
    return %arg0, %c0_i32, %c0_i32_0 : i32, i32, i32
  }
  func.func @transform_1(%arg0: i32) -> (i32, i32, i32) {
    %c0_i32 = arith.constant 0 : i32
    %c0_i32_0 = arith.constant 0 : i32
    %c0_i32_1 = arith.constant 0 : i32
    return %arg0, %c0_i32, %c0_i32_0 : i32, i32, i32
  }
  func.func @transform_2(%arg0: i32) -> (i32, i32) {
    %c0_i32 = arith.constant 0 : i32
    %c0_i32_0 = arith.constant 0 : i32
    %c0_i32_1 = arith.constant 0 : i32
    return %c0_i32, %c0_i32_0 : i32, i32
  }
  func.func @transform_3(%arg0: i32) -> (i32, i32) {
    %c0_i32 = arith.constant 0 : i32
    %c0_i32_0 = arith.constant 0 : i32
    %c0_i32_1 = arith.constant 0 : i32
    return %c0_i32, %c0_i32_0 : i32, i32
  }
  func.func @transform_4(%arg0: i32) -> (i32, i32, i32) {
    %c0_i32 = arith.constant 0 : i32
    %c0_i32_0 = arith.constant 0 : i32
    %c0_i32_1 = arith.constant 0 : i32
    return %arg0, %c0_i32, %c0_i32_0 : i32, i32, i32
  }
}

module attributes {stable_mosaic.version = 11 : i64} {
  func.func @_matmul_kernel(%arg0: i32, %arg1: i32, %arg2: i32, %arg3: memref<2x16xf32, #tpu.memory_space<vmem>>, %arg4: memref<16x2xf32, #tpu.memory_space<vmem>>, %arg5: memref<2x2xf32, #tpu.memory_space<vmem>>, %arg6: memref<2x2xf32, #tpu.memory_space<vmem>>) attributes {dimension_semantics = [#tpu.dimension_semantics<parallel>, #tpu.dimension_semantics<parallel>, #tpu.dimension_semantics<arbitrary>], iteration_bounds = array<i64: 1, 1, 1>, scalar_prefetch = 0 : i64, scratch_operands = 1 : i64, tpu.core_type = #tpu.core_type<tc>, window_params = [{transform_indices = @transform_0, window_bounds = array<i64: 2, 16>}, {transform_indices = @transform_1, window_bounds = array<i64: 16, 2>}, {transform_indices = @transform_2, window_bounds = array<i64: 2, 2>}]} {
    %c0_i32 = arith.constant 0 : i32
    %0 = arith.cmpi eq, %arg2, %c0_i32 : i32
    %1 = arith.extui %0 : i1 to i32
    %c0_i32_0 = arith.constant 0 : i32
    %2 = arith.cmpi ne, %1, %c0_i32_0 : i32
    scf.if %2 {
      %cst_10 = arith.constant 0.000000e+00 : f32
      %14 = vector.broadcast %cst_10 : f32 to vector<2x2xf32>
      %c0_11 = arith.constant 0 : index
      %c0_12 = arith.constant 0 : index
      %15 = vector.load %arg6[%c0_11, %c0_12] : memref<2x2xf32, #tpu.memory_space<vmem>>, vector<2x2xf32>
      tpu.vector_store %arg6[%c0_11, %c0_12], %14 {strides = array<i32>} : memref<2x2xf32, #tpu.memory_space<vmem>>, vector<2x2xf32>,
    } else {
    }
    %c0 = arith.constant 0 : index
    %c0_1 = arith.constant 0 : index
    %3 = vector.load %arg6[%c0, %c0_1] : memref<2x2xf32, #tpu.memory_space<vmem>>, vector<2x2xf32>
    %c0_2 = arith.constant 0 : index
    %c0_3 = arith.constant 0 : index
    %4 = vector.load %arg3[%c0_2, %c0_3] : memref<2x16xf32, #tpu.memory_space<vmem>>, vector<2x16xf32>
    %5 = arith.truncf %4 : vector<2x16xf32> to vector<2x16xbf16>
    %c0_4 = arith.constant 0 : index
    %c0_5 = arith.constant 0 : index
    %6 = vector.load %arg4[%c0_4, %c0_5] : memref<16x2xf32, #tpu.memory_space<vmem>>, vector<16x2xf32>
    %7 = arith.truncf %6 : vector<16x2xf32> to vector<16x2xbf16>
    %cst = arith.constant dense<0.000000e+00> : vector<2x2xf32>
    %8 = tpu.matmul %5, %7, %cst {dimension_numbers = #tpu.dot_dimension_numbers<[1], [0], [0], [1], [0, 0, 1, 1], [], []>} : vector<2x16xbf16>, vector<16x2xbf16>, vector<2x2xf32> -> vector<2x2xf32>
    %9 = arith.addf %3, %8 : vector<2x2xf32>
    %c0_6 = arith.constant 0 : index
    %c0_7 = arith.constant 0 : index
    %10 = vector.load %arg6[%c0_6, %c0_7] : memref<2x2xf32, #tpu.memory_space<vmem>>, vector<2x2xf32>
    tpu.vector_store %arg6[%c0_6, %c0_7], %9 {strides = array<i32>} : memref<2x2xf32, #tpu.memory_space<vmem>>, vector<2x2xf32>,
    %c0_i32_8 = arith.constant 0 : i32
    %11 = arith.cmpi eq, %arg2, %c0_i32_8 : i32
    %12 = arith.extui %11 : i1 to i32
    %c0_i32_9 = arith.constant 0 : i32
    %13 = arith.cmpi ne, %12, %c0_i32_9 : i32
    scf.if %13 {
      %c0_10 = arith.constant 0 : index
      %c0_11 = arith.constant 0 : index
      %14 = vector.load %arg6[%c0_10, %c0_11] : memref<2x2xf32, #tpu.memory_space<vmem>>, vector<2x2xf32>
      %c0_12 = arith.constant 0 : index
      %c0_13 = arith.constant 0 : index
      %15 = vector.load %arg5[%c0_12, %c0_13] : memref<2x2xf32, #tpu.memory_space<vmem>>, vector<2x2xf32>
      tpu.vector_store %arg5[%c0_12, %c0_13], %14 {strides = array<i32>} : memref<2x2xf32, #tpu.memory_space<vmem>>, vector<2x2xf32>,
    } else {
    }
    return
  }
  func.func @transform_0(%arg0: i32, %arg1: i32, %arg2: i32) -> (i32, i32) {
    %c0_i32 = arith.constant 0 : i32
    return %arg0, %arg2 : i32, i32
  }
  func.func @transform_1(%arg0: i32, %arg1: i32, %arg2: i32) -> (i32, i32) {
    %c0_i32 = arith.constant 0 : i32
    return %arg2, %arg1 : i32, i32
  }
  func.func @transform_2(%arg0: i32, %arg1: i32, %arg2: i32) -> (i32, i32) {
    %c0_i32 = arith.constant 0 : i32
    return %arg0, %arg1 : i32, i32
  }
}

</mosaic_0001>

<llo_original>
// kernel: clip_forward.18
$region0: #{clip_forward.18}
  #allocation0 [shape = 'u32[]', space=smem, size = 0x4, offset = 0x4, fixed_abs, tag = 'smem constant byte address 0x4 - core index']
  #allocation1 [shape = 'u32[72,128]{1,0:T(1,128)}', space=vmem, size = 0x9000, scoped, tag = 'internal scratch']
  %s0 = inlined_call_operand.vmem [shape: f32[16,32], index: 0, kind: input, shape index: {}]
  %s1 = inlined_call_operand.vmem [shape: f32[1,32], index: 1, kind: input, shape index: {}]
  %s2 = inlined_call_operand.vmem [shape: f32[1,32], index: 2, kind: input, shape index: {}]
  %s3 = inlined_call_operand.vmem [shape: f32[16,32], index: 3, kind: output, shape index: {}]
  %s4 = sld [smem:[#allocation0]]
  $region22: #{clip_forward.18} parent=0
    _
  %s6 = ssub.s32 1, %s4
  %s7 = scalar_select 0, %s6, %s4
  // Predicated region
  $region2: #{clip_forward.18} parent=0 // pred_check
    _
  $region3: #{clip_forward.18} parent=0 // pred_check_branch
    %9 = sbr.rel (0) target = $region5
  $region4: #{clip_forward.18} parent=0 // pred_region
    _
  $region5: #{clip_forward.18} parent=0 // pred_fallthru
    _
  // Predicated region
  $region6: #{clip_forward.18} parent=0 // pred_check
    _
  $region7: #{clip_forward.18} parent=0 // pred_check_branch
    %11 = sbr.rel (0) target = $region9
  $region8: #{clip_forward.18} parent=0 // pred_region
    _
  $region9: #{clip_forward.18} parent=0 // pred_fallthru
    _
  // Predicated region
  $region10: #{clip_forward.18} parent=0 // pred_check
    _
  $region11: #{clip_forward.18} parent=0 // pred_check_branch
    %13 = sbr.rel (0) target = $region13
  $region12: #{clip_forward.18} parent=0 // pred_region
    _
  $region13: #{clip_forward.18} parent=0 // pred_fallthru
    _
  %v14 = vld [vmem:[%s0] sm:$0xff]
  %v15 = vld [vmem:[%s0 + $0x8] sm:$0xff]
  %v16 = vld [vmem:[%s1] sm:$0x1]
  %v17 = vld [vmem:[%s2] sm:$0x1]
  %vm18 = vcmask 261120
  %v19 = vsel %vm18, %v14, 0.0
  %20 = vadd.xlane.f32.xlu0 %v19
  %v21 = vpop.xlane.xlu0 %20
  %v22 = vsel %vm18, %v15, 0.0
  %23 = vadd.xlane.f32.xlu0 %v22
  %v24 = vpop.xlane.xlu0 %23
  %v25 = vrcp.pop 32.0
  %v26 = vmul.f32 32.0, %v25
  %v27 = vsub.f32 1.0, %v26
  %v28 = vmul.f32 %v25, %v27
  %v29 = vadd.f32 %v25, %v28
  %vm30 = vweird.f32 %v25
  %v31 = vsel %vm30, %v25, %v29
  %v32 = vmul.f32 %v21, %v31
  %v33 = vmul.f32 %v24, %v31
  %v34 = vsub.f32 %v14, %v32
  %v35 = vsub.f32 %v15, %v33
  %v36 = vmul.f32 %v34, %v34
  %v37 = vmul.f32 %v35, %v35
  %v38 = vsel %vm18, %v36, 0.0
  %39 = vadd.xlane.f32.xlu0 %v38
  %v40 = vpop.xlane.xlu0 %39
  %v41 = vsel %vm18, %v37, 0.0
  %42 = vadd.xlane.f32.xlu0 %v41
  %v43 = vpop.xlane.xlu0 %42
  %v44 = vmul.f32 %v40, %v31
  %v45 = vmul.f32 %v43, %v31
  %v46 = vadd.f32 %v44, 1e-05
  %v47 = vadd.f32 %v45, 1e-05
  %v48 = vrsqrt.pop %v46
  %v49 = vmul.f32 %v48, %v46
  %v50 = vmul.f32 %v49, %v48
  %v51 = vmul.f32 0.5, %v50
  %v52 = vsub.f32 1.5, %v51
  %v53 = vmul.f32 %v48, %v52
  %vm54 = vweird.f32 %v46
  %vm55 = vweird.f32 %v48
  %vm56 = vmor %vm54, %vm55
  %v57 = vsel %vm56, %v48, %v53
  %v58 = vrsqrt.pop %v47
  %v59 = vmul.f32 %v58, %v47
  %v60 = vmul.f32 %v59, %v58
  %v61 = vmul.f32 0.5, %v60
  %v62 = vsub.f32 1.5, %v61
  %v63 = vmul.f32 %v58, %v62
  %vm64 = vweird.f32 %v47
  %vm65 = vweird.f32 %v58
  %vm66 = vmor %vm64, %vm65
  %v67 = vsel %vm66, %v58, %v63
  %v68 = vmul.f32 %v34, %v57
  %v69 = vmul.f32 %v35, %v67
  %v71 = vperm.slane %v16, 0
  %v73 = vmul.f32 %v68, %v71
  %v74 = vmul.f32 %v69, %v71
  %v76 = vperm.slane %v17, 0
  %v78 = vadd.f32 %v73, %v76
  %v79 = vadd.f32 %v74, %v76
  %80 = vst.msk [vmem:[%s3] sm:$0xff] %vm18, %v78
  %81 = vst.msk [vmem:[%s3 + $0x8] sm:$0xff] %vm18, %v79
  // Predicated region
  $region14: #{clip_forward.18} parent=0 // pred_check
    _
  $region15: #{clip_forward.18} parent=0 // pred_check_branch
    %83 = sbr.rel (0) target = $region17
  $region16: #{clip_forward.18} parent=0 // pred_region
    _
  $region17: #{clip_forward.18} parent=0 // pred_fallthru
    _
  // Predicated region
  $region18: #{clip_forward.18} parent=0 // pred_check
    _
  $region19: #{clip_forward.18} parent=0 // pred_check_branch
    %85 = sbr.rel (0) target = $region21
  $region20: #{clip_forward.18} parent=0 // pred_region
    _
  $region21: #{clip_forward.18} parent=0 // pred_fallthru
    _

// kernel: clip_forward.19
$region0: #{clip_forward.19}
  #allocation0 [shape = 'u32[]', space=smem, size = 0x4, offset = 0x4, fixed_abs, tag = 'smem constant byte address 0x4 - core index']
  #allocation1 [shape = 'u32[72,128]{1,0:T(1,128)}', space=vmem, size = 0x9000, scoped, tag = 'internal scratch']
  %s0 = inlined_call_operand.vmem [shape: f32[16,32], index: 0, kind: input, shape index: {}]
  %s1 = inlined_call_operand.vmem [shape: f32[1,32], index: 1, kind: input, shape index: {}]
  %s2 = inlined_call_operand.vmem [shape: f32[1,32], index: 2, kind: input, shape index: {}]
  %s3 = inlined_call_operand.vmem [shape: bf16[32,96], index: 3, kind: input, shape index: {}]
  %s4 = inlined_call_operand.vmem [shape: f32[1,96], index: 4, kind: input, shape index: {}]
  %s5 = inlined_call_operand.vmem [shape: bf16[16,96], index: 5, kind: output, shape index: {}]
  %s6 = sld [smem:[#allocation0]]
  $region30: #{clip_forward.19} parent=0
    _
  %s8 = ssub.s32 1, %s6
  %s9 = scalar_select 0, %s8, %s6
  // Predicated region
  $region2: #{clip_forward.19} parent=0 // pred_check
    _
  $region3: #{clip_forward.19} parent=0 // pred_check_branch
    %11 = sbr.rel (0) target = $region5
  $region4: #{clip_forward.19} parent=0 // pred_region
    _
  $region5: #{clip_forward.19} parent=0 // pred_fallthru
    _
  // Predicated region
  $region6: #{clip_forward.19} parent=0 // pred_check
    _
  $region7: #{clip_forward.19} parent=0 // pred_check_branch
    %13 = sbr.rel (0) target = $region9
  $region8: #{clip_forward.19} parent=0 // pred_region
    _
  $region9: #{clip_forward.19} parent=0 // pred_fallthru
    _
  // Predicated region
  $region10: #{clip_forward.19} parent=0 // pred_check
    _
  $region11: #{clip_forward.19} parent=0 // pred_check_branch
    %15 = sbr.rel (0) target = $region13
  $region12: #{clip_forward.19} parent=0 // pred_region
    _
  $region13: #{clip_forward.19} parent=0 // pred_fallthru
    _
  // Predicated region
  $region14: #{clip_forward.19} parent=0 // pred_check
    _
  $region15: #{clip_forward.19} parent=0 // pred_check_branch
    %17 = sbr.rel (0) target = $region17
  $region16: #{clip_forward.19} parent=0 // pred_region
    _
  $region17: #{clip_forward.19} parent=0 // pred_fallthru
    _
  // Predicated region
  $region18: #{clip_forward.19} parent=0 // pred_check
    _
  $region19: #{clip_forward.19} parent=0 // pred_check_branch
    %19 = sbr.rel (0) target = $region21
  $region20: #{clip_forward.19} parent=0 // pred_region
    _
  $region21: #{clip_forward.19} parent=0 // pred_fallthru
    _
  %v21 = vld [vmem:[%s0] sm:$0xff]
  %v22 = vld [vmem:[%s0 + $0x8] sm:$0xff]
  %v23 = vld [vmem:[%s1] sm:$0x1]
  %v24 = vld [vmem:[%s2] sm:$0x1]
  %vm25 = vcmask 261120
  %v26 = vsel %vm25, %v21, 0.0
  %27 = vadd.xlane.f32.xlu0 %v26
  %v28 = vpop.xlane.xlu0 %27
  %v29 = vsel %vm25, %v22, 0.0
  %30 = vadd.xlane.f32.xlu0 %v29
  %v31 = vpop.xlane.xlu0 %30
  %v32 = vrcp.pop 32.0
  %v33 = vmul.f32 32.0, %v32
  %v34 = vsub.f32 1.0, %v33
  %v35 = vmul.f32 %v32, %v34
  %v36 = vadd.f32 %v32, %v35
  %vm37 = vweird.f32 %v32
  %v38 = vsel %vm37, %v32, %v36
  %v39 = vmul.f32 %v28, %v38
  %v40 = vmul.f32 %v31, %v38
  %v41 = vsub.f32 %v21, %v39
  %v42 = vsub.f32 %v22, %v40
  %v43 = vmul.f32 %v41, %v41
  %v44 = vmul.f32 %v42, %v42
  %v45 = vsel %vm25, %v43, 0.0
  %46 = vadd.xlane.f32.xlu0 %v45
  %v47 = vpop.xlane.xlu0 %46
  %v48 = vsel %vm25, %v44, 0.0
  %49 = vadd.xlane.f32.xlu0 %v48
  %v50 = vpop.xlane.xlu0 %49
  %v51 = vmul.f32 %v47, %v38
  %v52 = vmul.f32 %v50, %v38
  %v53 = vadd.f32 %v51, 1e-05
  %v54 = vadd.f32 %v52, 1e-05
  %v55 = vrsqrt.pop %v53
  %v56 = vmul.f32 %v55, %v53
  %v57 = vmul.f32 %v56, %v55
  %v58 = vmul.f32 0.5, %v57
  %v59 = vsub.f32 1.5, %v58
  %v60 = vmul.f32 %v55, %v59
  %vm61 = vweird.f32 %v53
  %vm62 = vweird.f32 %v55
  %vm63 = vmor %vm61, %vm62
  %v64 = vsel %vm63, %v55, %v60
  %v65 = vrsqrt.pop %v54
  %v66 = vmul.f32 %v65, %v54
  %v67 = vmul.f32 %v66, %v65
  %v68 = vmul.f32 0.5, %v67
  %v69 = vsub.f32 1.5, %v68
  %v70 = vmul.f32 %v65, %v69
  %vm71 = vweird.f32 %v54
  %vm72 = vweird.f32 %v65
  %vm73 = vmor %vm71, %vm72
  %v74 = vsel %vm73, %v65, %v70
  %v75 = vmul.f32 %v41, %v64
  %v76 = vmul.f32 %v42, %v74
  %v78 = vperm.slane %v23, 0
  %v80 = vmul.f32 %v75, %v78
  %v81 = vmul.f32 %v76, %v78
  %v83 = vperm.slane %v24, 0
  %v85 = vadd.f32 %v80, %v83
  %v86 = vadd.f32 %v81, %v83
  %v87 = vpack.c.bf16 %v86, %v85
  %v88 = vld [vmem:[%s3] sm:$0xf]
  %v89 = vld [vmem:[%s3 + $0x4] sm:$0xf]
  %v90 = vld [vmem:[%s3 + $0x8] sm:$0xf]
  %v91 = vld [vmem:[%s3 + $0xc] sm:$0xf]
  %v92 = vld [vmem:[%s4] sm:$0x1]
  %v94 = vperm.slane %v92, 0
  %v100 = vunpack.c.l.b16 %v88
  %v101 = vunpack.c.l.b16 %v89
  %v102 = vunpack.c.l.b16 %v90
  %v103 = vunpack.c.l.b16 %v91
  %v104 = vpack.c.b16 %v101, %v100
  %v105 = vpack.c.b16 %v103, %v102
  %v109 = vsel %vm25, %v87, 0
  %111 = vmatpush.bf16.msra.mxu0 0
  %112 = vmatpush.bf16.msra.mxu0 0
  %113 = vmatpush.bf16.msra.mxu0 0
  %114 = vmatpush.bf16.msra.mxu0 0
  %115 = vmatpush.bf16.msra.mxu0 0
  %116 = vmatpush.bf16.msra.mxu0 0
  %117 = vmatpush.bf16.msra.mxu0 %v105
  %118 = vmatpush.bf16.msra.mxu0 %v104
  %119 = vmatmul.bf16.gmra.mxu0 %v109
  %v120 = vpop.f32.mrf.mxu0
  %v121 = vadd.f32 %v94, %v120
  %v122 = vpop.f32.mrf.mxu0
  %v123 = vadd.f32 %v94, %v122
  %124 = vdwg.mxu0
  %v125 = vpack.c.bf16 %v121, %v121
  %v126 = vpack.c.bf16 %v123, %v123
  %vm127 = vcmask 781312
  %128 = vst.msk [vmem:[%s5] sm:$0xf] %vm127, %v125
  %129 = vst.msk [vmem:[%s5 + $0x4] sm:$0xf] %vm127, %v126
  // Predicated region
  $region22: #{clip_forward.19} parent=0 // pred_check
    _
  $region23: #{clip_forward.19} parent=0 // pred_check_branch
    %131 = sbr.rel (0) target = $region25
  $region24: #{clip_forward.19} parent=0 // pred_region
    _
  $region25: #{clip_forward.19} parent=0 // pred_fallthru
    _
  // Predicated region
  $region26: #{clip_forward.19} parent=0 // pred_check
    _
  $region27: #{clip_forward.19} parent=0 // pred_check_branch
    %133 = sbr.rel (0) target = $region29
  $region28: #{clip_forward.19} parent=0 // pred_region
    _
  $region29: #{clip_forward.19} parent=0 // pred_fallthru
    _

// kernel: clip_forward.17
$region0: #{clip_forward.17}
  #allocation0 [shape = 'u32[]', space=smem, size = 0x4, offset = 0x4, fixed_abs, tag = 'smem constant byte address 0x4 - core index']
  #allocation1 [shape = 'u32[72,128]{1,0:T(1,128)}', space=vmem, size = 0x9000, scoped, tag = 'internal scratch']
  #allocation2 [shape = 'f32[8,32]{1,0:T(8,128)}', space=vmem, size = 0x1000, scoped, tag = 'scratch operand']
  %s0 = inlined_call_operand.vmem [shape: bf16[8,192], index: 0, kind: input, shape index: {}]
  %s1 = inlined_call_operand.vmem [shape: bf16[192,32], index: 1, kind: input, shape index: {}]
  %s2 = inlined_call_operand.vmem [shape: f32[8,32], index: 2, kind: output, shape index: {}]
  %s3 = sld [smem:[#allocation0]]
  $region26: #{clip_forward.17} parent=0
    _
  %s5 = ssub.s32 1, %s3
  %s6 = scalar_select 0, %s5, %s3
  // Predicated region
  $region2: #{clip_forward.17} parent=0 // pred_check
    _
  $region3: #{clip_forward.17} parent=0 // pred_check_branch
    %8 = sbr.rel (0) target = $region5
  $region4: #{clip_forward.17} parent=0 // pred_region
    _
  $region5: #{clip_forward.17} parent=0 // pred_fallthru
    _
  // Predicated region
  $region6: #{clip_forward.17} parent=0 // pred_check
    _
  $region7: #{clip_forward.17} parent=0 // pred_check_branch
    %10 = sbr.rel (0) target = $region9
  $region8: #{clip_forward.17} parent=0 // pred_region
    _
  $region9: #{clip_forward.17} parent=0 // pred_fallthru
    _
  %p12 = scmp.eq.s32.totalorder 0, 0
  // Predicated region
  $region10: #{clip_forward.17} parent=0 // pred_check
    %p13 = pneg %p12
  $region11: #{clip_forward.17} parent=0 // pred_check_branch
    %15 = sbr.rel (%p13) target = $region13
  $region12: #{clip_forward.17} parent=0 // pred_region
    %vm16 = vcmask 261120
    %17 = vst.msk [vmem:[#allocation2] sm:$0xff] %vm16, 0.0
  $region13: #{clip_forward.17} parent=0 // pred_fallthru
    _
  %v18 = vld [vmem:[#allocation2] sm:$0xff]
  %v19 = vld [vmem:[%s0] sm:$0xff]
  %v20 = vld [vmem:[%s1] sm:$0xf]
  %v21 = vld [vmem:[%s1 + $0x4] sm:$0xf]
  %v22 = vld [vmem:[%s1 + $0x8] sm:$0xf]
  %v23 = vld [vmem:[%s1 + $0xc] sm:$0xf]
  %v24 = vld [vmem:[%s1 + $0x10] sm:$0xf]
  %v25 = vld [vmem:[%s1 + $0x14] sm:$0xf]
  %v26 = vld [vmem:[%s1 + $0x18] sm:$0xf]
  %v27 = vld [vmem:[%s1 + $0x1c] sm:$0xf]
  %v28 = vld [vmem:[%s1 + $0x20] sm:$0xf]
  %v29 = vld [vmem:[%s1 + $0x24] sm:$0xf]
  %v30 = vld [vmem:[%s1 + $0x28] sm:$0xf]
  %v31 = vld [vmem:[%s1 + $0x2c] sm:$0xf]
  %v32 = vld [vmem:[%s1 + $0x30] sm:$0xf]
  %v33 = vld [vmem:[%s1 + $0x34] sm:$0xf]
  %v34 = vld [vmem:[%s1 + $0x38] sm:$0xf]
  %v35 = vld [vmem:[%s1 + $0x3c] sm:$0xf]
  %v36 = vld [vmem:[%s1 + $0x40] sm:$0xf]
  %v37 = vld [vmem:[%s1 + $0x44] sm:$0xf]
  %v38 = vld [vmem:[%s1 + $0x48] sm:$0xf]
  %v39 = vld [vmem:[%s1 + $0x4c] sm:$0xf]
  %v40 = vld [vmem:[%s1 + $0x50] sm:$0xf]
  %v41 = vld [vmem:[%s1 + $0x54] sm:$0xf]
  %v42 = vld [vmem:[%s1 + $0x58] sm:$0xf]
  %v43 = vld [vmem:[%s1 + $0x5c] sm:$0xf]
  %v45 = vunpack.c.l.b16 %v19
  %v46 = vunpack.c.h.b16 %v19
  %v47 = vpack.c.b16 %v45, %v45
  %v48 = vpack.c.b16 %v46, %v46
  %v74 = vunpack.c.l.b16 %v20
  %v75 = vunpack.c.l.b16 %v21
  %v76 = vunpack.c.l.b16 %v22
  %v77 = vunpack.c.l.b16 %v23
  %v78 = vunpack.c.l.b16 %v24
  %v79 = vunpack.c.l.b16 %v25
  %v80 = vunpack.c.l.b16 %v26
  %v81 = vunpack.c.l.b16 %v27
  %v82 = vunpack.c.l.b16 %v28
  %v83 = vunpack.c.l.b16 %v29
  %v84 = vunpack.c.l.b16 %v30
  %v85 = vunpack.c.l.b16 %v31
  %v86 = vunpack.c.l.b16 %v32
  %v87 = vunpack.c.l.b16 %v33
  %v88 = vunpack.c.l.b16 %v34
  %v89 = vunpack.c.l.b16 %v35
  %v90 = vunpack.c.l.b16 %v36
  %v91 = vunpack.c.l.b16 %v37
  %v92 = vunpack.c.l.b16 %v38
  %v93 = vunpack.c.l.b16 %v39
  %v94 = vunpack.c.l.b16 %v40
  %v95 = vunpack.c.l.b16 %v41
  %v96 = vunpack.c.l.b16 %v42
  %v97 = vunpack.c.l.b16 %v43
  %v98 = vpack.c.b16 %v75, %v74
  %v99 = vpack.c.b16 %v77, %v76
  %v100 = vpack.c.b16 %v79, %v78
  %v101 = vpack.c.b16 %v81, %v80
  %v102 = vpack.c.b16 %v83, %v82
  %v103 = vpack.c.b16 %v85, %v84
  %v104 = vpack.c.b16 %v87, %v86
  %v105 = vpack.c.b16 %v89, %v88
  %v106 = vpack.c.b16 %v91, %v90
  %v107 = vpack.c.b16 %v93, %v92
  %v108 = vpack.c.b16 %v95, %v94
  %v109 = vpack.c.b16 %v97, %v96
  %vm122 = vcmask 523264
  %v124 = vsel %vm122, %v48, 0
  %126 = vmatpush.bf16.msra.mxu0 %v105
  %127 = vmatpush.bf16.msra.mxu0 %v104
  %128 = vmatpush.bf16.msra.mxu0 %v103
  %129 = vmatpush.bf16.msra.mxu0 %v102
  %130 = vmatpush.bf16.msra.mxu0 %v101
  %131 = vmatpush.bf16.msra.mxu0 %v100
  %132 = vmatpush.bf16.msra.mxu0 %v99
  %133 = vmatpush.bf16.msra.mxu0 %v98
  %134 = vmatmul.bf16.gmra.mxu0 %v47
  %v135 = vpop.f32.mrf.mxu0
  %v136 = vadd.f32 0.0, %v135
  %v137 = vpop.f32.mrf.mxu0
  %138 = vdwg.mxu0
  %139 = vmatpush.bf16.msra.mxu0 0
  %140 = vmatpush.bf16.msra.mxu0 0
  %141 = vmatpush.bf16.msra.mxu0 0
  %142 = vmatpush.bf16.msra.mxu0 0
  %143 = vmatpush.bf16.msra.mxu0 %v109
  %144 = vmatpush.bf16.msra.mxu0 %v108
  %145 = vmatpush.bf16.msra.mxu0 %v107
  %146 = vmatpush.bf16.msra.mxu0 %v106
  %147 = vmatmul.bf16.gmra.mxu0 %v124
  %v148 = vpop.f32.mrf.mxu0
  %v149 = vadd.f32 %v136, %v148
  %v150 = vpop.f32.mrf.mxu0
  %151 = vdwg.mxu0
  %v152 = vadd.f32 %v18, %v149
  %vm153 = vcmask 261120
  %154 = vst.msk [vmem:[#allocation2] sm:$0xff] %vm153, %v152
  // Predicated region
  $region14: #{clip_forward.17} parent=0 // pred_check
    %p155 = pneg %p12
  $region15: #{clip_forward.17} parent=0 // pred_check_branch
    %157 = sbr.rel (%p155) target = $region17
  $region16: #{clip_forward.17} parent=0 // pred_region
    %v158 = vld [vmem:[#allocation2] sm:$0xff]
    %159 = vst.msk [vmem:[%s2] sm:$0xff] %vm153, %v158
  $region17: #{clip_forward.17} parent=0 // pred_fallthru
    _
  // Predicated region
  $region18: #{clip_forward.17} parent=0 // pred_check
    _
  $region19: #{clip_forward.17} parent=0 // pred_check_branch
    %161 = sbr.rel (0) target = $region21
  $region20: #{clip_forward.17} parent=0 // pred_region
    _
  $region21: #{clip_forward.17} parent=0 // pred_fallthru
    _
  // Predicated region
  $region22: #{clip_forward.17} parent=0 // pred_check
    _
  $region23: #{clip_forward.17} parent=0 // pred_check_branch
    %163 = sbr.rel (0) target = $region25
  $region24: #{clip_forward.17} parent=0 // pred_region
    _
  $region25: #{clip_forward.17} parent=0 // pred_fallthru
    _

// kernel: clip_forward.20
$region0: #{clip_forward.20}
  #allocation0 [shape = 'u32[]', space=smem, size = 0x4, offset = 0x4, fixed_abs, tag = 'smem constant byte address 0x4 - core index']
  #allocation1 [shape = 'u32[72,128]{1,0:T(1,128)}', space=vmem, size = 0x9000, scoped, tag = 'internal scratch']
  %s0 = inlined_call_operand.vmem [shape: bf16[2,8,96], index: 0, kind: input, shape index: {}]
  %s1 = inlined_call_operand.vmem [shape: f32[2,8,32], index: 1, kind: input, shape index: {}]
  %s2 = inlined_call_operand.vmem [shape: bf16[32,32], index: 2, kind: input, shape index: {}]
  %s3 = inlined_call_operand.vmem [shape: f32[1,32], index: 3, kind: input, shape index: {}]
  %s4 = inlined_call_operand.vmem [shape: f32[2,8,32], index: 4, kind: output, shape index: {}]
  %s5 = sld [smem:[#allocation0]]
  $region49: #{clip_forward.20} parent=0
    _
  %s7 = ssub.s32 1, %s5
  %s8 = scalar_select 0, %s7, %s5
  loop: start=0, step=1, limit=4
  $region2: #{clip_forward.20} parent=0 // loop_pre_header
    _
  $region3: #{clip_forward.20} parent=0 // loop_header
    %s10 = sphi 0, %s14
    %p11 = scmp.ge.s32.totalorder %s10, 4
    %s20 = sphi 0, %s22
    %s23 = sphi 0, %s20
    %s24 = sphi 0, %s23
    %s40 = sphi 0, %s24
    %s46 = sphi 0, %s48
    %s49 = sphi 0, %s46
    %s50 = sphi 0, %s49
    %s66 = sphi 0, %s50
    %s70 = sphi 0, %s70
    %s72 = sphi 0, %s70
    %s73 = sphi 0, %s72
    %s87 = sphi 0, %s73
    %s91 = sphi 0, %s91
    %s93 = sphi 0, %s91
    %s94 = sphi 0, %s93
    %s108 = sphi 0, %s94
    %s114 = sphi 0, %s116
    %s117 = sphi 0, %s114
    %s118 = sphi 0, %s117
    %s134 = sphi 0, %s118
  $region4: #{clip_forward.20} parent=0 // loop_header_branch
    %13 = sbr.rel (%p11) target = $region8
  $region5: #{clip_forward.20} parent=0 // loop_body
    %s15 = ssub.s32 %s10, 1
    %s16 = ssub.s32 %s10, 2
    %s17 = sadd.s32 %s10, 1
    %s18 = ssub.s32 %s10, %s17
    %p19 = scmp.eq.s32.totalorder %s18, 0
    %s21 = sadd.s32 %s20, 1
    %s22 = scalar_select %p19, %s20, %s21
    %p25 = pneg %p19
    %p26 = scmp.eq.s32.totalorder %s10, 1
    %p27 = por %p25, %p26
    %p28 = scmp.ne.s32.totalorder %s20, %s23
    %p29 = scmp.eq.s32.totalorder %s10, 0
    %p30 = por %p28, %p29
    %p31 = scmp.ne.s32.totalorder %s20, %s23
    %p32 = scmp.eq.s32.totalorder %s15, 1
    %p33 = por %p31, %p32
    %p34 = scmp.ne.s32.totalorder %s23, %s24
    %p35 = scmp.eq.s32.totalorder %s15, 0
    %p36 = por %p34, %p35
    %p37 = scmp.ne.s32.totalorder %s23, %s24
    %p38 = scmp.eq.s32.totalorder %s16, 1
    %p39 = por %p37, %p38
    %p41 = scmp.ne.s32.totalorder %s24, %s40
    %p42 = scmp.eq.s32.totalorder %s16, 0
    %p43 = por %p41, %p42
    %s44 = ssub.s32 %s10, %s17
    %p45 = scmp.eq.s32.totalorder %s44, 0
    %s47 = sadd.s32 %s46, 1
    %s48 = scalar_select %p45, %s46, %s47
    %p51 = pneg %p45
    %p52 = scmp.eq.s32.totalorder %s10, 1
    %p53 = por %p51, %p52
    %p54 = scmp.ne.s32.totalorder %s46, %s49
    %p55 = scmp.eq.s32.totalorder %s10, 0
    %p56 = por %p54, %p55
    %p57 = scmp.ne.s32.totalorder %s46, %s49
    %p58 = scmp.eq.s32.totalorder %s15, 1
    %p59 = por %p57, %p58
    %p60 = scmp.ne.s32.totalorder %s49, %s50
    %p61 = scmp.eq.s32.totalorder %s15, 0
    %p62 = por %p60, %p61
    %p63 = scmp.ne.s32.totalorder %s49, %s50
    %p64 = scmp.eq.s32.totalorder %s16, 1
    %p65 = por %p63, %p64
    %p67 = scmp.ne.s32.totalorder %s50, %s66
    %p68 = scmp.eq.s32.totalorder %s16, 0
    %p69 = por %p67, %p68
    %s71 = sadd.s32 %s70, 1
    %p74 = scmp.eq.s32.totalorder %s10, 1
    %p75 = scmp.ne.s32.totalorder %s70, %s72
    %p76 = scmp.eq.s32.totalorder %s10, 0
    %p77 = por %p75, %p76
    %p78 = scmp.ne.s32.totalorder %s70, %s72
    %p79 = scmp.eq.s32.totalorder %s15, 1
    %p80 = por %p78, %p79
    %p81 = scmp.ne.s32.totalorder %s72, %s73
    %p82 = scmp.eq.s32.totalorder %s15, 0
    %p83 = por %p81, %p82
    %p84 = scmp.ne.s32.totalorder %s72, %s73
    %p85 = scmp.eq.s32.totalorder %s16, 1
    %p86 = por %p84, %p85
    %p88 = scmp.ne.s32.totalorder %s73, %s87
    %p89 = scmp.eq.s32.totalorder %s16, 0
    %p90 = por %p88, %p89
    %s92 = sadd.s32 %s91, 1
    %p95 = scmp.eq.s32.totalorder %s10, 1
    %p96 = scmp.ne.s32.totalorder %s91, %s93
    %p97 = scmp.eq.s32.totalorder %s10, 0
    %p98 = por %p96, %p97
    %p99 = scmp.ne.s32.totalorder %s91, %s93
    %p100 = scmp.eq.s32.totalorder %s15, 1
    %p101 = por %p99, %p100
    %p102 = scmp.ne.s32.totalorder %s93, %s94
    %p103 = scmp.eq.s32.totalorder %s15, 0
    %p104 = por %p102, %p103
    %p105 = scmp.ne.s32.totalorder %s93, %s94
    %p106 = scmp.eq.s32.totalorder %s16, 1
    %p107 = por %p105, %p106
    %p109 = scmp.ne.s32.totalorder %s94, %s108
    %p110 = scmp.eq.s32.totalorder %s16, 0
    %p111 = por %p109, %p110
    %s112 = ssub.s32 %s10, %s17
    %p113 = scmp.eq.s32.totalorder %s112, 0
    %s115 = sadd.s32 %s114, 1
    %s116 = scalar_select %p113, %s114, %s115
    %p119 = pneg %p113
    %p120 = scmp.eq.s32.totalorder %s10, 1
    %p121 = por %p119, %p120
    %p122 = scmp.ne.s32.totalorder %s114, %s117
    %p123 = scmp.eq.s32.totalorder %s10, 0
    %p124 = por %p122, %p123
    %p125 = scmp.ne.s32.totalorder %s114, %s117
    %p126 = scmp.eq.s32.totalorder %s15, 1
    %p127 = por %p125, %p126
    %p128 = scmp.ne.s32.totalorder %s117, %s118
    %p129 = scmp.eq.s32.totalorder %s15, 0
    %p130 = por %p128, %p129
    %p131 = scmp.ne.s32.totalorder %s117, %s118
    %p132 = scmp.eq.s32.totalorder %s16, 1
    %p133 = por %p131, %p132
    %p135 = scmp.ne.s32.totalorder %s118, %s134
    %p136 = scmp.eq.s32.totalorder %s16, 0
    %p137 = por %p135, %p136
    %p138 = scmp.le.s32.totalorder 1, %s10
    %p139 = scmp.lt.s32.totalorder %s10, 3
    %p140 = pnand %p138, %p139
    %p141 = pneg %p140
    // Predicated region
    $region9: #{clip_forward.20} parent=5 // pred_check
      _
    $region10: #{clip_forward.20} parent=5 // pred_check_branch
      %143 = sbr.rel (%p140) target = $region12
    $region11: #{clip_forward.20} parent=5 // pred_region
      %s144 = ssub.s32 %s10, 1
      // Predicated region
      $region13: #{clip_forward.20} parent=11 // pred_check
        %p145 = pneg %p83
      $region14: #{clip_forward.20} parent=11 // pred_check_branch
        %147 = sbr.rel (%p145) target = $region16
      $region15: #{clip_forward.20} parent=11 // pred_region
        _
      $region16: #{clip_forward.20} parent=11 // pred_fallthru
        _
      // Predicated region
      $region17: #{clip_forward.20} parent=11 // pred_check
        %p148 = pneg %p104
      $region18: #{clip_forward.20} parent=11 // pred_check_branch
        %150 = sbr.rel (%p148) target = $region20
      $region19: #{clip_forward.20} parent=11 // pred_region
        _
      $region20: #{clip_forward.20} parent=11 // pred_fallthru
        _
    $region12: #{clip_forward.20} parent=5 // pred_fallthru
      _
    %p151 = scmp.lt.s32.totalorder %s10, 2
    // Predicated region
    $region21: #{clip_forward.20} parent=5 // pred_check
      %p152 = pneg %p151
    $region22: #{clip_forward.20} parent=5 // pred_check_branch
      %154 = sbr.rel (%p152) target = $region24
    $region23: #{clip_forward.20} parent=5 // pred_region
      // Predicated region
      $region25: #{clip_forward.20} parent=23 // pred_check
        %p155 = pneg %p30
      $region26: #{clip_forward.20} parent=23 // pred_check_branch
        %157 = sbr.rel (%p155) target = $region28
      $region27: #{clip_forward.20} parent=23 // pred_region
        %p158 = scmp.lt.s32.totalorder %s10, 1
        %s159 = scalar_select %p158, %s10, 1
        %s160 = smul.addr %s159, 4
        %s161 = scalar_lea.vmem %s0, %s160
      $region28: #{clip_forward.20} parent=23 // pred_fallthru
        _
      // Predicated region
      $region29: #{clip_forward.20} parent=23 // pred_check
        %p162 = pneg %p56
      $region30: #{clip_forward.20} parent=23 // pred_check_branch
        %164 = sbr.rel (%p162) target = $region32
      $region31: #{clip_forward.20} parent=23 // pred_region
        %p165 = scmp.lt.s32.totalorder %s10, 1
        %s166 = scalar_select %p165, %s10, 1
        %s167 = smul.addr %s166, 8
        %s168 = scalar_lea.vmem %s1, %s167
      $region32: #{clip_forward.20} parent=23 // pred_fallthru
        _
    $region24: #{clip_forward.20} parent=5 // pred_fallthru
      _
    %p169 = scmp.le.s32.totalorder 1, %s10
    %p170 = scmp.lt.s32.totalorder %s10, 3
    %p171 = pnand %p169, %p170
    %p172 = pneg %p171
    // Predicated region
    $region33: #{clip_forward.20} parent=5 // pred_check
      _
    $region34: #{clip_forward.20} parent=5 // pred_check_branch
      %174 = sbr.rel (%p171) target = $region36
    $region35: #{clip_forward.20} parent=5 // pred_region
      %s175 = ssub.s32 %s10, 1
      %p176 = scmp.lt.s32.totalorder %s15, 1
      %s177 = scalar_select %p176, %s15, 1
      %s178 = smul.addr %s177, 4
      %s179 = scalar_lea.vmem %s0, %s178
      %p180 = pneg %p36
      %p181 = pneg %p33
      %p182 = scmp.lt.s32.totalorder %s15, 1
      %s183 = scalar_select %p182, %s15, 1
      %s184 = smul.addr %s183, 8
      %s185 = scalar_lea.vmem %s1, %s184
      %p186 = pneg %p62
      %p187 = pneg %p59
      %p188 = pneg %p83
      %p189 = pneg %p80
      %p190 = pneg %p104
      %p191 = pneg %p101
      %p192 = pneg %p130
      %p193 = pneg %p127
      %p194 = scmp.lt.s32.totalorder %s15, 1
      %s195 = scalar_select %p194, %s15, 1
      %s196 = smul.addr %s195, 8
      %s197 = scalar_lea.vmem %s4, %s196
      %p198 = scmp.lt.s32.totalorder %s15, 1
      %s199 = scalar_select %p198, %s15, 1
      %s200 = smul.addr %s199, 4
      %s201 = scalar_lea.vmem %s0, %s200
      %p202 = scmp.lt.s32.totalorder %s15, 1
      %s203 = scalar_select %p202, %s15, 1
      %s204 = smul.addr %s203, 8
      %s205 = scalar_lea.vmem %s1, %s204
      %p206 = scmp.lt.s32.totalorder %s15, 1
      %s207 = scalar_select %p206, %s15, 1
      %s208 = smul.addr %s207, 8
      %s209 = scalar_lea.vmem %s4, %s208
      %v211 = vlaneseq
      %v212 = vand.u32 %v211, 127
      %vm213 = vcmp.ge.s32.totalorder %v212, 5
      %v214 = vsel %vm213, -1e+30, 0.0
      %v215 = vld [vmem:[%s205] sm:$0xff]
      %v216 = vld [vmem:[%s3] sm:$0x1]
      %v218 = vperm.slane %v216, 0
      %v220 = vadd.f32 %v215, %v218
      %vm221 = vcmask 261120
      %222 = vst.msk [vmem:[%s209] sm:$0xff] %vm221, %v220
      %v223 = vld [vmem:[%s201] sm:$0xf]
      %v225 = vunpack.c.l.b16 %v223
      %v226 = vpack.c.b16 %v225, %v225
      %227 = vrot.lane.b32.xlu0 %v226, 96
      %v228 = vpop.permute.xlu0 %227
      %vm229 = vcmask 64512
      %v231 = vsel %vm229, %v223, 0
      %v234 = vsel %vm229, %v228, 0
      %236 = vmatpush.bf16.xpose.msra.mxu0 0
      %237 = vmatpush.bf16.xpose.msra.mxu0 0
      %238 = vmatpush.bf16.xpose.msra.mxu0 0
      %239 = vmatpush.bf16.xpose.msra.mxu0 0
      %240 = vmatpush.bf16.xpose.msra.mxu0 0
      %241 = vmatpush.bf16.xpose.msra.mxu0 0
      %242 = vmatpush.bf16.xpose.msra.mxu0 0
      %243 = vmatpush.bf16.xpose.msra.mxu0 %v234
      %244 = vmatmul.bf16.gmra.mxu0 %v231
      %v245 = vpop.f32.mrf.mxu0
      %v246 = vadd.f32 0.0, %v245
      %v247 = vpop.f32.mrf.mxu0
      %248 = vdwg.mxu0
      %v249 = vmul.f32 %v246, 0.35355338
      %v250 = vadd.f32 %v249, %v214
      %v251 = vsel %vm229, %v250, -inf
      %252 = vmax.xlane.f32.xlu0 %v251
      %v253 = vpop.xlane.xlu0 %252
      %v254 = vsub.f32 %v250, %v253
      %v255 = vmul.f32 %v254, 1.442695
      %v256 = vpow.pop %v255
      %v257 = vsel %vm229, %v256, 0.0
      %258 = vadd.xlane.f32.xlu0 %v257
      %v259 = vpop.xlane.xlu0 %258
      %v260 = vrcp.pop %v259
      %v261 = vmul.f32 %v256, %v260
      %v262 = vpack.c.bf16 %v261, %v261
      %263 = vrot.lane.b32.xlu0 %v226, 64
      %v264 = vpop.permute.xlu0 %263
      %v266 = vsel %vm229, %v262, 0
      %vm268 = vcmask 1043456
      %v270 = vsel %vm268, %v264, 0
      %272 = vmatpush.bf16.msra.mxu0 0
      %273 = vmatpush.bf16.msra.mxu0 0
      %274 = vmatpush.bf16.msra.mxu0 0
      %275 = vmatpush.bf16.msra.mxu0 0
      %276 = vmatpush.bf16.msra.mxu0 0
      %277 = vmatpush.bf16.msra.mxu0 0
      %278 = vmatpush.bf16.msra.mxu0 0
      %279 = vmatpush.bf16.msra.mxu0 %v270
      %280 = vmatmul.bf16.gmra.mxu0 %v266
      %v281 = vpop.f32.mrf.mxu0
      %v282 = vadd.f32 0.0, %v281
      %v283 = vpop.f32.mrf.mxu0
      %284 = vdwg.mxu0
      %v285 = vld [vmem:[%s209] sm:$0xff]
      %v286 = vpack.c.bf16 %v282, %v282
      %v287 = vld [vmem:[%s2] sm:$0xf]
      %v289 = vsel %vm229, %v286, 0
      %v292 = vsel %vm268, %v287, 0
      %294 = vmatpush.bf16.msra.mxu0 0
      %295 = vmatpush.bf16.msra.mxu0 0
      %296 = vmatpush.bf16.msra.mxu0 0
      %297 = vmatpush.bf16.msra.mxu0 0
      %298 = vmatpush.bf16.msra.mxu0 0
      %299 = vmatpush.bf16.msra.mxu0 0
      %300 = vmatpush.bf16.msra.mxu0 0
      %301 = vmatpush.bf16.msra.mxu0 %v292
      %302 = vmatmul.bf16.gmra.mxu0 %v289
      %v303 = vpop.f32.mrf.mxu0
      %v304 = vadd.f32 0.0, %v303
      %v305 = vpop.f32.mrf.mxu0
      %306 = vdwg.mxu0
      %v307 = vadd.f32 %v285, %v304
      %308 = vst.msk [vmem:[%s209] sm:$0xff] %vm221, %v307
      %v309 = vld [vmem:[%s201] sm:$0xf]
      %v311 = vunpack.c.l.b16 %v309
      %v312 = vpack.c.b16 %v311, %v311
      %313 = vrot.lane.b32.xlu0 %v312, 120
      %v314 = vpop.permute.xlu0 %313
      %315 = vrot.lane.b32.xlu0 %v312, 88
      %v316 = vpop.permute.xlu0 %315
      %v318 = vsel %vm229, %v314, 0
      %v321 = vsel %vm229, %v316, 0
      %323 = vmatpush.bf16.xpose.msra.mxu0 0
      %324 = vmatpush.bf16.xpose.msra.mxu0 0
      %325 = vmatpush.bf16.xpose.msra.mxu0 0
      %326 = vmatpush.bf16.xpose.msra.mxu0 0
      %327 = vmatpush.bf16.xpose.msra.mxu0 0
      %328 = vmatpush.bf16.xpose.msra.mxu0 0
      %329 = vmatpush.bf16.xpose.msra.mxu0 0
      %330 = vmatpush.bf16.xpose.msra.mxu0 %v321
      %331 = vmatmul.bf16.gmra.mxu0 %v318
      %v332 = vpop.f32.mrf.mxu0
      %v333 = vadd.f32 0.0, %v332
      %v334 = vpop.f32.mrf.mxu0
      %335 = vdwg.mxu0
      %v336 = vmul.f32 %v333, 0.35355338
      %v337 = vadd.f32 %v336, %v214
      %v338 = vsel %vm229, %v337, -inf
      %339 = vmax.xlane.f32.xlu0 %v338
      %v340 = vpop.xlane.xlu0 %339
      %v341 = vsub.f32 %v337, %v340
      %v342 = vmul.f32 %v341, 1.442695
      %v343 = vpow.pop %v342
      %v344 = vsel %vm229, %v343, 0.0
      %345 = vadd.xlane.f32.xlu0 %v344
      %v346 = vpop.xlane.xlu0 %345
      %v347 = vrcp.pop %v346
      %v348 = vmul.f32 %v343, %v347
      %v349 = vpack.c.bf16 %v348, %v348
      %350 = vrot.lane.b32.xlu0 %v312, 56
      %v351 = vpop.permute.xlu0 %350
      %v353 = vsel %vm229, %v349, 0
      %v356 = vsel %vm268, %v351, 0
      %358 = vmatpush.bf16.msra.mxu0 0
      %359 = vmatpush.bf16.msra.mxu0 0
      %360 = vmatpush.bf16.msra.mxu0 0
      %361 = vmatpush.bf16.msra.mxu0 0
      %362 = vmatpush.bf16.msra.mxu0 0
      %363 = vmatpush.bf16.msra.mxu0 0
      %364 = vmatpush.bf16.msra.mxu0 0
      %365 = vmatpush.bf16.msra.mxu0 %v356
      %366 = vmatmul.bf16.gmra.mxu0 %v353
      %v367 = vpop.f32.mrf.mxu0
      %v368 = vadd.f32 0.0, %v367
      %v369 = vpop.f32.mrf.mxu0
      %370 = vdwg.mxu0
      %v371 = vld [vmem:[%s209] sm:$0xff]
      %v372 = vpack.c.bf16 %v368, %v368
      %v373 = vld [vmem:[%s2 + $0x4] sm:$0xf]
      %v375 = vsel %vm229, %v372, 0
      %v378 = vsel %vm268, %v373, 0
      %380 = vmatpush.bf16.msra.mxu0 0
      %381 = vmatpush.bf16.msra.mxu0 0
      %382 = vmatpush.bf16.msra.mxu0 0
      %383 = vmatpush.bf16.msra.mxu0 0
      %384 = vmatpush.bf16.msra.mxu0 0
      %385 = vmatpush.bf16.msra.mxu0 0
      %386 = vmatpush.bf16.msra.mxu0 0
      %387 = vmatpush.bf16.msra.mxu0 %v378
      %388 = vmatmul.bf16.gmra.mxu0 %v375
      %v389 = vpop.f32.mrf.mxu0
      %v390 = vadd.f32 0.0, %v389
      %v391 = vpop.f32.mrf.mxu0
      %392 = vdwg.mxu0
      %v393 = vadd.f32 %v371, %v390
      %394 = vst.msk [vmem:[%s209] sm:$0xff] %vm221, %v393
      %v395 = vld [vmem:[%s201] sm:$0xf]
      %v397 = vunpack.c.l.b16 %v395
      %v398 = vpack.c.b16 %v397, %v397
      %399 = vrot.lane.b32.xlu0 %v398, 112
      %v400 = vpop.permute.xlu0 %399
      %401 = vrot.lane.b32.xlu0 %v398, 80
      %v402 = vpop.permute.xlu0 %401
      %v404 = vsel %vm229, %v400, 0
      %v407 = vsel %vm229, %v402, 0
      %409 = vmatpush.bf16.xpose.msra.mxu0 0
      %410 = vmatpush.bf16.xpose.msra.mxu0 0
      %411 = vmatpush.bf16.xpose.msra.mxu0 0
      %412 = vmatpush.bf16.xpose.msra.mxu0 0
      %413 = vmatpush.bf16.xpose.msra.mxu0 0
      %414 = vmatpush.bf16.xpose.msra.mxu0 0
      %415 = vmatpush.bf16.xpose.msra.mxu0 0
      %416 = vmatpush.bf16.xpose.msra.mxu0 %v407
      %417 = vmatmul.bf16.gmra.mxu0 %v404
      %v418 = vpop.f32.mrf.mxu0
      %v419 = vadd.f32 0.0, %v418
      %v420 = vpop.f32.mrf.mxu0
      %421 = vdwg.mxu0
      %v422 = vmul.f32 %v419, 0.35355338
      %v423 = vadd.f32 %v422, %v214
      %v424 = vsel %vm229, %v423, -inf
      %425 = vmax.xlane.f32.xlu0 %v424
      %v426 = vpop.xlane.xlu0 %425
      %v427 = vsub.f32 %v423, %v426
      %v428 = vmul.f32 %v427, 1.442695
      %v429 = vpow.pop %v428
      %v430 = vsel %vm229, %v429, 0.0
      %431 = vadd.xlane.f32.xlu0 %v430
      %v432 = vpop.xlane.xlu0 %431
      %v433 = vrcp.pop %v432
      %v434 = vmul.f32 %v429, %v433
      %v435 = vpack.c.bf16 %v434, %v434
      %436 = vrot.lane.b32.xlu0 %v398, 48
      %v437 = vpop.permute.xlu0 %436
      %v439 = vsel %vm229, %v435, 0
      %v442 = vsel %vm268, %v437, 0
      %444 = vmatpush.bf16.msra.mxu0 0
      %445 = vmatpush.bf16.msra.mxu0 0
      %446 = vmatpush.bf16.msra.mxu0 0
      %447 = vmatpush.bf16.msra.mxu0 0
      %448 = vmatpush.bf16.msra.mxu0 0
      %449 = vmatpush.bf16.msra.mxu0 0
      %450 = vmatpush.bf16.msra.mxu0 0
      %451 = vmatpush.bf16.msra.mxu0 %v442
      %452 = vmatmul.bf16.gmra.mxu0 %v439
      %v453 = vpop.f32.mrf.mxu0
      %v454 = vadd.f32 0.0, %v453
      %v455 = vpop.f32.mrf.mxu0
      %456 = vdwg.mxu0
      %v457 = vld [vmem:[%s209] sm:$0xff]
      %v458 = vpack.c.bf16 %v454, %v454
      %v459 = vld [vmem:[%s2 + $0x8] sm:$0xf]
      %v461 = vsel %vm229, %v458, 0
      %v464 = vsel %vm268, %v459, 0
      %466 = vmatpush.bf16.msra.mxu0 0
      %467 = vmatpush.bf16.msra.mxu0 0
      %468 = vmatpush.bf16.msra.mxu0 0
      %469 = vmatpush.bf16.msra.mxu0 0
      %470 = vmatpush.bf16.msra.mxu0 0
      %471 = vmatpush.bf16.msra.mxu0 0
      %472 = vmatpush.bf16.msra.mxu0 0
      %473 = vmatpush.bf16.msra.mxu0 %v464
      %474 = vmatmul.bf16.gmra.mxu0 %v461
      %v475 = vpop.f32.mrf.mxu0
      %v476 = vadd.f32 0.0, %v475
      %v477 = vpop.f32.mrf.mxu0
      %478 = vdwg.mxu0
      %v479 = vadd.f32 %v457, %v476
      %480 = vst.msk [vmem:[%s209] sm:$0xff] %vm221, %v479
      %v481 = vld [vmem:[%s201] sm:$0xf]
      %v483 = vunpack.c.l.b16 %v481
      %v484 = vpack.c.b16 %v483, %v483
      %485 = vrot.lane.b32.xlu0 %v484, 104
      %v486 = vpop.permute.xlu0 %485
      %487 = vrot.lane.b32.xlu0 %v484, 72
      %v488 = vpop.permute.xlu0 %487
      %v490 = vsel %vm229, %v486, 0
      %v493 = vsel %vm229, %v488, 0
      %495 = vmatpush.bf16.xpose.msra.mxu0 0
      %496 = vmatpush.bf16.xpose.msra.mxu0 0
      %497 = vmatpush.bf16.xpose.msra.mxu0 0
      %498 = vmatpush.bf16.xpose.msra.mxu0 0
      %499 = vmatpush.bf16.xpose.msra.mxu0 0
      %500 = vmatpush.bf16.xpose.msra.mxu0 0
      %501 = vmatpush.bf16.xpose.msra.mxu0 0
      %502 = vmatpush.bf16.xpose.msra.mxu0 %v493
      %503 = vmatmul.bf16.gmra.mxu0 %v490
      %v504 = vpop.f32.mrf.mxu0
      %v505 = vadd.f32 0.0, %v504
      %v506 = vpop.f32.mrf.mxu0
      %507 = vdwg.mxu0
      %v508 = vmul.f32 %v505, 0.35355338
      %v509 = vadd.f32 %v508, %v214
      %v510 = vsel %vm229, %v509, -inf
      %511 = vmax.xlane.f32.xlu0 %v510
      %v512 = vpop.xlane.xlu0 %511
      %v513 = vsub.f32 %v509, %v512
      %v514 = vmul.f32 %v513, 1.442695
      %v515 = vpow.pop %v514
      %v516 = vsel %vm229, %v515, 0.0
      %517 = vadd.xlane.f32.xlu0 %v516
      %v518 = vpop.xlane.xlu0 %517
      %v519 = vrcp.pop %v518
      %v520 = vmul.f32 %v515, %v519
      %v521 = vpack.c.bf16 %v520, %v520
      %522 = vrot.lane.b32.xlu0 %v484, 40
      %v523 = vpop.permute.xlu0 %522
      %v525 = vsel %vm229, %v521, 0
      %v528 = vsel %vm268, %v523, 0
      %530 = vmatpush.bf16.msra.mxu0 0
      %531 = vmatpush.bf16.msra.mxu0 0
      %532 = vmatpush.bf16.msra.mxu0 0
      %533 = vmatpush.bf16.msra.mxu0 0
      %534 = vmatpush.bf16.msra.mxu0 0
      %535 = vmatpush.bf16.msra.mxu0 0
      %536 = vmatpush.bf16.msra.mxu0 0
      %537 = vmatpush.bf16.msra.mxu0 %v528
      %538 = vmatmul.bf16.gmra.mxu0 %v525
      %v539 = vpop.f32.mrf.mxu0
      %v540 = vadd.f32 0.0, %v539
      %v541 = vpop.f32.mrf.mxu0
      %542 = vdwg.mxu0
      %v543 = vld [vmem:[%s209] sm:$0xff]
      %v544 = vpack.c.bf16 %v540, %v540
      %v545 = vld [vmem:[%s2 + $0xc] sm:$0xf]
      %v547 = vsel %vm229, %v544, 0
      %v550 = vsel %vm268, %v545, 0
      %552 = vmatpush.bf16.msra.mxu0 0
      %553 = vmatpush.bf16.msra.mxu0 0
      %554 = vmatpush.bf16.msra.mxu0 0
      %555 = vmatpush.bf16.msra.mxu0 0
      %556 = vmatpush.bf16.msra.mxu0 0
      %557 = vmatpush.bf16.msra.mxu0 0
      %558 = vmatpush.bf16.msra.mxu0 0
      %559 = vmatpush.bf16.msra.mxu0 %v550
      %560 = vmatmul.bf16.gmra.mxu0 %v547
      %v561 = vpop.f32.mrf.mxu0
      %v562 = vadd.f32 0.0, %v561
      %v563 = vpop.f32.mrf.mxu0
      %564 = vdwg.mxu0
      %v565 = vadd.f32 %v543, %v562
      %566 = vst.msk [vmem:[%s209] sm:$0xff] %vm221, %v565
      %p567 = scmp.lt.s32.totalorder %s15, 1
      %s568 = scalar_select %p567, %s15, 1
      %s569 = smul.addr %s568, 8
      %s570 = scalar_lea.vmem %s4, %s569
      // Predicated region
      $region37: #{clip_forward.20} parent=35 // pred_check
        %p571 = pneg %p127
      $region38: #{clip_forward.20} parent=35 // pred_check_branch
        %573 = sbr.rel (%p571) target = $region40
      $region39: #{clip_forward.20} parent=35 // pred_region
        _
      $region40: #{clip_forward.20} parent=35 // pred_fallthru
        _
    $region36: #{clip_forward.20} parent=5 // pred_fallthru
      _
    %p574 = scmp.le.s32.totalorder 2, %s10
    // Predicated region
    $region41: #{clip_forward.20} parent=5 // pred_check
      %p575 = pneg %p574
    $region42: #{clip_forward.20} parent=5 // pred_check_branch
      %577 = sbr.rel (%p575) target = $region44
    $region43: #{clip_forward.20} parent=5 // pred_region
      %s578 = ssub.s32 %s10, 2
      // Predicated region
      $region45: #{clip_forward.20} parent=43 // pred_check
        %p579 = pneg %p133
      $region46: #{clip_forward.20} parent=43 // pred_check_branch
        %581 = sbr.rel (%p579) target = $region48
      $region47: #{clip_forward.20} parent=43 // pred_region
        %p582 = scmp.lt.s32.totalorder %s16, 1
        %s583 = scalar_select %p582, %s16, 1
        %s584 = smul.addr %s583, 8
        %s585 = scalar_lea.vmem %s4, %s584
      $region48: #{clip_forward.20} parent=43 // pred_fallthru
        _
    $region44: #{clip_forward.20} parent=5 // pred_fallthru
      _
  $region6: #{clip_forward.20} parent=0 // loop_footer
    %s14 = sadd.s32 1, %s10
  $region7: #{clip_forward.20} parent=0 // loop_footer_branch
    %9 = sbr.rel target = $region3
  $region8: #{clip_forward.20} parent=0 // loop_exit
    _

// kernel: clip_forward.25
$region0: #{clip_forward.25}
  #allocation0 [shape = 'u32[]', space=smem, size = 0x4, offset = 0x4, fixed_abs, tag = 'smem constant byte address 0x4 - core index']
  #allocation1 [shape = 'u32[72,128]{1,0:T(1,128)}', space=vmem, size = 0x9000, scoped, tag = 'internal scratch']
  %s0 = inlined_call_operand.vmem [shape: f32[2,32], index: 0, kind: input, shape index: {}]
  %s1 = inlined_call_operand.vmem [shape: f32[1,32], index: 1, kind: input, shape index: {}]
  %s2 = inlined_call_operand.vmem [shape: f32[1,32], index: 2, kind: input, shape index: {}]
  %s3 = inlined_call_operand.vmem [shape: bf16[32,16], index: 3, kind: input, shape index: {}]
  %s4 = inlined_call_operand.vmem [shape: f32[1,16], index: 4, kind: input, shape index: {}]
  %s5 = inlined_call_operand.vmem [shape: f32[2,16], index: 5, kind: output, shape index: {}]
  %s6 = sld [smem:[#allocation0]]
  $region30: #{clip_forward.25} parent=0
    _
  %s8 = ssub.s32 1, %s6
  %s9 = scalar_select 0, %s8, %s6
  // Predicated region
  $region2: #{clip_forward.25} parent=0 // pred_check
    _
  $region3: #{clip_forward.25} parent=0 // pred_check_branch
    %11 = sbr.rel (0) target = $region5
  $region4: #{clip_forward.25} parent=0 // pred_region
    _
  $region5: #{clip_forward.25} parent=0 // pred_fallthru
    _
  // Predicated region
  $region6: #{clip_forward.25} parent=0 // pred_check
    _
  $region7: #{clip_forward.25} parent=0 // pred_check_branch
    %13 = sbr.rel (0) target = $region9
  $region8: #{clip_forward.25} parent=0 // pred_region
    _
  $region9: #{clip_forward.25} parent=0 // pred_fallthru
    _
  // Predicated region
  $region10: #{clip_forward.25} parent=0 // pred_check
    _
  $region11: #{clip_forward.25} parent=0 // pred_check_branch
    %15 = sbr.rel (0) target = $region13
  $region12: #{clip_forward.25} parent=0 // pred_region
    _
  $region13: #{clip_forward.25} parent=0 // pred_fallthru
    _
  // Predicated region
  $region14: #{clip_forward.25} parent=0 // pred_check
    _
  $region15: #{clip_forward.25} parent=0 // pred_check_branch
    %17 = sbr.rel (0) target = $region17
  $region16: #{clip_forward.25} parent=0 // pred_region
    _
  $region17: #{clip_forward.25} parent=0 // pred_fallthru
    _
  // Predicated region
  $region18: #{clip_forward.25} parent=0 // pred_check
    _
  $region19: #{clip_forward.25} parent=0 // pred_check_branch
    %19 = sbr.rel (0) target = $region21
  $region20: #{clip_forward.25} parent=0 // pred_region
    _
  $region21: #{clip_forward.25} parent=0 // pred_fallthru
    _
  %v21 = vld [vmem:[%s0] sm:$0x3]
  %v22 = vld [vmem:[%s1] sm:$0x1]
  %v23 = vld [vmem:[%s2] sm:$0x1]
  %vm24 = vcmask 254976
  %v25 = vsel %vm24, %v21, 0.0
  %26 = vadd.xlane.f32.xlu0 %v25
  %v27 = vpop.xlane.xlu0 %26
  %v28 = vrcp.pop 32.0
  %v29 = vmul.f32 32.0, %v28
  %v30 = vsub.f32 1.0, %v29
  %v31 = vmul.f32 %v28, %v30
  %v32 = vadd.f32 %v28, %v31
  %vm33 = vweird.f32 %v28
  %v34 = vsel %vm33, %v28, %v32
  %v35 = vmul.f32 %v27, %v34
  %v36 = vsub.f32 %v21, %v35
  %v37 = vmul.f32 %v36, %v36
  %v38 = vsel %vm24, %v37, 0.0
  %39 = vadd.xlane.f32.xlu0 %v38
  %v40 = vpop.xlane.xlu0 %39
  %v41 = vmul.f32 %v40, %v34
  %v42 = vadd.f32 %v41, 1e-05
  %v43 = vrsqrt.pop %v42
  %v44 = vmul.f32 %v43, %v42
  %v45 = vmul.f32 %v44, %v43
  %v46 = vmul.f32 0.5, %v45
  %v47 = vsub.f32 1.5, %v46
  %v48 = vmul.f32 %v43, %v47
  %vm49 = vweird.f32 %v42
  %vm50 = vweird.f32 %v43
  %vm51 = vmor %vm49, %vm50
  %v52 = vsel %vm51, %v43, %v48
  %v53 = vmul.f32 %v36, %v52
  %v55 = vperm.slane %v22, 0
  %v57 = vmul.f32 %v53, %v55
  %v59 = vperm.slane %v23, 0
  %v61 = vadd.f32 %v57, %v59
  %v62 = vpack.c.bf16 %v61, %v61
  %v63 = vld [vmem:[%s3] sm:$0xf]
  %v64 = vld [vmem:[%s3 + $0x4] sm:$0xf]
  %v65 = vld [vmem:[%s3 + $0x8] sm:$0xf]
  %v66 = vld [vmem:[%s3 + $0xc] sm:$0xf]
  %v67 = vld [vmem:[%s4] sm:$0x1]
  %v69 = vperm.slane %v67, 0
  %v75 = vunpack.c.l.b16 %v63
  %v76 = vunpack.c.l.b16 %v64
  %v77 = vunpack.c.l.b16 %v65
  %v78 = vunpack.c.l.b16 %v66
  %v79 = vpack.c.b16 %v76, %v75
  %v80 = vpack.c.b16 %v78, %v77
  %vm83 = vcmask 261120
  %v85 = vsel %vm83, %v62, 0
  %87 = vmatpush.bf16.msra.mxu0 0
  %88 = vmatpush.bf16.msra.mxu0 0
  %89 = vmatpush.bf16.msra.mxu0 0
  %90 = vmatpush.bf16.msra.mxu0 0
  %91 = vmatpush.bf16.msra.mxu0 0
  %92 = vmatpush.bf16.msra.mxu0 0
  %93 = vmatpush.bf16.msra.mxu0 %v80
  %94 = vmatpush.bf16.msra.mxu0 %v79
  %95 = vmatmul.bf16.gmra.mxu0 %v85
  %v96 = vpop.f32.mrf.mxu0
  %v97 = vadd.f32 %v69, %v96
  %v98 = vpop.f32.mrf.mxu0
  %99 = vdwg.mxu0
  %vm100 = vcmask 123904
  %101 = vst.msk [vmem:[%s5] sm:$0x3] %vm100, %v97
  // Predicated region
  $region22: #{clip_forward.25} parent=0 // pred_check
    _
  $region23: #{clip_forward.25} parent=0 // pred_check_branch
    %103 = sbr.rel (0) target = $region25
  $region24: #{clip_forward.25} parent=0 // pred_region
    _
  $region25: #{clip_forward.25} parent=0 // pred_fallthru
    _
  // Predicated region
  $region26: #{clip_forward.25} parent=0 // pred_check
    _
  $region27: #{clip_forward.25} parent=0 // pred_check_branch
    %105 = sbr.rel (0) target = $region29
  $region28: #{clip_forward.25} parent=0 // pred_region
    _
  $region29: #{clip_forward.25} parent=0 // pred_fallthru
    _

// kernel: clip_forward.21
$region0: #{clip_forward.21}
  #allocation0 [shape = 'u32[]', space=smem, size = 0x4, offset = 0x4, fixed_abs, tag = 'smem constant byte address 0x4 - core index']
  #allocation1 [shape = 'u32[72,128]{1,0:T(1,128)}', space=vmem, size = 0x9000, scoped, tag = 'internal scratch']
  %s0 = inlined_call_operand.vmem [shape: f32[16,32], index: 0, kind: input, shape index: {}]
  %s1 = inlined_call_operand.vmem [shape: f32[1,32], index: 1, kind: input, shape index: {}]
  %s2 = inlined_call_operand.vmem [shape: f32[1,32], index: 2, kind: input, shape index: {}]
  %s3 = inlined_call_operand.vmem [shape: bf16[32,128], index: 3, kind: input, shape index: {}]
  %s4 = inlined_call_operand.vmem [shape: f32[1,128], index: 4, kind: input, shape index: {}]
  %s5 = inlined_call_operand.vmem [shape: bf16[128,32], index: 5, kind: input, shape index: {}]
  %s6 = inlined_call_operand.vmem [shape: f32[1,32], index: 6, kind: input, shape index: {}]
  %s7 = inlined_call_operand.vmem [shape: f32[16,32], index: 7, kind: output, shape index: {}]
  %s8 = sld [smem:[#allocation0]]
  $region38: #{clip_forward.21} parent=0
    _
  %s10 = ssub.s32 1, %s8
  %s11 = scalar_select 0, %s10, %s8
  // Predicated region
  $region2: #{clip_forward.21} parent=0 // pred_check
    _
  $region3: #{clip_forward.21} parent=0 // pred_check_branch
    %13 = sbr.rel (0) target = $region5
  $region4: #{clip_forward.21} parent=0 // pred_region
    _
  $region5: #{clip_forward.21} parent=0 // pred_fallthru
    _
  // Predicated region
  $region6: #{clip_forward.21} parent=0 // pred_check
    _
  $region7: #{clip_forward.21} parent=0 // pred_check_branch
    %15 = sbr.rel (0) target = $region9
  $region8: #{clip_forward.21} parent=0 // pred_region
    _
  $region9: #{clip_forward.21} parent=0 // pred_fallthru
    _
  // Predicated region
  $region10: #{clip_forward.21} parent=0 // pred_check
    _
  $region11: #{clip_forward.21} parent=0 // pred_check_branch
    %17 = sbr.rel (0) target = $region13
  $region12: #{clip_forward.21} parent=0 // pred_region
    _
  $region13: #{clip_forward.21} parent=0 // pred_fallthru
    _
  // Predicated region
  $region14: #{clip_forward.21} parent=0 // pred_check
    _
  $region15: #{clip_forward.21} parent=0 // pred_check_branch
    %19 = sbr.rel (0) target = $region17
  $region16: #{clip_forward.21} parent=0 // pred_region
    _
  $region17: #{clip_forward.21} parent=0 // pred_fallthru
    _
  // Predicated region
  $region18: #{clip_forward.21} parent=0 // pred_check
    _
  $region19: #{clip_forward.21} parent=0 // pred_check_branch
    %21 = sbr.rel (0) target = $region21
  $region20: #{clip_forward.21} parent=0 // pred_region
    _
  $region21: #{clip_forward.21} parent=0 // pred_fallthru
    _
  // Predicated region
  $region22: #{clip_forward.21} parent=0 // pred_check
    _
  $region23: #{clip_forward.21} parent=0 // pred_check_branch
    %23 = sbr.rel (0) target = $region25
  $region24: #{clip_forward.21} parent=0 // pred_region
    _
  $region25: #{clip_forward.21} parent=0 // pred_fallthru
    _
  // Predicated region
  $region26: #{clip_forward.21} parent=0 // pred_check
    _
  $region27: #{clip_forward.21} parent=0 // pred_check_branch
    %25 = sbr.rel (0) target = $region29
  $region28: #{clip_forward.21} parent=0 // pred_region
    _
  $region29: #{clip_forward.21} parent=0 // pred_fallthru
    _
  %v27 = vld [vmem:[%s0] sm:$0xff]
  %v28 = vld [vmem:[%s0 + $0x8] sm:$0xff]
  %v29 = vld [vmem:[%s1] sm:$0x1]
  %v30 = vld [vmem:[%s2] sm:$0x1]
  %vm31 = vcmask 261120
  %v32 = vsel %vm31, %v27, 0.0
  %33 = vadd.xlane.f32.xlu0 %v32
  %v34 = vpop.xlane.xlu0 %33
  %v35 = vsel %vm31, %v28, 0.0
  %36 = vadd.xlane.f32.xlu0 %v35
  %v37 = vpop.xlane.xlu0 %36
  %v38 = vrcp.pop 32.0
  %v39 = vmul.f32 32.0, %v38
  %v40 = vsub.f32 1.0, %v39
  %v41 = vmul.f32 %v38, %v40
  %v42 = vadd.f32 %v38, %v41
  %vm43 = vweird.f32 %v38
  %v44 = vsel %vm43, %v38, %v42
  %v45 = vmul.f32 %v34, %v44
  %v46 = vmul.f32 %v37, %v44
  %v47 = vsub.f32 %v27, %v45
  %v48 = vsub.f32 %v28, %v46
  %v49 = vmul.f32 %v47, %v47
  %v50 = vmul.f32 %v48, %v48
  %v51 = vsel %vm31, %v49, 0.0
  %52 = vadd.xlane.f32.xlu0 %v51
  %v53 = vpop.xlane.xlu0 %52
  %v54 = vsel %vm31, %v50, 0.0
  %55 = vadd.xlane.f32.xlu0 %v54
  %v56 = vpop.xlane.xlu0 %55
  %v57 = vmul.f32 %v53, %v44
  %v58 = vmul.f32 %v56, %v44
  %v59 = vadd.f32 %v57, 1e-05
  %v60 = vadd.f32 %v58, 1e-05
  %v61 = vrsqrt.pop %v59
  %v62 = vmul.f32 %v61, %v59
  %v63 = vmul.f32 %v62, %v61
  %v64 = vmul.f32 0.5, %v63
  %v65 = vsub.f32 1.5, %v64
  %v66 = vmul.f32 %v61, %v65
  %vm67 = vweird.f32 %v59
  %vm68 = vweird.f32 %v61
  %vm69 = vmor %vm67, %vm68
  %v70 = vsel %vm69, %v61, %v66
  %v71 = vrsqrt.pop %v60
  %v72 = vmul.f32 %v71, %v60
  %v73 = vmul.f32 %v72, %v71
  %v74 = vmul.f32 0.5, %v73
  %v75 = vsub.f32 1.5, %v74
  %v76 = vmul.f32 %v71, %v75
  %vm77 = vweird.f32 %v60
  %vm78 = vweird.f32 %v71
  %vm79 = vmor %vm77, %vm78
  %v80 = vsel %vm79, %v71, %v76
  %v81 = vmul.f32 %v47, %v70
  %v82 = vmul.f32 %v48, %v80
  %v84 = vperm.slane %v29, 0
  %v86 = vmul.f32 %v81, %v84
  %v87 = vmul.f32 %v82, %v84
  %v89 = vperm.slane %v30, 0
  %v91 = vadd.f32 %v86, %v89
  %v92 = vadd.f32 %v87, %v89
  %v93 = vpack.c.bf16 %v92, %v91
  %v94 = vld [vmem:[%s6] sm:$0x1]
  %v96 = vperm.slane %v94, 0
  %v98 = vadd.f32 %v27, %v96
  %v99 = vadd.f32 %v28, %v96
  %100 = vst.msk [vmem:[%s7] sm:$0xff] %vm31, %v98
  %101 = vst.msk [vmem:[%s7 + $0x8] sm:$0xff] %vm31, %v99
  %v102 = vld [vmem:[%s3] sm:$0xf]
  %v103 = vld [vmem:[%s3 + $0x4] sm:$0xf]
  %v104 = vld [vmem:[%s3 + $0x8] sm:$0xf]
  %v105 = vld [vmem:[%s3 + $0xc] sm:$0xf]
  %v106 = vld [vmem:[%s4] sm:$0x1]
  %v108 = vperm.slane %v106, 0
  %v114 = vunpack.c.l.b16 %v102
  %v115 = vunpack.c.l.b16 %v103
  %v116 = vunpack.c.l.b16 %v104
  %v117 = vunpack.c.l.b16 %v105
  %v118 = vpack.c.b16 %v115, %v114
  %v119 = vpack.c.b16 %v117, %v116
  %v123 = vsel %vm31, %v93, 0
  %125 = vmatpush.bf16.msra.mxu0 0
  %126 = vmatpush.bf16.msra.mxu0 0
  %127 = vmatpush.bf16.msra.mxu0 0
  %128 = vmatpush.bf16.msra.mxu0 0
  %129 = vmatpush.bf16.msra.mxu0 0
  %130 = vmatpush.bf16.msra.mxu0 0
  %131 = vmatpush.bf16.msra.mxu0 %v119
  %132 = vmatpush.bf16.msra.mxu0 %v118
  %133 = vmatmul.bf16.gmra.mxu0 %v123
  %v134 = vpop.f32.mrf.mxu0
  %v135 = vadd.f32 %v108, %v134
  %v136 = vpop.f32.mrf.mxu0
  %v137 = vadd.f32 %v108, %v136
  %138 = vdwg.mxu0
  %v139 = vmul.f32 %v135, 1.702
  %v140 = vmul.f32 %v137, 1.702
  %v141 = vxor.u32 %v139, 2147483648
  %v142 = vxor.u32 %v140, 2147483648
  %v143 = vmul.f32 %v141, 1.442695
  %v144 = vpow.pop %v143
  %v145 = vmul.f32 %v142, 1.442695
  %v146 = vpow.pop %v145
  %v147 = vadd.f32 %v144, 1.0
  %v148 = vadd.f32 %v146, 1.0
  %v149 = vrcp.pop %v147
  %v150 = vmul.f32 %v147, %v149
  %v151 = vsub.f32 1.0, %v150
  %v152 = vmul.f32 %v149, %v151
  %v153 = vadd.f32 %v149, %v152
  %vm154 = vweird.f32 %v147
  %vm155 = vweird.f32 %v149
  %vm156 = vmor %vm154, %vm155
  %v157 = vsel %vm156, %v149, %v153
  %v158 = vand.u32 2147483647, %v147
  %vm159 = vcmp.eq.f32.partialorder %v158, 8.507059e+37
  %v160 = vand.u32 %v147, 2147483648
  %v161 = vor.u32 1.1754944e-38, %v160
  %v162 = vsel %vm159, %v161, %v157
  %v163 = vmul.f32 1.0, %v162
  %v164 = vrcp.pop %v148
  %v165 = vmul.f32 %v148, %v164
  %v166 = vsub.f32 1.0, %v165
  %v167 = vmul.f32 %v164, %v166
  %v168 = vadd.f32 %v164, %v167
  %vm169 = vweird.f32 %v148
  %vm170 = vweird.f32 %v164
  %vm171 = vmor %vm169, %vm170
  %v172 = vsel %vm171, %v164, %v168
  %v173 = vand.u32 2147483647, %v148
  %vm174 = vcmp.eq.f32.partialorder %v173, 8.507059e+37
  %v175 = vand.u32 %v148, 2147483648
  %v176 = vor.u32 1.1754944e-38, %v175
  %v177 = vsel %vm174, %v176, %v172
  %v178 = vmul.f32 1.0, %v177
  %v179 = vmul.f32 %v135, %v163
  %v180 = vmul.f32 %v137, %v178
  %v181 = vld [vmem:[%s7] sm:$0xff]
  %v182 = vld [vmem:[%s7 + $0x8] sm:$0xff]
  %v183 = vpack.c.bf16 %v180, %v179
  %v184 = vld [vmem:[%s5] sm:$0xf]
  %v185 = vld [vmem:[%s5 + $0x4] sm:$0xf]
  %v186 = vld [vmem:[%s5 + $0x8] sm:$0xf]
  %v187 = vld [vmem:[%s5 + $0xc] sm:$0xf]
  %v188 = vld [vmem:[%s5 + $0x10] sm:$0xf]
  %v189 = vld [vmem:[%s5 + $0x14] sm:$0xf]
  %v190 = vld [vmem:[%s5 + $0x18] sm:$0xf]
  %v191 = vld [vmem:[%s5 + $0x1c] sm:$0xf]
  %v192 = vld [vmem:[%s5 + $0x20] sm:$0xf]
  %v193 = vld [vmem:[%s5 + $0x24] sm:$0xf]
  %v194 = vld [vmem:[%s5 + $0x28] sm:$0xf]
  %v195 = vld [vmem:[%s5 + $0x2c] sm:$0xf]
  %v196 = vld [vmem:[%s5 + $0x30] sm:$0xf]
  %v197 = vld [vmem:[%s5 + $0x34] sm:$0xf]
  %v198 = vld [vmem:[%s5 + $0x38] sm:$0xf]
  %v199 = vld [vmem:[%s5 + $0x3c] sm:$0xf]
  %v216 = vunpack.c.l.b16 %v184
  %v217 = vunpack.c.l.b16 %v185
  %v218 = vunpack.c.l.b16 %v186
  %v219 = vunpack.c.l.b16 %v187
  %v220 = vunpack.c.l.b16 %v188
  %v221 = vunpack.c.l.b16 %v189
  %v222 = vunpack.c.l.b16 %v190
  %v223 = vunpack.c.l.b16 %v191
  %v224 = vunpack.c.l.b16 %v192
  %v225 = vunpack.c.l.b16 %v193
  %v226 = vunpack.c.l.b16 %v194
  %v227 = vunpack.c.l.b16 %v195
  %v228 = vunpack.c.l.b16 %v196
  %v229 = vunpack.c.l.b16 %v197
  %v230 = vunpack.c.l.b16 %v198
  %v231 = vunpack.c.l.b16 %v199
  %v232 = vpack.c.b16 %v217, %v216
  %v233 = vpack.c.b16 %v219, %v218
  %v234 = vpack.c.b16 %v221, %v220
  %v235 = vpack.c.b16 %v223, %v222
  %v236 = vpack.c.b16 %v225, %v224
  %v237 = vpack.c.b16 %v227, %v226
  %v238 = vpack.c.b16 %v229, %v228
  %v239 = vpack.c.b16 %v231, %v230
  %248 = vmatpush.bf16.msra.mxu0 %v239
  %249 = vmatpush.bf16.msra.mxu0 %v238
  %250 = vmatpush.bf16.msra.mxu0 %v237
  %251 = vmatpush.bf16.msra.mxu0 %v236
  %252 = vmatpush.bf16.msra.mxu0 %v235
  %253 = vmatpush.bf16.msra.mxu0 %v234
  %254 = vmatpush.bf16.msra.mxu0 %v233
  %255 = vmatpush.bf16.msra.mxu0 %v232
  %256 = vmatmul.bf16.gmra.mxu0 %v183
  %v257 = vpop.f32.mrf.mxu0
  %v258 = vadd.f32 0.0, %v257
  %v259 = vpop.f32.mrf.mxu0
  %v260 = vadd.f32 0.0, %v259
  %261 = vdwg.mxu0
  %v262 = vadd.f32 %v181, %v258
  %v263 = vadd.f32 %v182, %v260
  %264 = vst.msk [vmem:[%s7] sm:$0xff] %vm31, %v262
  %265 = vst.msk [vmem:[%s7 + $0x8] sm:$0xff] %vm31, %v263
  // Predicated region
  $region30: #{clip_forward.21} parent=0 // pred_check
    _
  $region31: #{clip_forward.21} parent=0 // pred_check_branch
    %267 = sbr.rel (0) target = $region33
  $region32: #{clip_forward.21} parent=0 // pred_region
    _
  $region33: #{clip_forward.21} parent=0 // pred_fallthru
    _
  // Predicated region
  $region34: #{clip_forward.21} parent=0 // pred_check
    _
  $region35: #{clip_forward.21} parent=0 // pred_check_branch
    %269 = sbr.rel (0) target = $region37
  $region36: #{clip_forward.21} parent=0 // pred_region
    _
  $region37: #{clip_forward.21} parent=0 // pred_fallthru
    _

// kernel: clip_forward.33
$region0: #{clip_forward.33}
  #allocation0 [shape = 'u32[]', space=smem, size = 0x4, offset = 0x4, fixed_abs, tag = 'smem constant byte address 0x4 - core index']
  #allocation1 [shape = 'u32[72,128]{1,0:T(1,128)}', space=vmem, size = 0x9000, scoped, tag = 'internal scratch']
  #allocation2 [shape = 'f32[2,2]{1,0:T(2,128)}', space=vmem, size = 0x400, scoped, tag = 'scratch operand']
  %s0 = inlined_call_operand.vmem [shape: f32[2,16], index: 0, kind: input, shape index: {}]
  %s1 = inlined_call_operand.vmem [shape: f32[16,2], index: 1, kind: input, shape index: {}]
  %s2 = inlined_call_operand.vmem [shape: f32[2,2], index: 2, kind: output, shape index: {}]
  %s3 = sld [smem:[#allocation0]]
  $region26: #{clip_forward.33} parent=0
    _
  %s5 = ssub.s32 1, %s3
  %s6 = scalar_select 0, %s5, %s3
  // Predicated region
  $region2: #{clip_forward.33} parent=0 // pred_check
    _
  $region3: #{clip_forward.33} parent=0 // pred_check_branch
    %8 = sbr.rel (0) target = $region5
  $region4: #{clip_forward.33} parent=0 // pred_region
    _
  $region5: #{clip_forward.33} parent=0 // pred_fallthru
    _
  // Predicated region
  $region6: #{clip_forward.33} parent=0 // pred_check
    _
  $region7: #{clip_forward.33} parent=0 // pred_check_branch
    %10 = sbr.rel (0) target = $region9
  $region8: #{clip_forward.33} parent=0 // pred_region
    _
  $region9: #{clip_forward.33} parent=0 // pred_fallthru
    _
  %p12 = scmp.eq.s32.totalorder 0, 0
  // Predicated region
  $region10: #{clip_forward.33} parent=0 // pred_check
    %p13 = pneg %p12
  $region11: #{clip_forward.33} parent=0 // pred_check_branch
    %15 = sbr.rel (%p13) target = $region13
  $region12: #{clip_forward.33} parent=0 // pred_region
    %vm16 = vcmask 9216
    %17 = vst.msk [vmem:[#allocation2] sm:$0x3] %vm16, 0.0
  $region13: #{clip_forward.33} parent=0 // pred_fallthru
    _
  %v18 = vld [vmem:[#allocation2] sm:$0x3]
  %v19 = vld [vmem:[%s0] sm:$0x3]
  %v20 = vpack.c.bf16 %v19, %v19
  %v21 = vld [vmem:[%s1] sm:$0xff]
  %v22 = vld [vmem:[%s1 + $0x8] sm:$0xff]
  %v23 = vpack.c.bf16 %v22, %v21
  %vm24 = vcmask 130048
  %v26 = vsel %vm24, %v20, 0
  %28 = vmatpush.bf16.msra.mxu0 0
  %29 = vmatpush.bf16.msra.mxu0 0
  %30 = vmatpush.bf16.msra.mxu0 0
  %31 = vmatpush.bf16.msra.mxu0 0
  %32 = vmatpush.bf16.msra.mxu0 0
  %33 = vmatpush.bf16.msra.mxu0 0
  %34 = vmatpush.bf16.msra.mxu0 0
  %35 = vmatpush.bf16.msra.mxu0 %v23
  %36 = vmatmul.bf16.gmra.mxu0 %v26
  %v37 = vpop.f32.mrf.mxu0
  %v38 = vadd.f32 0.0, %v37
  %v39 = vpop.f32.mrf.mxu0
  %40 = vdwg.mxu0
  %v41 = vadd.f32 %v18, %v38
  %vm42 = vcmask 9216
  %43 = vst.msk [vmem:[#allocation2] sm:$0x3] %vm42, %v41
  // Predicated region
  $region14: #{clip_forward.33} parent=0 // pred_check
    %p44 = pneg %p12
  $region15: #{clip_forward.33} parent=0 // pred_check_branch
    %46 = sbr.rel (%p44) target = $region17
  $region16: #{clip_forward.33} parent=0 // pred_region
    %v47 = vld [vmem:[#allocation2] sm:$0x3]
    %48 = vst.msk [vmem:[%s2] sm:$0x3] %vm42, %v47
  $region17: #{clip_forward.33} parent=0 // pred_fallthru
    _
  // Predicated region
  $region18: #{clip_forward.33} parent=0 // pred_check
    _
  $region19: #{clip_forward.33} parent=0 // pred_check_branch
    %50 = sbr.rel (0) target = $region21
  $region20: #{clip_forward.33} parent=0 // pred_region
    _
  $region21: #{clip_forward.33} parent=0 // pred_fallthru
    _
  // Predicated region
  $region22: #{clip_forward.33} parent=0 // pred_check
    _
  $region23: #{clip_forward.33} parent=0 // pred_check_branch
    %52 = sbr.rel (0) target = $region25
  $region24: #{clip_forward.33} parent=0 // pred_region
    _
  $region25: #{clip_forward.33} parent=0 // pred_fallthru
    _

// kernel: clip_forward.27
$region0: #{clip_forward.27}
  #allocation0 [shape = 'u32[]', space=smem, size = 0x4, offset = 0x4, fixed_abs, tag = 'smem constant byte address 0x4 - core index']
  #allocation1 [shape = 'u32[72,128]{1,0:T(1,128)}', space=vmem, size = 0x9000, scoped, tag = 'internal scratch']
  %s0 = inlined_call_operand.vmem [shape: bf16[2,8,96], index: 0, kind: input, shape index: {}]
  %s1 = inlined_call_operand.vmem [shape: f32[2,8,32], index: 1, kind: input, shape index: {}]
  %s2 = inlined_call_operand.vmem [shape: bf16[32,32], index: 2, kind: input, shape index: {}]
  %s3 = inlined_call_operand.vmem [shape: f32[1,32], index: 3, kind: input, shape index: {}]
  %s4 = inlined_call_operand.vmem [shape: f32[2,8,32], index: 4, kind: output, shape index: {}]
  %s5 = sld [smem:[#allocation0]]
  $region49: #{clip_forward.27} parent=0
    _
  %s7 = ssub.s32 1, %s5
  %s8 = scalar_select 0, %s7, %s5
  loop: start=0, step=1, limit=4
  $region2: #{clip_forward.27} parent=0 // loop_pre_header
    _
  $region3: #{clip_forward.27} parent=0 // loop_header
    %s10 = sphi 0, %s14
    %p11 = scmp.ge.s32.totalorder %s10, 4
    %s20 = sphi 0, %s22
    %s23 = sphi 0, %s20
    %s24 = sphi 0, %s23
    %s40 = sphi 0, %s24
    %s46 = sphi 0, %s48
    %s49 = sphi 0, %s46
    %s50 = sphi 0, %s49
    %s66 = sphi 0, %s50
    %s70 = sphi 0, %s70
    %s72 = sphi 0, %s70
    %s73 = sphi 0, %s72
    %s87 = sphi 0, %s73
    %s91 = sphi 0, %s91
    %s93 = sphi 0, %s91
    %s94 = sphi 0, %s93
    %s108 = sphi 0, %s94
    %s114 = sphi 0, %s116
    %s117 = sphi 0, %s114
    %s118 = sphi 0, %s117
    %s134 = sphi 0, %s118
  $region4: #{clip_forward.27} parent=0 // loop_header_branch
    %13 = sbr.rel (%p11) target = $region8
  $region5: #{clip_forward.27} parent=0 // loop_body
    %s15 = ssub.s32 %s10, 1
    %s16 = ssub.s32 %s10, 2
    %s17 = sadd.s32 %s10, 1
    %s18 = ssub.s32 %s10, %s17
    %p19 = scmp.eq.s32.totalorder %s18, 0
    %s21 = sadd.s32 %s20, 1
    %s22 = scalar_select %p19, %s20, %s21
    %p25 = pneg %p19
    %p26 = scmp.eq.s32.totalorder %s10, 1
    %p27 = por %p25, %p26
    %p28 = scmp.ne.s32.totalorder %s20, %s23
    %p29 = scmp.eq.s32.totalorder %s10, 0
    %p30 = por %p28, %p29
    %p31 = scmp.ne.s32.totalorder %s20, %s23
    %p32 = scmp.eq.s32.totalorder %s15, 1
    %p33 = por %p31, %p32
    %p34 = scmp.ne.s32.totalorder %s23, %s24
    %p35 = scmp.eq.s32.totalorder %s15, 0
    %p36 = por %p34, %p35
    %p37 = scmp.ne.s32.totalorder %s23, %s24
    %p38 = scmp.eq.s32.totalorder %s16, 1
    %p39 = por %p37, %p38
    %p41 = scmp.ne.s32.totalorder %s24, %s40
    %p42 = scmp.eq.s32.totalorder %s16, 0
    %p43 = por %p41, %p42
    %s44 = ssub.s32 %s10, %s17
    %p45 = scmp.eq.s32.totalorder %s44, 0
    %s47 = sadd.s32 %s46, 1
    %s48 = scalar_select %p45, %s46, %s47
    %p51 = pneg %p45
    %p52 = scmp.eq.s32.totalorder %s10, 1
    %p53 = por %p51, %p52
    %p54 = scmp.ne.s32.totalorder %s46, %s49
    %p55 = scmp.eq.s32.totalorder %s10, 0
    %p56 = por %p54, %p55
    %p57 = scmp.ne.s32.totalorder %s46, %s49
    %p58 = scmp.eq.s32.totalorder %s15, 1
    %p59 = por %p57, %p58
    %p60 = scmp.ne.s32.totalorder %s49, %s50
    %p61 = scmp.eq.s32.totalorder %s15, 0
    %p62 = por %p60, %p61
    %p63 = scmp.ne.s32.totalorder %s49, %s50
    %p64 = scmp.eq.s32.totalorder %s16, 1
    %p65 = por %p63, %p64
    %p67 = scmp.ne.s32.totalorder %s50, %s66
    %p68 = scmp.eq.s32.totalorder %s16, 0
    %p69 = por %p67, %p68
    %s71 = sadd.s32 %s70, 1
    %p74 = scmp.eq.s32.totalorder %s10, 1
    %p75 = scmp.ne.s32.totalorder %s70, %s72
    %p76 = scmp.eq.s32.totalorder %s10, 0
    %p77 = por %p75, %p76
    %p78 = scmp.ne.s32.totalorder %s70, %s72
    %p79 = scmp.eq.s32.totalorder %s15, 1
    %p80 = por %p78, %p79
    %p81 = scmp.ne.s32.totalorder %s72, %s73
    %p82 = scmp.eq.s32.totalorder %s15, 0
    %p83 = por %p81, %p82
    %p84 = scmp.ne.s32.totalorder %s72, %s73
    %p85 = scmp.eq.s32.totalorder %s16, 1
    %p86 = por %p84, %p85
    %p88 = scmp.ne.s32.totalorder %s73, %s87
    %p89 = scmp.eq.s32.totalorder %s16, 0
    %p90 = por %p88, %p89
    %s92 = sadd.s32 %s91, 1
    %p95 = scmp.eq.s32.totalorder %s10, 1
    %p96 = scmp.ne.s32.totalorder %s91, %s93
    %p97 = scmp.eq.s32.totalorder %s10, 0
    %p98 = por %p96, %p97
    %p99 = scmp.ne.s32.totalorder %s91, %s93
    %p100 = scmp.eq.s32.totalorder %s15, 1
    %p101 = por %p99, %p100
    %p102 = scmp.ne.s32.totalorder %s93, %s94
    %p103 = scmp.eq.s32.totalorder %s15, 0
    %p104 = por %p102, %p103
    %p105 = scmp.ne.s32.totalorder %s93, %s94
    %p106 = scmp.eq.s32.totalorder %s16, 1
    %p107 = por %p105, %p106
    %p109 = scmp.ne.s32.totalorder %s94, %s108
    %p110 = scmp.eq.s32.totalorder %s16, 0
    %p111 = por %p109, %p110
    %s112 = ssub.s32 %s10, %s17
    %p113 = scmp.eq.s32.totalorder %s112, 0
    %s115 = sadd.s32 %s114, 1
    %s116 = scalar_select %p113, %s114, %s115
    %p119 = pneg %p113
    %p120 = scmp.eq.s32.totalorder %s10, 1
    %p121 = por %p119, %p120
    %p122 = scmp.ne.s32.totalorder %s114, %s117
    %p123 = scmp.eq.s32.totalorder %s10, 0
    %p124 = por %p122, %p123
    %p125 = scmp.ne.s32.totalorder %s114, %s117
    %p126 = scmp.eq.s32.totalorder %s15, 1
    %p127 = por %p125, %p126
    %p128 = scmp.ne.s32.totalorder %s117, %s118
    %p129 = scmp.eq.s32.totalorder %s15, 0
    %p130 = por %p128, %p129
    %p131 = scmp.ne.s32.totalorder %s117, %s118
    %p132 = scmp.eq.s32.totalorder %s16, 1
    %p133 = por %p131, %p132
    %p135 = scmp.ne.s32.totalorder %s118, %s134
    %p136 = scmp.eq.s32.totalorder %s16, 0
    %p137 = por %p135, %p136
    %p138 = scmp.le.s32.totalorder 1, %s10
    %p139 = scmp.lt.s32.totalorder %s10, 3
    %p140 = pnand %p138, %p139
    %p141 = pneg %p140
    // Predicated region
    $region9: #{clip_forward.27} parent=5 // pred_check
      _
    $region10: #{clip_forward.27} parent=5 // pred_check_branch
      %143 = sbr.rel (%p140) target = $region12
    $region11: #{clip_forward.27} parent=5 // pred_region
      %s144 = ssub.s32 %s10, 1
      // Predicated region
      $region13: #{clip_forward.27} parent=11 // pred_check
        %p145 = pneg %p83
      $region14: #{clip_forward.27} parent=11 // pred_check_branch
        %147 = sbr.rel (%p145) target = $region16
      $region15: #{clip_forward.27} parent=11 // pred_region
        _
      $region16: #{clip_forward.27} parent=11 // pred_fallthru
        _
      // Predicated region
      $region17: #{clip_forward.27} parent=11 // pred_check
        %p148 = pneg %p104
      $region18: #{clip_forward.27} parent=11 // pred_check_branch
        %150 = sbr.rel (%p148) target = $region20
      $region19: #{clip_forward.27} parent=11 // pred_region
        _
      $region20: #{clip_forward.27} parent=11 // pred_fallthru
        _
    $region12: #{clip_forward.27} parent=5 // pred_fallthru
      _
    %p151 = scmp.lt.s32.totalorder %s10, 2
    // Predicated region
    $region21: #{clip_forward.27} parent=5 // pred_check
      %p152 = pneg %p151
    $region22: #{clip_forward.27} parent=5 // pred_check_branch
      %154 = sbr.rel (%p152) target = $region24
    $region23: #{clip_forward.27} parent=5 // pred_region
      // Predicated region
      $region25: #{clip_forward.27} parent=23 // pred_check
        %p155 = pneg %p30
      $region26: #{clip_forward.27} parent=23 // pred_check_branch
        %157 = sbr.rel (%p155) target = $region28
      $region27: #{clip_forward.27} parent=23 // pred_region
        %p158 = scmp.lt.s32.totalorder %s10, 1
        %s159 = scalar_select %p158, %s10, 1
        %s160 = smul.addr %s159, 4
        %s161 = scalar_lea.vmem %s0, %s160
      $region28: #{clip_forward.27} parent=23 // pred_fallthru
        _
      // Predicated region
      $region29: #{clip_forward.27} parent=23 // pred_check
        %p162 = pneg %p56
      $region30: #{clip_forward.27} parent=23 // pred_check_branch
        %164 = sbr.rel (%p162) target = $region32
      $region31: #{clip_forward.27} parent=23 // pred_region
        %p165 = scmp.lt.s32.totalorder %s10, 1
        %s166 = scalar_select %p165, %s10, 1
        %s167 = smul.addr %s166, 8
        %s168 = scalar_lea.vmem %s1, %s167
      $region32: #{clip_forward.27} parent=23 // pred_fallthru
        _
    $region24: #{clip_forward.27} parent=5 // pred_fallthru
      _
    %p169 = scmp.le.s32.totalorder 1, %s10
    %p170 = scmp.lt.s32.totalorder %s10, 3
    %p171 = pnand %p169, %p170
    %p172 = pneg %p171
    // Predicated region
    $region33: #{clip_forward.27} parent=5 // pred_check
      _
    $region34: #{clip_forward.27} parent=5 // pred_check_branch
      %174 = sbr.rel (%p171) target = $region36
    $region35: #{clip_forward.27} parent=5 // pred_region
      %s175 = ssub.s32 %s10, 1
      %p176 = scmp.lt.s32.totalorder %s15, 1
      %s177 = scalar_select %p176, %s15, 1
      %s178 = smul.addr %s177, 4
      %s179 = scalar_lea.vmem %s0, %s178
      %p180 = pneg %p36
      %p181 = pneg %p33
      %p182 = scmp.lt.s32.totalorder %s15, 1
      %s183 = scalar_select %p182, %s15, 1
      %s184 = smul.addr %s183, 8
      %s185 = scalar_lea.vmem %s1, %s184
      %p186 = pneg %p62
      %p187 = pneg %p59
      %p188 = pneg %p83
      %p189 = pneg %p80
      %p190 = pneg %p104
      %p191 = pneg %p101
      %p192 = pneg %p130
      %p193 = pneg %p127
      %p194 = scmp.lt.s32.totalorder %s15, 1
      %s195 = scalar_select %p194, %s15, 1
      %s196 = smul.addr %s195, 8
      %s197 = scalar_lea.vmem %s4, %s196
      %p198 = scmp.lt.s32.totalorder %s15, 1
      %s199 = scalar_select %p198, %s15, 1
      %s200 = smul.addr %s199, 4
      %s201 = scalar_lea.vmem %s0, %s200
      %p202 = scmp.lt.s32.totalorder %s15, 1
      %s203 = scalar_select %p202, %s15, 1
      %s204 = smul.addr %s203, 8
      %s205 = scalar_lea.vmem %s1, %s204
      %p206 = scmp.lt.s32.totalorder %s15, 1
      %s207 = scalar_select %p206, %s15, 1
      %s208 = smul.addr %s207, 8
      %s209 = scalar_lea.vmem %s4, %s208
      %v211 = vlaneseq
      %v212 = vand.u32 %v211, 127
      %vm213 = vcmp.ge.s32.totalorder %v212, 8
      %v214 = vlaneseq
      %v215 = vshrl.u32 %v214, 7
      %vm216 = vcmp.gt.s32.totalorder %v212, %v215
      %vm217 = vmor %vm213, %vm216
      %v218 = vsel %vm217, -1e+30, 0.0
      %v219 = vld [vmem:[%s205] sm:$0xff]
      %v220 = vld [vmem:[%s3] sm:$0x1]
      %v222 = vperm.slane %v220, 0
      %v224 = vadd.f32 %v219, %v222
      %vm225 = vcmask 261120
      %226 = vst.msk [vmem:[%s209] sm:$0xff] %vm225, %v224
      %v227 = vld [vmem:[%s201] sm:$0xf]
      %v229 = vunpack.c.l.b16 %v227
      %v230 = vpack.c.b16 %v229, %v229
      %231 = vrot.lane.b32.xlu0 %v230, 96
      %v232 = vpop.permute.xlu0 %231
      %vm233 = vcmask 64512
      %v235 = vsel %vm233, %v227, 0
      %v238 = vsel %vm233, %v232, 0
      %240 = vmatpush.bf16.xpose.msra.mxu0 0
      %241 = vmatpush.bf16.xpose.msra.mxu0 0
      %242 = vmatpush.bf16.xpose.msra.mxu0 0
      %243 = vmatpush.bf16.xpose.msra.mxu0 0
      %244 = vmatpush.bf16.xpose.msra.mxu0 0
      %245 = vmatpush.bf16.xpose.msra.mxu0 0
      %246 = vmatpush.bf16.xpose.msra.mxu0 0
      %247 = vmatpush.bf16.xpose.msra.mxu0 %v238
      %248 = vmatmul.bf16.gmra.mxu0 %v235
      %v249 = vpop.f32.mrf.mxu0
      %v250 = vadd.f32 0.0, %v249
      %v251 = vpop.f32.mrf.mxu0
      %252 = vdwg.mxu0
      %v253 = vmul.f32 %v250, 0.35355338
      %v254 = vadd.f32 %v253, %v218
      %v255 = vsel %vm233, %v254, -inf
      %256 = vmax.xlane.f32.xlu0 %v255
      %v257 = vpop.xlane.xlu0 %256
      %v258 = vsub.f32 %v254, %v257
      %v259 = vmul.f32 %v258, 1.442695
      %v260 = vpow.pop %v259
      %v261 = vsel %vm233, %v260, 0.0
      %262 = vadd.xlane.f32.xlu0 %v261
      %v263 = vpop.xlane.xlu0 %262
      %v264 = vrcp.pop %v263
      %v265 = vmul.f32 %v260, %v264
      %v266 = vpack.c.bf16 %v265, %v265
      %267 = vrot.lane.b32.xlu0 %v230, 64
      %v268 = vpop.permute.xlu0 %267
      %v270 = vsel %vm233, %v266, 0
      %vm272 = vcmask 1043456
      %v274 = vsel %vm272, %v268, 0
      %276 = vmatpush.bf16.msra.mxu0 0
      %277 = vmatpush.bf16.msra.mxu0 0
      %278 = vmatpush.bf16.msra.mxu0 0
      %279 = vmatpush.bf16.msra.mxu0 0
      %280 = vmatpush.bf16.msra.mxu0 0
      %281 = vmatpush.bf16.msra.mxu0 0
      %282 = vmatpush.bf16.msra.mxu0 0
      %283 = vmatpush.bf16.msra.mxu0 %v274
      %284 = vmatmul.bf16.gmra.mxu0 %v270
      %v285 = vpop.f32.mrf.mxu0
      %v286 = vadd.f32 0.0, %v285
      %v287 = vpop.f32.mrf.mxu0
      %288 = vdwg.mxu0
      %v289 = vld [vmem:[%s209] sm:$0xff]
      %v290 = vpack.c.bf16 %v286, %v286
      %v291 = vld [vmem:[%s2] sm:$0xf]
      %v293 = vsel %vm233, %v290, 0
      %v296 = vsel %vm272, %v291, 0
      %298 = vmatpush.bf16.msra.mxu0 0
      %299 = vmatpush.bf16.msra.mxu0 0
      %300 = vmatpush.bf16.msra.mxu0 0
      %301 = vmatpush.bf16.msra.mxu0 0
      %302 = vmatpush.bf16.msra.mxu0 0
      %303 = vmatpush.bf16.msra.mxu0 0
      %304 = vmatpush.bf16.msra.mxu0 0
      %305 = vmatpush.bf16.msra.mxu0 %v296
      %306 = vmatmul.bf16.gmra.mxu0 %v293
      %v307 = vpop.f32.mrf.mxu0
      %v308 = vadd.f32 0.0, %v307
      %v309 = vpop.f32.mrf.mxu0
      %310 = vdwg.mxu0
      %v311 = vadd.f32 %v289, %v308
      %312 = vst.msk [vmem:[%s209] sm:$0xff] %vm225, %v311
      %v313 = vld [vmem:[%s201] sm:$0xf]
      %v315 = vunpack.c.l.b16 %v313
      %v316 = vpack.c.b16 %v315, %v315
      %317 = vrot.lane.b32.xlu0 %v316, 120
      %v318 = vpop.permute.xlu0 %317
      %319 = vrot.lane.b32.xlu0 %v316, 88
      %v320 = vpop.permute.xlu0 %319
      %v322 = vsel %vm233, %v318, 0
      %v325 = vsel %vm233, %v320, 0
      %327 = vmatpush.bf16.xpose.msra.mxu0 0
      %328 = vmatpush.bf16.xpose.msra.mxu0 0
      %329 = vmatpush.bf16.xpose.msra.mxu0 0
      %330 = vmatpush.bf16.xpose.msra.mxu0 0
      %331 = vmatpush.bf16.xpose.msra.mxu0 0
      %332 = vmatpush.bf16.xpose.msra.mxu0 0
      %333 = vmatpush.bf16.xpose.msra.mxu0 0
      %334 = vmatpush.bf16.xpose.msra.mxu0 %v325
      %335 = vmatmul.bf16.gmra.mxu0 %v322
      %v336 = vpop.f32.mrf.mxu0
      %v337 = vadd.f32 0.0, %v336
      %v338 = vpop.f32.mrf.mxu0
      %339 = vdwg.mxu0
      %v340 = vmul.f32 %v337, 0.35355338
      %v341 = vadd.f32 %v340, %v218
      %v342 = vsel %vm233, %v341, -inf
      %343 = vmax.xlane.f32.xlu0 %v342
      %v344 = vpop.xlane.xlu0 %343
      %v345 = vsub.f32 %v341, %v344
      %v346 = vmul.f32 %v345, 1.442695
      %v347 = vpow.pop %v346
      %v348 = vsel %vm233, %v347, 0.0
      %349 = vadd.xlane.f32.xlu0 %v348
      %v350 = vpop.xlane.xlu0 %349
      %v351 = vrcp.pop %v350
      %v352 = vmul.f32 %v347, %v351
      %v353 = vpack.c.bf16 %v352, %v352
      %354 = vrot.lane.b32.xlu0 %v316, 56
      %v355 = vpop.permute.xlu0 %354
      %v357 = vsel %vm233, %v353, 0
      %v360 = vsel %vm272, %v355, 0
      %362 = vmatpush.bf16.msra.mxu0 0
      %363 = vmatpush.bf16.msra.mxu0 0
      %364 = vmatpush.bf16.msra.mxu0 0
      %365 = vmatpush.bf16.msra.mxu0 0
      %366 = vmatpush.bf16.msra.mxu0 0
      %367 = vmatpush.bf16.msra.mxu0 0
      %368 = vmatpush.bf16.msra.mxu0 0
      %369 = vmatpush.bf16.msra.mxu0 %v360
      %370 = vmatmul.bf16.gmra.mxu0 %v357
      %v371 = vpop.f32.mrf.mxu0
      %v372 = vadd.f32 0.0, %v371
      %v373 = vpop.f32.mrf.mxu0
      %374 = vdwg.mxu0
      %v375 = vld [vmem:[%s209] sm:$0xff]
      %v376 = vpack.c.bf16 %v372, %v372
      %v377 = vld [vmem:[%s2 + $0x4] sm:$0xf]
      %v379 = vsel %vm233, %v376, 0
      %v382 = vsel %vm272, %v377, 0
      %384 = vmatpush.bf16.msra.mxu0 0
      %385 = vmatpush.bf16.msra.mxu0 0
      %386 = vmatpush.bf16.msra.mxu0 0
      %387 = vmatpush.bf16.msra.mxu0 0
      %388 = vmatpush.bf16.msra.mxu0 0
      %389 = vmatpush.bf16.msra.mxu0 0
      %390 = vmatpush.bf16.msra.mxu0 0
      %391 = vmatpush.bf16.msra.mxu0 %v382
      %392 = vmatmul.bf16.gmra.mxu0 %v379
      %v393 = vpop.f32.mrf.mxu0
      %v394 = vadd.f32 0.0, %v393
      %v395 = vpop.f32.mrf.mxu0
      %396 = vdwg.mxu0
      %v397 = vadd.f32 %v375, %v394
      %398 = vst.msk [vmem:[%s209] sm:$0xff] %vm225, %v397
      %v399 = vld [vmem:[%s201] sm:$0xf]
      %v401 = vunpack.c.l.b16 %v399
      %v402 = vpack.c.b16 %v401, %v401
      %403 = vrot.lane.b32.xlu0 %v402, 112
      %v404 = vpop.permute.xlu0 %403
      %405 = vrot.lane.b32.xlu0 %v402, 80
      %v406 = vpop.permute.xlu0 %405
      %v408 = vsel %vm233, %v404, 0
      %v411 = vsel %vm233, %v406, 0
      %413 = vmatpush.bf16.xpose.msra.mxu0 0
      %414 = vmatpush.bf16.xpose.msra.mxu0 0
      %415 = vmatpush.bf16.xpose.msra.mxu0 0
      %416 = vmatpush.bf16.xpose.msra.mxu0 0
      %417 = vmatpush.bf16.xpose.msra.mxu0 0
      %418 = vmatpush.bf16.xpose.msra.mxu0 0
      %419 = vmatpush.bf16.xpose.msra.mxu0 0
      %420 = vmatpush.bf16.xpose.msra.mxu0 %v411
      %421 = vmatmul.bf16.gmra.mxu0 %v408
      %v422 = vpop.f32.mrf.mxu0
      %v423 = vadd.f32 0.0, %v422
      %v424 = vpop.f32.mrf.mxu0
      %425 = vdwg.mxu0
      %v426 = vmul.f32 %v423, 0.35355338
      %v427 = vadd.f32 %v426, %v218
      %v428 = vsel %vm233, %v427, -inf
      %429 = vmax.xlane.f32.xlu0 %v428
      %v430 = vpop.xlane.xlu0 %429
      %v431 = vsub.f32 %v427, %v430
      %v432 = vmul.f32 %v431, 1.442695
      %v433 = vpow.pop %v432
      %v434 = vsel %vm233, %v433, 0.0
      %435 = vadd.xlane.f32.xlu0 %v434
      %v436 = vpop.xlane.xlu0 %435
      %v437 = vrcp.pop %v436
      %v438 = vmul.f32 %v433, %v437
      %v439 = vpack.c.bf16 %v438, %v438
      %440 = vrot.lane.b32.xlu0 %v402, 48
      %v441 = vpop.permute.xlu0 %440
      %v443 = vsel %vm233, %v439, 0
      %v446 = vsel %vm272, %v441, 0
      %448 = vmatpush.bf16.msra.mxu0 0
      %449 = vmatpush.bf16.msra.mxu0 0
      %450 = vmatpush.bf16.msra.mxu0 0
      %451 = vmatpush.bf16.msra.mxu0 0
      %452 = vmatpush.bf16.msra.mxu0 0
      %453 = vmatpush.bf16.msra.mxu0 0
      %454 = vmatpush.bf16.msra.mxu0 0
      %455 = vmatpush.bf16.msra.mxu0 %v446
      %456 = vmatmul.bf16.gmra.mxu0 %v443
      %v457 = vpop.f32.mrf.mxu0
      %v458 = vadd.f32 0.0, %v457
      %v459 = vpop.f32.mrf.mxu0
      %460 = vdwg.mxu0
      %v461 = vld [vmem:[%s209] sm:$0xff]
      %v462 = vpack.c.bf16 %v458, %v458
      %v463 = vld [vmem:[%s2 + $0x8] sm:$0xf]
      %v465 = vsel %vm233, %v462, 0
      %v468 = vsel %vm272, %v463, 0
      %470 = vmatpush.bf16.msra.mxu0 0
      %471 = vmatpush.bf16.msra.mxu0 0
      %472 = vmatpush.bf16.msra.mxu0 0
      %473 = vmatpush.bf16.msra.mxu0 0
      %474 = vmatpush.bf16.msra.mxu0 0
      %475 = vmatpush.bf16.msra.mxu0 0
      %476 = vmatpush.bf16.msra.mxu0 0
      %477 = vmatpush.bf16.msra.mxu0 %v468
      %478 = vmatmul.bf16.gmra.mxu0 %v465
      %v479 = vpop.f32.mrf.mxu0
      %v480 = vadd.f32 0.0, %v479
      %v481 = vpop.f32.mrf.mxu0
      %482 = vdwg.mxu0
      %v483 = vadd.f32 %v461, %v480
      %484 = vst.msk [vmem:[%s209] sm:$0xff] %vm225, %v483
      %v485 = vld [vmem:[%s201] sm:$0xf]
      %v487 = vunpack.c.l.b16 %v485
      %v488 = vpack.c.b16 %v487, %v487
      %489 = vrot.lane.b32.xlu0 %v488, 104
      %v490 = vpop.permute.xlu0 %489
      %491 = vrot.lane.b32.xlu0 %v488, 72
      %v492 = vpop.permute.xlu0 %491
      %v494 = vsel %vm233, %v490, 0
      %v497 = vsel %vm233, %v492, 0
      %499 = vmatpush.bf16.xpose.msra.mxu0 0
      %500 = vmatpush.bf16.xpose.msra.mxu0 0
      %501 = vmatpush.bf16.xpose.msra.mxu0 0
      %502 = vmatpush.bf16.xpose.msra.mxu0 0
      %503 = vmatpush.bf16.xpose.msra.mxu0 0
      %504 = vmatpush.bf16.xpose.msra.mxu0 0
      %505 = vmatpush.bf16.xpose.msra.mxu0 0
      %506 = vmatpush.bf16.xpose.msra.mxu0 %v497
      %507 = vmatmul.bf16.gmra.mxu0 %v494
      %v508 = vpop.f32.mrf.mxu0
      %v509 = vadd.f32 0.0, %v508
      %v510 = vpop.f32.mrf.mxu0
      %511 = vdwg.mxu0
      %v512 = vmul.f32 %v509, 0.35355338
      %v513 = vadd.f32 %v512, %v218
      %v514 = vsel %vm233, %v513, -inf
      %515 = vmax.xlane.f32.xlu0 %v514
      %v516 = vpop.xlane.xlu0 %515
      %v517 = vsub.f32 %v513, %v516
      %v518 = vmul.f32 %v517, 1.442695
      %v519 = vpow.pop %v518
      %v520 = vsel %vm233, %v519, 0.0
      %521 = vadd.xlane.f32.xlu0 %v520
      %v522 = vpop.xlane.xlu0 %521
      %v523 = vrcp.pop %v522
      %v524 = vmul.f32 %v519, %v523
      %v525 = vpack.c.bf16 %v524, %v524
      %526 = vrot.lane.b32.xlu0 %v488, 40
      %v527 = vpop.permute.xlu0 %526
      %v529 = vsel %vm233, %v525, 0
      %v532 = vsel %vm272, %v527, 0
      %534 = vmatpush.bf16.msra.mxu0 0
      %535 = vmatpush.bf16.msra.mxu0 0
      %536 = vmatpush.bf16.msra.mxu0 0
      %537 = vmatpush.bf16.msra.mxu0 0
      %538 = vmatpush.bf16.msra.mxu0 0
      %539 = vmatpush.bf16.msra.mxu0 0
      %540 = vmatpush.bf16.msra.mxu0 0
      %541 = vmatpush.bf16.msra.mxu0 %v532
      %542 = vmatmul.bf16.gmra.mxu0 %v529
      %v543 = vpop.f32.mrf.mxu0
      %v544 = vadd.f32 0.0, %v543
      %v545 = vpop.f32.mrf.mxu0
      %546 = vdwg.mxu0
      %v547 = vld [vmem:[%s209] sm:$0xff]
      %v548 = vpack.c.bf16 %v544, %v544
      %v549 = vld [vmem:[%s2 + $0xc] sm:$0xf]
      %v551 = vsel %vm233, %v548, 0
      %v554 = vsel %vm272, %v549, 0
      %556 = vmatpush.bf16.msra.mxu0 0
      %557 = vmatpush.bf16.msra.mxu0 0
      %558 = vmatpush.bf16.msra.mxu0 0
      %559 = vmatpush.bf16.msra.mxu0 0
      %560 = vmatpush.bf16.msra.mxu0 0
      %561 = vmatpush.bf16.msra.mxu0 0
      %562 = vmatpush.bf16.msra.mxu0 0
      %563 = vmatpush.bf16.msra.mxu0 %v554
      %564 = vmatmul.bf16.gmra.mxu0 %v551
      %v565 = vpop.f32.mrf.mxu0
      %v566 = vadd.f32 0.0, %v565
      %v567 = vpop.f32.mrf.mxu0
      %568 = vdwg.mxu0
      %v569 = vadd.f32 %v547, %v566
      %570 = vst.msk [vmem:[%s209] sm:$0xff] %vm225, %v569
      %p571 = scmp.lt.s32.totalorder %s15, 1
      %s572 = scalar_select %p571, %s15, 1
      %s573 = smul.addr %s572, 8
      %s574 = scalar_lea.vmem %s4, %s573
      // Predicated region
      $region37: #{clip_forward.27} parent=35 // pred_check
        %p575 = pneg %p127
      $region38: #{clip_forward.27} parent=35 // pred_check_branch
        %577 = sbr.rel (%p575) target = $region40
      $region39: #{clip_forward.27} parent=35 // pred_region
        _
      $region40: #{clip_forward.27} parent=35 // pred_fallthru
        _
    $region36: #{clip_forward.27} parent=5 // pred_fallthru
      _
    %p578 = scmp.le.s32.totalorder 2, %s10
    // Predicated region
    $region41: #{clip_forward.27} parent=5 // pred_check
      %p579 = pneg %p578
    $region42: #{clip_forward.27} parent=5 // pred_check_branch
      %581 = sbr.rel (%p579) target = $region44
    $region43: #{clip_forward.27} parent=5 // pred_region
      %s582 = ssub.s32 %s10, 2
      // Predicated region
      $region45: #{clip_forward.27} parent=43 // pred_check
        %p583 = pneg %p133
      $region46: #{clip_forward.27} parent=43 // pred_check_branch
        %585 = sbr.rel (%p583) target = $region48
      $region47: #{clip_forward.27} parent=43 // pred_region
        %p586 = scmp.lt.s32.totalorder %s16, 1
        %s587 = scalar_select %p586, %s16, 1
        %s588 = smul.addr %s587, 8
        %s589 = scalar_lea.vmem %s4, %s588
      $region48: #{clip_forward.27} parent=43 // pred_fallthru
        _
    $region44: #{clip_forward.27} parent=5 // pred_fallthru
      _
  $region6: #{clip_forward.27} parent=0 // loop_footer
    %s14 = sadd.s32 1, %s10
  $region7: #{clip_forward.27} parent=0 // loop_footer_branch
    %9 = sbr.rel target = $region3
  $region8: #{clip_forward.27} parent=0 // loop_exit
    _

</llo_original>
